<compile_context>
chip_gen: v5e
topology: v5e:2x2
jax: 0.10.0
libtpu: 0.0.40
codegen_flags: <defaults>
</compile_context>

<pallas_src>
import jax
import jax.numpy as jnp
from jax.experimental import pallas as pl
from jax.experimental.pallas import tpu as pltpu


def _conv1x1_kernel(x_ref, w_ref, o_ref):
    # x_ref: (NHW, Ci) bf16  -- resident across the grid
    # w_ref: (Ci, tn) bf16   -- weight tile for this grid step
    # o_ref: (NHW, tn) f32   -- lane-dense output tile
    o_ref[...] = jnp.dot(
        x_ref[...], w_ref[...], preferred_element_type=jnp.float32
    ).astype(o_ref.dtype)


def conv2d_1x1(x_nchw, weight, *, tn=256):
    """1x1 conv, stride 1, no bias.

    x_nchw: (N, Ci, H, W) float32
    weight: (Co, Ci, 1, 1) float32
    returns (N, Co, H, W) float32
    """
    N, Ci, H, W = x_nchw.shape
    Co = weight.shape[0]
    NHW = N * H * W

    # bf16 operands (f32 accumulation happens on the MXU inside the kernel).
    # The weight transpose + cast fuse into a single XLA pass over the weight.
    w2d = weight.reshape(Co, Ci).T.astype(jnp.bfloat16)  # (Ci, Co)

    # NCHW -> (NHW, Ci). For this N=1 benchmark this is a ~1 MB transpose.
    # TODO(synk): for real batches keep the model in NHWC to avoid the
    # wrapper-level activation transposes entirely.
    x2d = (
        jnp.transpose(x_nchw, (0, 2, 3, 1)).reshape(NHW, Ci).astype(jnp.bfloat16)
    )

    # Co tile must be a multiple of 128 (lane dim). 1392 has no multiple-of-128
    # divisor, so use cdiv and let Pallas mask the ragged last tile's stores.
    tn = tn if Co >= tn else Co
    grid = (pl.cdiv(Co, tn),)

    y2d = pl.pallas_call(
        _conv1x1_kernel,
        out_shape=jax.ShapeDtypeStruct((NHW, Co), jnp.float32),
        grid_spec=pltpu.PrefetchScalarGridSpec(
            num_scalar_prefetch=0,
            grid=grid,
            in_specs=[
                pl.BlockSpec((NHW, Ci), lambda j: (0, 0)),  # X: resident
                pl.BlockSpec((Ci, tn), lambda j: (0, j)),   # W: Co-tiled
            ],
            out_specs=pl.BlockSpec((NHW, tn), lambda j: (0, j)),
        ),
        compiler_params=pltpu.CompilerParams(
            dimension_semantics=("parallel",),
        ),
        cost_estimate=pl.CostEstimate(
            flops=2 * NHW * Ci * Co,
            transcendentals=0,
            bytes_accessed=NHW * Ci * 2 + Ci * Co * 2 + NHW * Co * 4,
        ),
    )(x2d, w2d)

    # (NHW, Co) -> NCHW
    return y2d.reshape(N, H, W, Co).transpose(0, 3, 1, 2)


if __name__ == "__main__":
    key = jax.random.PRNGKey(0)
    k_x, k_w = jax.random.split(key)

    N, C, Hs, Ws = 1, 1392, 14, 14
    x = jax.random.normal(k_x, (N, C, Hs, Ws), dtype=jnp.float32)

    # Deterministic weight init (kaiming-uniform-like scale for a 1x1 conv).
    fan_in = C  # Ci * kH * kW = 1392 * 1 * 1
    bound = 1.0 / jnp.sqrt(fan_in)
    w = jax.random.uniform(
        k_w, (C, C, 1, 1), dtype=jnp.float32, minval=-bound, maxval=bound
    )

    y = jax.jit(conv2d_1x1)(x, w)
    jax.block_until_ready(y)
    assert y.shape == (N, C, Hs, Ws)

    # Reference with the same math as the kernel (bf16 inputs, f32 accumulate).
    y_ref = jnp.einsum(
        "oi,nihw->nohw",
        w.reshape(C, C).astype(jnp.bfloat16),
        x.astype(jnp.bfloat16),
        preferred_element_type=jnp.float32,
    )
    assert jnp.allclose(y, y_ref, atol=1e-3, rtol=1e-3)

    # Loose sanity check against the full-f32 conv (bf16 rounding noise only).
    y_f32 = jnp.einsum(
        "oi,nihw->nohw", w.reshape(C, C), x, precision=jax.lax.Precision.HIGHEST
    )
    assert jnp.allclose(y, y_f32, atol=5e-2, rtol=5e-2)

    print("KERNEL_OK")
</pallas_src>

<mosaic_0001>
module attributes {stable_mosaic.version = 11 : i64} {
  func.func @_conv1x1_kernel(%arg0: i32, %arg1: memref<196x1392xbf16, #tpu.memory_space<vmem>>, %arg2: memref<1392x256xbf16, #tpu.memory_space<vmem>>, %arg3: memref<196x256xf32, #tpu.memory_space<vmem>>) attributes {dimension_semantics = [#tpu.dimension_semantics<parallel>], iteration_bounds = array<i64: 6>, scalar_prefetch = 0 : i64, scratch_operands = 0 : i64, tpu.core_type = #tpu.core_type<tc>, window_params = [{pipeline_mode = #tpu.pipeline_mode<synchronous>, transform_indices = @transform_0, window_bounds = array<i64: 196, 1392>}, {transform_indices = @transform_1, window_bounds = array<i64: 1392, 256>}, {transform_indices = @transform_2, window_bounds = array<i64: 196, 256>}]} {
    %c0 = arith.constant 0 : index
    %c0_0 = arith.constant 0 : index
    %0 = vector.load %arg1[%c0, %c0_0] : memref<196x1392xbf16, #tpu.memory_space<vmem>>, vector<196x1392xbf16>
    %c0_1 = arith.constant 0 : index
    %c0_2 = arith.constant 0 : index
    %1 = vector.load %arg2[%c0_1, %c0_2] : memref<1392x256xbf16, #tpu.memory_space<vmem>>, vector<1392x256xbf16>
    %cst = arith.constant dense<0.000000e+00> : vector<196x256xf32>
    %2 = tpu.matmul %0, %1, %cst {dimension_numbers = #tpu.dot_dimension_numbers<[1], [0], [0], [1], [0, 0, 1, 1], [], []>} : vector<196x1392xbf16>, vector<1392x256xbf16>, vector<196x256xf32> -> vector<196x256xf32>
    %c0_3 = arith.constant 0 : index
    %c0_4 = arith.constant 0 : index
    %3 = vector.load %arg3[%c0_3, %c0_4] : memref<196x256xf32, #tpu.memory_space<vmem>>, vector<196x256xf32>
    tpu.vector_store %arg3[%c0_3, %c0_4], %2 {strides = array<i32>} : memref<196x256xf32, #tpu.memory_space<vmem>>, vector<196x256xf32>,
    return
  }
  func.func @transform_0(%arg0: i32) -> (i32, i32) {
    %c0_i32 = arith.constant 0 : i32
    %c0_i32_0 = arith.constant 0 : i32
    %c0_i32_1 = arith.constant 0 : i32
    return %c0_i32, %c0_i32_0 : i32, i32
  }
  func.func @transform_1(%arg0: i32) -> (i32, i32) {
    %c0_i32 = arith.constant 0 : i32
    %c0_i32_0 = arith.constant 0 : i32
    return %c0_i32, %arg0 : i32, i32
  }
  func.func @transform_2(%arg0: i32) -> (i32, i32) {
    %c0_i32 = arith.constant 0 : i32
    %c0_i32_0 = arith.constant 0 : i32
    return %c0_i32, %arg0 : i32, i32
  }
}

</mosaic_0001>

<llo_original>
// kernel: conv2d_1x1.1
$region0: #{conv2d_1x1.1}
  #allocation0 [shape = 'u32[]', space=smem, size = 0x4, offset = 0x4, fixed_abs, tag = 'smem constant byte address 0x4 - core index']
  #allocation1 [shape = 'u32[72,128]{1,0:T(1,128)}', space=vmem, size = 0x9000, scoped, tag = 'internal scratch']
  %s0 = inlined_call_operand.vmem [shape: bf16[196,1392], index: 0, kind: input, shape index: {}]
  %s1 = inlined_call_operand.vmem [shape: bf16[1392,1392], index: 1, kind: input, shape index: {}]
  %s2 = inlined_call_operand.vmem [shape: f32[196,1392], index: 2, kind: output, shape index: {}]
  %s3 = sld [smem:[#allocation0]]
  $region155: #{conv2d_1x1.1} parent=0
    _
  %s5 = ssub.s32 1, %s3
  %s6 = scalar_select 0, %s5, %s3
  $region1: #{conv2d_1x1.1} parent=0
    #allocation2 [shape = 'u8[1425408]{0}', space=vmem, size = 0x15c000, scoped, tag = 'input window, operand 1']
    #allocation3 [shape = 'u8[409600]{0}', space=vmem, size = 0x64000, scoped, tag = 'output window, operand 0']
    loop: start=0, step=1, limit=8
    $region2: #{conv2d_1x1.1} parent=1 // loop_pre_header
      _
    $region3: #{conv2d_1x1.1} parent=1 // loop_header
      %s8 = sphi 0, %s12
      %p9 = scmp.ge.s32.totalorder %s8, 8
      %s16 = sphi 0, %s16
      %s18 = sphi 0, %s16
      %s19 = sphi 0, %s18
      %s33 = sphi 0, %s19
      %s39 = sphi 0, %s41
      %s42 = sphi 0, %s39
      %s43 = sphi 0, %s42
      %s59 = sphi 0, %s43
      %s65 = sphi 0, %s67
      %s68 = sphi 0, %s65
      %s69 = sphi 0, %s68
      %s85 = sphi 0, %s69
    $region4: #{conv2d_1x1.1} parent=1 // loop_header_branch
      %11 = sbr.rel (%p9) target = $region8
    $region5: #{conv2d_1x1.1} parent=1 // loop_body
      %s13 = ssub.s32 %s8, 1
      %s14 = ssub.s32 %s8, 2
      %s15 = sadd.s32 %s8, 1
      %s17 = sadd.s32 %s16, 1
      %p20 = scmp.eq.s32.totalorder %s8, 5
      %p21 = scmp.ne.s32.totalorder %s16, %s18
      %p22 = scmp.eq.s32.totalorder %s8, 0
      %p23 = por %p21, %p22
      %p24 = scmp.ne.s32.totalorder %s16, %s18
      %p25 = scmp.eq.s32.totalorder %s13, 5
      %p26 = por %p24, %p25
      %p27 = scmp.ne.s32.totalorder %s18, %s19
      %p28 = scmp.eq.s32.totalorder %s13, 0
      %p29 = por %p27, %p28
      %p30 = scmp.ne.s32.totalorder %s18, %s19
      %p31 = scmp.eq.s32.totalorder %s14, 5
      %p32 = por %p30, %p31
      %p34 = scmp.ne.s32.totalorder %s19, %s33
      %p35 = scmp.eq.s32.totalorder %s14, 0
      %p36 = por %p34, %p35
      %s37 = ssub.s32 %s8, %s15
      %p38 = scmp.eq.s32.totalorder %s37, 0
      %s40 = sadd.s32 %s39, 1
      %s41 = scalar_select %p38, %s39, %s40
      %p44 = pneg %p38
      %p45 = scmp.eq.s32.totalorder %s8, 5
      %p46 = por %p44, %p45
      %p47 = scmp.ne.s32.totalorder %s39, %s42
      %p48 = scmp.eq.s32.totalorder %s8, 0
      %p49 = por %p47, %p48
      %p50 = scmp.ne.s32.totalorder %s39, %s42
      %p51 = scmp.eq.s32.totalorder %s13, 5
      %p52 = por %p50, %p51
      %p53 = scmp.ne.s32.totalorder %s42, %s43
      %p54 = scmp.eq.s32.totalorder %s13, 0
      %p55 = por %p53, %p54
      %p56 = scmp.ne.s32.totalorder %s42, %s43
      %p57 = scmp.eq.s32.totalorder %s14, 5
      %p58 = por %p56, %p57
      %p60 = scmp.ne.s32.totalorder %s43, %s59
      %p61 = scmp.eq.s32.totalorder %s14, 0
      %p62 = por %p60, %p61
      %s63 = ssub.s32 %s8, %s15
      %p64 = scmp.eq.s32.totalorder %s63, 0
      %s66 = sadd.s32 %s65, 1
      %s67 = scalar_select %p64, %s65, %s66
      %p70 = pneg %p64
      %p71 = scmp.eq.s32.totalorder %s8, 5
      %p72 = por %p70, %p71
      %p73 = scmp.ne.s32.totalorder %s65, %s68
      %p74 = scmp.eq.s32.totalorder %s8, 0
      %p75 = por %p73, %p74
      %p76 = scmp.ne.s32.totalorder %s65, %s68
      %p77 = scmp.eq.s32.totalorder %s13, 5
      %p78 = por %p76, %p77
      %p79 = scmp.ne.s32.totalorder %s68, %s69
      %p80 = scmp.eq.s32.totalorder %s13, 0
      %p81 = por %p79, %p80
      %p82 = scmp.ne.s32.totalorder %s68, %s69
      %p83 = scmp.eq.s32.totalorder %s14, 5
      %p84 = por %p82, %p83
      %p86 = scmp.ne.s32.totalorder %s69, %s85
      %p87 = scmp.eq.s32.totalorder %s14, 0
      %p88 = por %p86, %p87
      %p89 = scmp.le.s32.totalorder 1, %s8
      %p90 = scmp.lt.s32.totalorder %s8, 7
      %p91 = pnand %p89, %p90
      %p92 = pneg %p91
      // Predicated region
      $region9: #{conv2d_1x1.1} parent=5 // pred_check
        _
      $region10: #{conv2d_1x1.1} parent=5 // pred_check_branch
        %94 = sbr.rel (%p91) target = $region12
      $region11: #{conv2d_1x1.1} parent=5 // pred_region
        %s95 = ssub.s32 %s8, 1
        // Predicated region
        $region13: #{conv2d_1x1.1} parent=11 // pred_check
          %p96 = pneg %p29
        $region14: #{conv2d_1x1.1} parent=11 // pred_check_branch
          %98 = sbr.rel (%p96) target = $region16
        $region15: #{conv2d_1x1.1} parent=11 // pred_region
          _
        $region16: #{conv2d_1x1.1} parent=11 // pred_fallthru
          _
      $region12: #{conv2d_1x1.1} parent=5 // pred_fallthru
        _
      %p99 = scmp.lt.s32.totalorder %s8, 6
      // Predicated region
      $region17: #{conv2d_1x1.1} parent=5 // pred_check
        %p100 = pneg %p99
      $region18: #{conv2d_1x1.1} parent=5 // pred_check_branch
        %102 = sbr.rel (%p100) target = $region20
      $region19: #{conv2d_1x1.1} parent=5 // pred_region
        // Predicated region
        $region21: #{conv2d_1x1.1} parent=19 // pred_check
          %p103 = pneg %p49
        $region22: #{conv2d_1x1.1} parent=19 // pred_check_branch
          %105 = sbr.rel (%p103) target = $region24
        $region23: #{conv2d_1x1.1} parent=19 // pred_region
          %s106 = sand.u32 %s39, 1
          %s107 = sand.u32 %s39, 1
          %s108 = smul.addr %s107, 1392
          %s109 = scalar_lea.vmem [#allocation2], %s108
          %s110 = smul.u32 2, %s8
          %s111 = ssub.s32 11, %s110
          %p112 = scmp.lt.s32.totalorder %s111, 2
          %s113 = scalar_select %p112, %s111, 2
          %s114 = smul.u32 696, %s113
          %p115 = scmp.ne.s32.totalorder 0, %s114
          %s116 = smul.addr %s110, 4
          %s117 = scalar_lea.vmem %s1, %s116
          %s118 = smul.u32 %s113, 4
          // Predicated region
          $region25: #{conv2d_1x1.1} parent=23 // pred_check
            %p119 = pneg %p115
          $region26: #{conv2d_1x1.1} parent=23 // pred_check_branch
            %121 = sbr.rel (%p119) target = $region28
          $region27: #{conv2d_1x1.1} parent=23 // pred_region
            %p122 = scmp.lt.u32.totalorder %s118, 8
            %p123 = pneg %p122
            // Predicated region
            $region29: #{conv2d_1x1.1} parent=27 // pred_check
              _
            $region30: #{conv2d_1x1.1} parent=27 // pred_check_branch
              %125 = sbr.rel (%p122) target = $region32
            $region31: #{conv2d_1x1.1} parent=27 // pred_region
              %s487 = sand.u32 %s118, 7
              %p488 = scmp.eq.s32.totalorder %s487, 0
              // Predicated region
              $region44: #{conv2d_1x1.1} parent=31 // pred_check
                %p489 = pneg %p488
              $region45: #{conv2d_1x1.1} parent=31 // pred_check_branch
                %491 = sbr.rel (%p489) target = $region47
              $region46: #{conv2d_1x1.1} parent=31 // pred_region
                %s492 = sshrl.u32 %s118, 3
                // While loop
                $region48: #{conv2d_1x1.1} parent=46 // loop_pre_header
                  _
                $region49: #{conv2d_1x1.1} parent=46 // loop_header
                  %s494 = sphi 0, %s496
                  %p495 = scmp.ge.s32.totalorder %s494, %s492
                  %s499 = sphi 0, %s852
                  %s500 = sphi %s117, %s855
                  %s501 = sphi %s109, %s856
                $region50: #{conv2d_1x1.1} parent=46 // loop_header_branch
                  %498 = sbr.rel (%p495) target = $region54
                $region51: #{conv2d_1x1.1} parent=46 // loop_body
                  %v502 = vld [vmem:[%s500] sm:$0xff]
                  %503 = vst [vmem:[%s501] sm:$0xff] %v502
                  %v504 = vld [vmem:[%s500 + $0x2c] sm:$0xff]
                  %505 = vst [vmem:[%s501 + $0x8] sm:$0xff] %v504
                  %v506 = vld [vmem:[%s500 + $0x58] sm:$0xff]
                  %507 = vst [vmem:[%s501 + $0x10] sm:$0xff] %v506
                  %v508 = vld [vmem:[%s500 + $0x84] sm:$0xff]
                  %509 = vst [vmem:[%s501 + $0x18] sm:$0xff] %v508
                  %v510 = vld [vmem:[%s500 + $0xb0] sm:$0xff]
                  %511 = vst [vmem:[%s501 + $0x20] sm:$0xff] %v510
                  %v512 = vld [vmem:[%s500 + $0xdc] sm:$0xff]
                  %513 = vst [vmem:[%s501 + $0x28] sm:$0xff] %v512
                  %v514 = vld [vmem:[%s500 + $0x108] sm:$0xff]
                  %515 = vst [vmem:[%s501 + $0x30] sm:$0xff] %v514
                  %v516 = vld [vmem:[%s500 + $0x134] sm:$0xff]
                  %517 = vst [vmem:[%s501 + $0x38] sm:$0xff] %v516
                  %v518 = vld [vmem:[%s500 + $0x160] sm:$0xff]
                  %519 = vst [vmem:[%s501 + $0x40] sm:$0xff] %v518
                  %v520 = vld [vmem:[%s500 + $0x18c] sm:$0xff]
                  %521 = vst [vmem:[%s501 + $0x48] sm:$0xff] %v520
                  %v522 = vld [vmem:[%s500 + $0x1b8] sm:$0xff]
                  %523 = vst [vmem:[%s501 + $0x50] sm:$0xff] %v522
                  %v524 = vld [vmem:[%s500 + $0x1e4] sm:$0xff]
                  %525 = vst [vmem:[%s501 + $0x58] sm:$0xff] %v524
                  %v526 = vld [vmem:[%s500 + $0x210] sm:$0xff]
                  %527 = vst [vmem:[%s501 + $0x60] sm:$0xff] %v526
                  %v528 = vld [vmem:[%s500 + $0x23c] sm:$0xff]
                  %529 = vst [vmem:[%s501 + $0x68] sm:$0xff] %v528
                  %v530 = vld [vmem:[%s500 + $0x268] sm:$0xff]
                  %531 = vst [vmem:[%s501 + $0x70] sm:$0xff] %v530
                  %v532 = vld [vmem:[%s500 + $0x294] sm:$0xff]
                  %533 = vst [vmem:[%s501 + $0x78] sm:$0xff] %v532
                  %v534 = vld [vmem:[%s500 + $0x2c0] sm:$0xff]
                  %535 = vst [vmem:[%s501 + $0x80] sm:$0xff] %v534
                  %v536 = vld [vmem:[%s500 + $0x2ec] sm:$0xff]
                  %537 = vst [vmem:[%s501 + $0x88] sm:$0xff] %v536
                  %v538 = vld [vmem:[%s500 + $0x318] sm:$0xff]
                  %539 = vst [vmem:[%s501 + $0x90] sm:$0xff] %v538
                  %v540 = vld [vmem:[%s500 + $0x344] sm:$0xff]
                  %541 = vst [vmem:[%s501 + $0x98] sm:$0xff] %v540
                  %v542 = vld [vmem:[%s500 + $0x370] sm:$0xff]
                  %543 = vst [vmem:[%s501 + $0xa0] sm:$0xff] %v542
                  %v544 = vld [vmem:[%s500 + $0x39c] sm:$0xff]
                  %545 = vst [vmem:[%s501 + $0xa8] sm:$0xff] %v544
                  %v546 = vld [vmem:[%s500 + $0x3c8] sm:$0xff]
                  %547 = vst [vmem:[%s501 + $0xb0] sm:$0xff] %v546
                  %v548 = vld [vmem:[%s500 + $0x3f4] sm:$0xff]
                  %549 = vst [vmem:[%s501 + $0xb8] sm:$0xff] %v548
                  %v550 = vld [vmem:[%s500 + $0x420] sm:$0xff]
                  %551 = vst [vmem:[%s501 + $0xc0] sm:$0xff] %v550
                  %v552 = vld [vmem:[%s500 + $0x44c] sm:$0xff]
                  %553 = vst [vmem:[%s501 + $0xc8] sm:$0xff] %v552
                  %v554 = vld [vmem:[%s500 + $0x478] sm:$0xff]
                  %555 = vst [vmem:[%s501 + $0xd0] sm:$0xff] %v554
                  %v556 = vld [vmem:[%s500 + $0x4a4] sm:$0xff]
                  %557 = vst [vmem:[%s501 + $0xd8] sm:$0xff] %v556
                  %v558 = vld [vmem:[%s500 + $0x4d0] sm:$0xff]
                  %559 = vst [vmem:[%s501 + $0xe0] sm:$0xff] %v558
                  %v560 = vld [vmem:[%s500 + $0x4fc] sm:$0xff]
                  %561 = vst [vmem:[%s501 + $0xe8] sm:$0xff] %v560
                  %v562 = vld [vmem:[%s500 + $0x528] sm:$0xff]
                  %563 = vst [vmem:[%s501 + $0xf0] sm:$0xff] %v562
                  %v564 = vld [vmem:[%s500 + $0x554] sm:$0xff]
                  %565 = vst [vmem:[%s501 + $0xf8] sm:$0xff] %v564
                  %v566 = vld [vmem:[%s500 + $0x580] sm:$0xff]
                  %567 = vst [vmem:[%s501 + $0x100] sm:$0xff] %v566
                  %v568 = vld [vmem:[%s500 + $0x5ac] sm:$0xff]
                  %569 = vst [vmem:[%s501 + $0x108] sm:$0xff] %v568
                  %v570 = vld [vmem:[%s500 + $0x5d8] sm:$0xff]
                  %571 = vst [vmem:[%s501 + $0x110] sm:$0xff] %v570
                  %v572 = vld [vmem:[%s500 + $0x604] sm:$0xff]
                  %573 = vst [vmem:[%s501 + $0x118] sm:$0xff] %v572
                  %v574 = vld [vmem:[%s500 + $0x630] sm:$0xff]
                  %575 = vst [vmem:[%s501 + $0x120] sm:$0xff] %v574
                  %v576 = vld [vmem:[%s500 + $0x65c] sm:$0xff]
                  %577 = vst [vmem:[%s501 + $0x128] sm:$0xff] %v576
                  %v578 = vld [vmem:[%s500 + $0x688] sm:$0xff]
                  %579 = vst [vmem:[%s501 + $0x130] sm:$0xff] %v578
                  %v580 = vld [vmem:[%s500 + $0x6b4] sm:$0xff]
                  %581 = vst [vmem:[%s501 + $0x138] sm:$0xff] %v580
                  %v582 = vld [vmem:[%s500 + $0x6e0] sm:$0xff]
                  %583 = vst [vmem:[%s501 + $0x140] sm:$0xff] %v582
                  %v584 = vld [vmem:[%s500 + $0x70c] sm:$0xff]
                  %585 = vst [vmem:[%s501 + $0x148] sm:$0xff] %v584
                  %v586 = vld [vmem:[%s500 + $0x738] sm:$0xff]
                  %587 = vst [vmem:[%s501 + $0x150] sm:$0xff] %v586
                  %v588 = vld [vmem:[%s500 + $0x764] sm:$0xff]
                  %589 = vst [vmem:[%s501 + $0x158] sm:$0xff] %v588
                  %v590 = vld [vmem:[%s500 + $0x790] sm:$0xff]
                  %591 = vst [vmem:[%s501 + $0x160] sm:$0xff] %v590
                  %v592 = vld [vmem:[%s500 + $0x7bc] sm:$0xff]
                  %593 = vst [vmem:[%s501 + $0x168] sm:$0xff] %v592
                  %v594 = vld [vmem:[%s500 + $0x7e8] sm:$0xff]
                  %595 = vst [vmem:[%s501 + $0x170] sm:$0xff] %v594
                  %v596 = vld [vmem:[%s500 + $0x814] sm:$0xff]
                  %597 = vst [vmem:[%s501 + $0x178] sm:$0xff] %v596
                  %v598 = vld [vmem:[%s500 + $0x840] sm:$0xff]
                  %599 = vst [vmem:[%s501 + $0x180] sm:$0xff] %v598
                  %v600 = vld [vmem:[%s500 + $0x86c] sm:$0xff]
                  %601 = vst [vmem:[%s501 + $0x188] sm:$0xff] %v600
                  %v602 = vld [vmem:[%s500 + $0x898] sm:$0xff]
                  %603 = vst [vmem:[%s501 + $0x190] sm:$0xff] %v602
                  %v604 = vld [vmem:[%s500 + $0x8c4] sm:$0xff]
                  %605 = vst [vmem:[%s501 + $0x198] sm:$0xff] %v604
                  %v606 = vld [vmem:[%s500 + $0x8f0] sm:$0xff]
                  %607 = vst [vmem:[%s501 + $0x1a0] sm:$0xff] %v606
                  %v608 = vld [vmem:[%s500 + $0x91c] sm:$0xff]
                  %609 = vst [vmem:[%s501 + $0x1a8] sm:$0xff] %v608
                  %v610 = vld [vmem:[%s500 + $0x948] sm:$0xff]
                  %611 = vst [vmem:[%s501 + $0x1b0] sm:$0xff] %v610
                  %v612 = vld [vmem:[%s500 + $0x974] sm:$0xff]
                  %613 = vst [vmem:[%s501 + $0x1b8] sm:$0xff] %v612
                  %v614 = vld [vmem:[%s500 + $0x9a0] sm:$0xff]
                  %615 = vst [vmem:[%s501 + $0x1c0] sm:$0xff] %v614
                  %v616 = vld [vmem:[%s500 + $0x9cc] sm:$0xff]
                  %617 = vst [vmem:[%s501 + $0x1c8] sm:$0xff] %v616
                  %v618 = vld [vmem:[%s500 + $0x9f8] sm:$0xff]
                  %619 = vst [vmem:[%s501 + $0x1d0] sm:$0xff] %v618
                  %v620 = vld [vmem:[%s500 + $0xa24] sm:$0xff]
                  %621 = vst [vmem:[%s501 + $0x1d8] sm:$0xff] %v620
                  %v622 = vld [vmem:[%s500 + $0xa50] sm:$0xff]
                  %623 = vst [vmem:[%s501 + $0x1e0] sm:$0xff] %v622
                  %v624 = vld [vmem:[%s500 + $0xa7c] sm:$0xff]
                  %625 = vst [vmem:[%s501 + $0x1e8] sm:$0xff] %v624
                  %v626 = vld [vmem:[%s500 + $0xaa8] sm:$0xff]
                  %627 = vst [vmem:[%s501 + $0x1f0] sm:$0xff] %v626
                  %v628 = vld [vmem:[%s500 + $0xad4] sm:$0xff]
                  %629 = vst [vmem:[%s501 + $0x1f8] sm:$0xff] %v628
                  %v630 = vld [vmem:[%s500 + $0xb00] sm:$0xff]
                  %631 = vst [vmem:[%s501 + $0x200] sm:$0xff] %v630
                  %v632 = vld [vmem:[%s500 + $0xb2c] sm:$0xff]
                  %633 = vst [vmem:[%s501 + $0x208] sm:$0xff] %v632
                  %v634 = vld [vmem:[%s500 + $0xb58] sm:$0xff]
                  %635 = vst [vmem:[%s501 + $0x210] sm:$0xff] %v634
                  %v636 = vld [vmem:[%s500 + $0xb84] sm:$0xff]
                  %637 = vst [vmem:[%s501 + $0x218] sm:$0xff] %v636
                  %v638 = vld [vmem:[%s500 + $0xbb0] sm:$0xff]
                  %639 = vst [vmem:[%s501 + $0x220] sm:$0xff] %v638
                  %v640 = vld [vmem:[%s500 + $0xbdc] sm:$0xff]
                  %641 = vst [vmem:[%s501 + $0x228] sm:$0xff] %v640
                  %v642 = vld [vmem:[%s500 + $0xc08] sm:$0xff]
                  %643 = vst [vmem:[%s501 + $0x230] sm:$0xff] %v642
                  %v644 = vld [vmem:[%s500 + $0xc34] sm:$0xff]
                  %645 = vst [vmem:[%s501 + $0x238] sm:$0xff] %v644
                  %v646 = vld [vmem:[%s500 + $0xc60] sm:$0xff]
                  %647 = vst [vmem:[%s501 + $0x240] sm:$0xff] %v646
                  %v648 = vld [vmem:[%s500 + $0xc8c] sm:$0xff]
                  %649 = vst [vmem:[%s501 + $0x248] sm:$0xff] %v648
                  %v650 = vld [vmem:[%s500 + $0xcb8] sm:$0xff]
                  %651 = vst [vmem:[%s501 + $0x250] sm:$0xff] %v650
                  %v652 = vld [vmem:[%s500 + $0xce4] sm:$0xff]
                  %653 = vst [vmem:[%s501 + $0x258] sm:$0xff] %v652
                  %v654 = vld [vmem:[%s500 + $0xd10] sm:$0xff]
                  %655 = vst [vmem:[%s501 + $0x260] sm:$0xff] %v654
                  %v656 = vld [vmem:[%s500 + $0xd3c] sm:$0xff]
                  %657 = vst [vmem:[%s501 + $0x268] sm:$0xff] %v656
                  %v658 = vld [vmem:[%s500 + $0xd68] sm:$0xff]
                  %659 = vst [vmem:[%s501 + $0x270] sm:$0xff] %v658
                  %v660 = vld [vmem:[%s500 + $0xd94] sm:$0xff]
                  %661 = vst [vmem:[%s501 + $0x278] sm:$0xff] %v660
                  %v662 = vld [vmem:[%s500 + $0xdc0] sm:$0xff]
                  %663 = vst [vmem:[%s501 + $0x280] sm:$0xff] %v662
                  %v664 = vld [vmem:[%s500 + $0xdec] sm:$0xff]
                  %665 = vst [vmem:[%s501 + $0x288] sm:$0xff] %v664
                  %v666 = vld [vmem:[%s500 + $0xe18] sm:$0xff]
                  %667 = vst [vmem:[%s501 + $0x290] sm:$0xff] %v666
                  %v668 = vld [vmem:[%s500 + $0xe44] sm:$0xff]
                  %669 = vst [vmem:[%s501 + $0x298] sm:$0xff] %v668
                  %v670 = vld [vmem:[%s500 + $0xe70] sm:$0xff]
                  %671 = vst [vmem:[%s501 + $0x2a0] sm:$0xff] %v670
                  %v672 = vld [vmem:[%s500 + $0xe9c] sm:$0xff]
                  %673 = vst [vmem:[%s501 + $0x2a8] sm:$0xff] %v672
                  %v674 = vld [vmem:[%s500 + $0xec8] sm:$0xff]
                  %675 = vst [vmem:[%s501 + $0x2b0] sm:$0xff] %v674
                  %v676 = vld [vmem:[%s500 + $0xef4] sm:$0xff]
                  %677 = vst [vmem:[%s501 + $0x2b8] sm:$0xff] %v676
                  %v678 = vld [vmem:[%s500 + $0xf20] sm:$0xff]
                  %679 = vst [vmem:[%s501 + $0x2c0] sm:$0xff] %v678
                  %v680 = vld [vmem:[%s500 + $0xf4c] sm:$0xff]
                  %681 = vst [vmem:[%s501 + $0x2c8] sm:$0xff] %v680
                  %v682 = vld [vmem:[%s500 + $0xf78] sm:$0xff]
                  %683 = vst [vmem:[%s501 + $0x2d0] sm:$0xff] %v682
                  %v684 = vld [vmem:[%s500 + $0xfa4] sm:$0xff]
                  %685 = vst [vmem:[%s501 + $0x2d8] sm:$0xff] %v684
                  %v686 = vld [vmem:[%s500 + $0xfd0] sm:$0xff]
                  %687 = vst [vmem:[%s501 + $0x2e0] sm:$0xff] %v686
                  %v688 = vld [vmem:[%s500 + $0xffc] sm:$0xff]
                  %689 = vst [vmem:[%s501 + $0x2e8] sm:$0xff] %v688
                  %v690 = vld [vmem:[%s500 + $0x1028] sm:$0xff]
                  %691 = vst [vmem:[%s501 + $0x2f0] sm:$0xff] %v690
                  %v692 = vld [vmem:[%s500 + $0x1054] sm:$0xff]
                  %693 = vst [vmem:[%s501 + $0x2f8] sm:$0xff] %v692
                  %v694 = vld [vmem:[%s500 + $0x1080] sm:$0xff]
                  %695 = vst [vmem:[%s501 + $0x300] sm:$0xff] %v694
                  %v696 = vld [vmem:[%s500 + $0x10ac] sm:$0xff]
                  %697 = vst [vmem:[%s501 + $0x308] sm:$0xff] %v696
                  %v698 = vld [vmem:[%s500 + $0x10d8] sm:$0xff]
                  %699 = vst [vmem:[%s501 + $0x310] sm:$0xff] %v698
                  %v700 = vld [vmem:[%s500 + $0x1104] sm:$0xff]
                  %701 = vst [vmem:[%s501 + $0x318] sm:$0xff] %v700
                  %v702 = vld [vmem:[%s500 + $0x1130] sm:$0xff]
                  %703 = vst [vmem:[%s501 + $0x320] sm:$0xff] %v702
                  %v704 = vld [vmem:[%s500 + $0x115c] sm:$0xff]
                  %705 = vst [vmem:[%s501 + $0x328] sm:$0xff] %v704
                  %v706 = vld [vmem:[%s500 + $0x1188] sm:$0xff]
                  %707 = vst [vmem:[%s501 + $0x330] sm:$0xff] %v706
                  %v708 = vld [vmem:[%s500 + $0x11b4] sm:$0xff]
                  %709 = vst [vmem:[%s501 + $0x338] sm:$0xff] %v708
                  %v710 = vld [vmem:[%s500 + $0x11e0] sm:$0xff]
                  %711 = vst [vmem:[%s501 + $0x340] sm:$0xff] %v710
                  %v712 = vld [vmem:[%s500 + $0x120c] sm:$0xff]
                  %713 = vst [vmem:[%s501 + $0x348] sm:$0xff] %v712
                  %v714 = vld [vmem:[%s500 + $0x1238] sm:$0xff]
                  %715 = vst [vmem:[%s501 + $0x350] sm:$0xff] %v714
                  %v716 = vld [vmem:[%s500 + $0x1264] sm:$0xff]
                  %717 = vst [vmem:[%s501 + $0x358] sm:$0xff] %v716
                  %v718 = vld [vmem:[%s500 + $0x1290] sm:$0xff]
                  %719 = vst [vmem:[%s501 + $0x360] sm:$0xff] %v718
                  %v720 = vld [vmem:[%s500 + $0x12bc] sm:$0xff]
                  %721 = vst [vmem:[%s501 + $0x368] sm:$0xff] %v720
                  %v722 = vld [vmem:[%s500 + $0x12e8] sm:$0xff]
                  %723 = vst [vmem:[%s501 + $0x370] sm:$0xff] %v722
                  %v724 = vld [vmem:[%s500 + $0x1314] sm:$0xff]
                  %725 = vst [vmem:[%s501 + $0x378] sm:$0xff] %v724
                  %v726 = vld [vmem:[%s500 + $0x1340] sm:$0xff]
                  %727 = vst [vmem:[%s501 + $0x380] sm:$0xff] %v726
                  %v728 = vld [vmem:[%s500 + $0x136c] sm:$0xff]
                  %729 = vst [vmem:[%s501 + $0x388] sm:$0xff] %v728
                  %v730 = vld [vmem:[%s500 + $0x1398] sm:$0xff]
                  %731 = vst [vmem:[%s501 + $0x390] sm:$0xff] %v730
                  %v732 = vld [vmem:[%s500 + $0x13c4] sm:$0xff]
                  %733 = vst [vmem:[%s501 + $0x398] sm:$0xff] %v732
                  %v734 = vld [vmem:[%s500 + $0x13f0] sm:$0xff]
                  %735 = vst [vmem:[%s501 + $0x3a0] sm:$0xff] %v734
                  %v736 = vld [vmem:[%s500 + $0x141c] sm:$0xff]
                  %737 = vst [vmem:[%s501 + $0x3a8] sm:$0xff] %v736
                  %v738 = vld [vmem:[%s500 + $0x1448] sm:$0xff]
                  %739 = vst [vmem:[%s501 + $0x3b0] sm:$0xff] %v738
                  %v740 = vld [vmem:[%s500 + $0x1474] sm:$0xff]
                  %741 = vst [vmem:[%s501 + $0x3b8] sm:$0xff] %v740
                  %v742 = vld [vmem:[%s500 + $0x14a0] sm:$0xff]
                  %743 = vst [vmem:[%s501 + $0x3c0] sm:$0xff] %v742
                  %v744 = vld [vmem:[%s500 + $0x14cc] sm:$0xff]
                  %745 = vst [vmem:[%s501 + $0x3c8] sm:$0xff] %v744
                  %v746 = vld [vmem:[%s500 + $0x14f8] sm:$0xff]
                  %747 = vst [vmem:[%s501 + $0x3d0] sm:$0xff] %v746
                  %v748 = vld [vmem:[%s500 + $0x1524] sm:$0xff]
                  %749 = vst [vmem:[%s501 + $0x3d8] sm:$0xff] %v748
                  %v750 = vld [vmem:[%s500 + $0x1550] sm:$0xff]
                  %751 = vst [vmem:[%s501 + $0x3e0] sm:$0xff] %v750
                  %v752 = vld [vmem:[%s500 + $0x157c] sm:$0xff]
                  %753 = vst [vmem:[%s501 + $0x3e8] sm:$0xff] %v752
                  %v754 = vld [vmem:[%s500 + $0x15a8] sm:$0xff]
                  %755 = vst [vmem:[%s501 + $0x3f0] sm:$0xff] %v754
                  %v756 = vld [vmem:[%s500 + $0x15d4] sm:$0xff]
                  %757 = vst [vmem:[%s501 + $0x3f8] sm:$0xff] %v756
                  %v758 = vld [vmem:[%s500 + $0x1600] sm:$0xff]
                  %759 = vst [vmem:[%s501 + $0x400] sm:$0xff] %v758
                  %v760 = vld [vmem:[%s500 + $0x162c] sm:$0xff]
                  %761 = vst [vmem:[%s501 + $0x408] sm:$0xff] %v760
                  %v762 = vld [vmem:[%s500 + $0x1658] sm:$0xff]
                  %763 = vst [vmem:[%s501 + $0x410] sm:$0xff] %v762
                  %v764 = vld [vmem:[%s500 + $0x1684] sm:$0xff]
                  %765 = vst [vmem:[%s501 + $0x418] sm:$0xff] %v764
                  %v766 = vld [vmem:[%s500 + $0x16b0] sm:$0xff]
                  %767 = vst [vmem:[%s501 + $0x420] sm:$0xff] %v766
                  %v768 = vld [vmem:[%s500 + $0x16dc] sm:$0xff]
                  %769 = vst [vmem:[%s501 + $0x428] sm:$0xff] %v768
                  %v770 = vld [vmem:[%s500 + $0x1708] sm:$0xff]
                  %771 = vst [vmem:[%s501 + $0x430] sm:$0xff] %v770
                  %v772 = vld [vmem:[%s500 + $0x1734] sm:$0xff]
                  %773 = vst [vmem:[%s501 + $0x438] sm:$0xff] %v772
                  %v774 = vld [vmem:[%s500 + $0x1760] sm:$0xff]
                  %775 = vst [vmem:[%s501 + $0x440] sm:$0xff] %v774
                  %v776 = vld [vmem:[%s500 + $0x178c] sm:$0xff]
                  %777 = vst [vmem:[%s501 + $0x448] sm:$0xff] %v776
                  %v778 = vld [vmem:[%s500 + $0x17b8] sm:$0xff]
                  %779 = vst [vmem:[%s501 + $0x450] sm:$0xff] %v778
                  %v780 = vld [vmem:[%s500 + $0x17e4] sm:$0xff]
                  %781 = vst [vmem:[%s501 + $0x458] sm:$0xff] %v780
                  %v782 = vld [vmem:[%s500 + $0x1810] sm:$0xff]
                  %783 = vst [vmem:[%s501 + $0x460] sm:$0xff] %v782
                  %v784 = vld [vmem:[%s500 + $0x183c] sm:$0xff]
                  %785 = vst [vmem:[%s501 + $0x468] sm:$0xff] %v784
                  %v786 = vld [vmem:[%s500 + $0x1868] sm:$0xff]
                  %787 = vst [vmem:[%s501 + $0x470] sm:$0xff] %v786
                  %v788 = vld [vmem:[%s500 + $0x1894] sm:$0xff]
                  %789 = vst [vmem:[%s501 + $0x478] sm:$0xff] %v788
                  %v790 = vld [vmem:[%s500 + $0x18c0] sm:$0xff]
                  %791 = vst [vmem:[%s501 + $0x480] sm:$0xff] %v790
                  %v792 = vld [vmem:[%s500 + $0x18ec] sm:$0xff]
                  %793 = vst [vmem:[%s501 + $0x488] sm:$0xff] %v792
                  %v794 = vld [vmem:[%s500 + $0x1918] sm:$0xff]
                  %795 = vst [vmem:[%s501 + $0x490] sm:$0xff] %v794
                  %v796 = vld [vmem:[%s500 + $0x1944] sm:$0xff]
                  %797 = vst [vmem:[%s501 + $0x498] sm:$0xff] %v796
                  %v798 = vld [vmem:[%s500 + $0x1970] sm:$0xff]
                  %799 = vst [vmem:[%s501 + $0x4a0] sm:$0xff] %v798
                  %v800 = vld [vmem:[%s500 + $0x199c] sm:$0xff]
                  %801 = vst [vmem:[%s501 + $0x4a8] sm:$0xff] %v800
                  %v802 = vld [vmem:[%s500 + $0x19c8] sm:$0xff]
                  %803 = vst [vmem:[%s501 + $0x4b0] sm:$0xff] %v802
                  %v804 = vld [vmem:[%s500 + $0x19f4] sm:$0xff]
                  %805 = vst [vmem:[%s501 + $0x4b8] sm:$0xff] %v804
                  %v806 = vld [vmem:[%s500 + $0x1a20] sm:$0xff]
                  %807 = vst [vmem:[%s501 + $0x4c0] sm:$0xff] %v806
                  %v808 = vld [vmem:[%s500 + $0x1a4c] sm:$0xff]
                  %809 = vst [vmem:[%s501 + $0x4c8] sm:$0xff] %v808
                  %v810 = vld [vmem:[%s500 + $0x1a78] sm:$0xff]
                  %811 = vst [vmem:[%s501 + $0x4d0] sm:$0xff] %v810
                  %v812 = vld [vmem:[%s500 + $0x1aa4] sm:$0xff]
                  %813 = vst [vmem:[%s501 + $0x4d8] sm:$0xff] %v812
                  %v814 = vld [vmem:[%s500 + $0x1ad0] sm:$0xff]
                  %815 = vst [vmem:[%s501 + $0x4e0] sm:$0xff] %v814
                  %v816 = vld [vmem:[%s500 + $0x1afc] sm:$0xff]
                  %817 = vst [vmem:[%s501 + $0x4e8] sm:$0xff] %v816
                  %v818 = vld [vmem:[%s500 + $0x1b28] sm:$0xff]
                  %819 = vst [vmem:[%s501 + $0x4f0] sm:$0xff] %v818
                  %v820 = vld [vmem:[%s500 + $0x1b54] sm:$0xff]
                  %821 = vst [vmem:[%s501 + $0x4f8] sm:$0xff] %v820
                  %v822 = vld [vmem:[%s500 + $0x1b80] sm:$0xff]
                  %823 = vst [vmem:[%s501 + $0x500] sm:$0xff] %v822
                  %v824 = vld [vmem:[%s500 + $0x1bac] sm:$0xff]
                  %825 = vst [vmem:[%s501 + $0x508] sm:$0xff] %v824
                  %v826 = vld [vmem:[%s500 + $0x1bd8] sm:$0xff]
                  %827 = vst [vmem:[%s501 + $0x510] sm:$0xff] %v826
                  %v828 = vld [vmem:[%s500 + $0x1c04] sm:$0xff]
                  %829 = vst [vmem:[%s501 + $0x518] sm:$0xff] %v828
                  %v830 = vld [vmem:[%s500 + $0x1c30] sm:$0xff]
                  %831 = vst [vmem:[%s501 + $0x520] sm:$0xff] %v830
                  %v832 = vld [vmem:[%s500 + $0x1c5c] sm:$0xff]
                  %833 = vst [vmem:[%s501 + $0x528] sm:$0xff] %v832
                  %v834 = vld [vmem:[%s500 + $0x1c88] sm:$0xff]
                  %835 = vst [vmem:[%s501 + $0x530] sm:$0xff] %v834
                  %v836 = vld [vmem:[%s500 + $0x1cb4] sm:$0xff]
                  %837 = vst [vmem:[%s501 + $0x538] sm:$0xff] %v836
                  %v838 = vld [vmem:[%s500 + $0x1ce0] sm:$0xff]
                  %839 = vst [vmem:[%s501 + $0x540] sm:$0xff] %v838
                  %v840 = vld [vmem:[%s500 + $0x1d0c] sm:$0xff]
                  %841 = vst [vmem:[%s501 + $0x548] sm:$0xff] %v840
                  %v842 = vld [vmem:[%s500 + $0x1d38] sm:$0xff]
                  %843 = vst [vmem:[%s501 + $0x550] sm:$0xff] %v842
                  %v844 = vld [vmem:[%s500 + $0x1d64] sm:$0xff]
                  %845 = vst [vmem:[%s501 + $0x558] sm:$0xff] %v844
                  %v846 = vld [vmem:[%s500 + $0x1d90] sm:$0xff]
                  %847 = vst [vmem:[%s501 + $0x560] sm:$0xff] %v846
                  %v848 = vld [vmem:[%s500 + $0x1dbc] sm:$0xff]
                  %849 = vst [vmem:[%s501 + $0x568] sm:$0xff] %v848
                  %s850 = sadd.s32 1, %s499
                  %p851 = scmp.ge.s32.totalorder %s850, %s492
                  %s852 = scalar_select %p851, 0, %s850
                  %s853 = smul.u32 %s852, 8
                  %s854 = smul.u32 %s852, 8
                  %s855 = scalar_lea.vmem %s117, %s853
                  %s856 = scalar_lea.vmem %s109, %s854 [#allocation2]
                $region52: #{conv2d_1x1.1} parent=46 // loop_footer
                  %s496 = sadd.s32 %s494, 1
                $region53: #{conv2d_1x1.1} parent=46 // loop_footer_branch
                  %493 = sbr.rel target = $region49
                $region54: #{conv2d_1x1.1} parent=46 // loop_exit
                  _
              $region47: #{conv2d_1x1.1} parent=31 // pred_fallthru
                _
              %p857 = pneg %p488
              // Predicated region
              $region55: #{conv2d_1x1.1} parent=31 // pred_check
                _
              $region56: #{conv2d_1x1.1} parent=31 // pred_check_branch
                %859 = sbr.rel (%p488) target = $region58
              $region57: #{conv2d_1x1.1} parent=31 // pred_region
                %s860 = sand.u32 %s118, 7
                %s861 = ssub.s32 %s118, %s860
                %s862 = scalar_lea.vmem %s117, %s861
                %s863 = ssub.s32 %s118, %s860
                %s864 = scalar_lea.vmem %s109, %s863 [#allocation2]
                %s865 = sshrl.u32 %s118, 3
                // While loop
                $region59: #{conv2d_1x1.1} parent=57 // loop_pre_header
                  _
                $region60: #{conv2d_1x1.1} parent=57 // loop_header
                  %s867 = sphi 0, %s869
                  %p868 = scmp.ge.s32.totalorder %s867, %s865
                  %s872 = sphi 0, %s1225
                  %s873 = sphi %s117, %s1228
                  %s874 = sphi %s109, %s1229
                $region61: #{conv2d_1x1.1} parent=57 // loop_header_branch
                  %871 = sbr.rel (%p868) target = $region65
                $region62: #{conv2d_1x1.1} parent=57 // loop_body
                  %v875 = vld [vmem:[%s873] sm:$0xff]
                  %876 = vst [vmem:[%s874] sm:$0xff] %v875
                  %v877 = vld [vmem:[%s873 + $0x2c] sm:$0xff]
                  %878 = vst [vmem:[%s874 + $0x8] sm:$0xff] %v877
                  %v879 = vld [vmem:[%s873 + $0x58] sm:$0xff]
                  %880 = vst [vmem:[%s874 + $0x10] sm:$0xff] %v879
                  %v881 = vld [vmem:[%s873 + $0x84] sm:$0xff]
                  %882 = vst [vmem:[%s874 + $0x18] sm:$0xff] %v881
                  %v883 = vld [vmem:[%s873 + $0xb0] sm:$0xff]
                  %884 = vst [vmem:[%s874 + $0x20] sm:$0xff] %v883
                  %v885 = vld [vmem:[%s873 + $0xdc] sm:$0xff]
                  %886 = vst [vmem:[%s874 + $0x28] sm:$0xff] %v885
                  %v887 = vld [vmem:[%s873 + $0x108] sm:$0xff]
                  %888 = vst [vmem:[%s874 + $0x30] sm:$0xff] %v887
                  %v889 = vld [vmem:[%s873 + $0x134] sm:$0xff]
                  %890 = vst [vmem:[%s874 + $0x38] sm:$0xff] %v889
                  %v891 = vld [vmem:[%s873 + $0x160] sm:$0xff]
                  %892 = vst [vmem:[%s874 + $0x40] sm:$0xff] %v891
                  %v893 = vld [vmem:[%s873 + $0x18c] sm:$0xff]
                  %894 = vst [vmem:[%s874 + $0x48] sm:$0xff] %v893
                  %v895 = vld [vmem:[%s873 + $0x1b8] sm:$0xff]
                  %896 = vst [vmem:[%s874 + $0x50] sm:$0xff] %v895
                  %v897 = vld [vmem:[%s873 + $0x1e4] sm:$0xff]
                  %898 = vst [vmem:[%s874 + $0x58] sm:$0xff] %v897
                  %v899 = vld [vmem:[%s873 + $0x210] sm:$0xff]
                  %900 = vst [vmem:[%s874 + $0x60] sm:$0xff] %v899
                  %v901 = vld [vmem:[%s873 + $0x23c] sm:$0xff]
                  %902 = vst [vmem:[%s874 + $0x68] sm:$0xff] %v901
                  %v903 = vld [vmem:[%s873 + $0x268] sm:$0xff]
                  %904 = vst [vmem:[%s874 + $0x70] sm:$0xff] %v903
                  %v905 = vld [vmem:[%s873 + $0x294] sm:$0xff]
                  %906 = vst [vmem:[%s874 + $0x78] sm:$0xff] %v905
                  %v907 = vld [vmem:[%s873 + $0x2c0] sm:$0xff]
                  %908 = vst [vmem:[%s874 + $0x80] sm:$0xff] %v907
                  %v909 = vld [vmem:[%s873 + $0x2ec] sm:$0xff]
                  %910 = vst [vmem:[%s874 + $0x88] sm:$0xff] %v909
                  %v911 = vld [vmem:[%s873 + $0x318] sm:$0xff]
                  %912 = vst [vmem:[%s874 + $0x90] sm:$0xff] %v911
                  %v913 = vld [vmem:[%s873 + $0x344] sm:$0xff]
                  %914 = vst [vmem:[%s874 + $0x98] sm:$0xff] %v913
                  %v915 = vld [vmem:[%s873 + $0x370] sm:$0xff]
                  %916 = vst [vmem:[%s874 + $0xa0] sm:$0xff] %v915
                  %v917 = vld [vmem:[%s873 + $0x39c] sm:$0xff]
                  %918 = vst [vmem:[%s874 + $0xa8] sm:$0xff] %v917
                  %v919 = vld [vmem:[%s873 + $0x3c8] sm:$0xff]
                  %920 = vst [vmem:[%s874 + $0xb0] sm:$0xff] %v919
                  %v921 = vld [vmem:[%s873 + $0x3f4] sm:$0xff]
                  %922 = vst [vmem:[%s874 + $0xb8] sm:$0xff] %v921
                  %v923 = vld [vmem:[%s873 + $0x420] sm:$0xff]
                  %924 = vst [vmem:[%s874 + $0xc0] sm:$0xff] %v923
                  %v925 = vld [vmem:[%s873 + $0x44c] sm:$0xff]
                  %926 = vst [vmem:[%s874 + $0xc8] sm:$0xff] %v925
                  %v927 = vld [vmem:[%s873 + $0x478] sm:$0xff]
                  %928 = vst [vmem:[%s874 + $0xd0] sm:$0xff] %v927
                  %v929 = vld [vmem:[%s873 + $0x4a4] sm:$0xff]
                  %930 = vst [vmem:[%s874 + $0xd8] sm:$0xff] %v929
                  %v931 = vld [vmem:[%s873 + $0x4d0] sm:$0xff]
                  %932 = vst [vmem:[%s874 + $0xe0] sm:$0xff] %v931
                  %v933 = vld [vmem:[%s873 + $0x4fc] sm:$0xff]
                  %934 = vst [vmem:[%s874 + $0xe8] sm:$0xff] %v933
                  %v935 = vld [vmem:[%s873 + $0x528] sm:$0xff]
                  %936 = vst [vmem:[%s874 + $0xf0] sm:$0xff] %v935
                  %v937 = vld [vmem:[%s873 + $0x554] sm:$0xff]
                  %938 = vst [vmem:[%s874 + $0xf8] sm:$0xff] %v937
                  %v939 = vld [vmem:[%s873 + $0x580] sm:$0xff]
                  %940 = vst [vmem:[%s874 + $0x100] sm:$0xff] %v939
                  %v941 = vld [vmem:[%s873 + $0x5ac] sm:$0xff]
                  %942 = vst [vmem:[%s874 + $0x108] sm:$0xff] %v941
                  %v943 = vld [vmem:[%s873 + $0x5d8] sm:$0xff]
                  %944 = vst [vmem:[%s874 + $0x110] sm:$0xff] %v943
                  %v945 = vld [vmem:[%s873 + $0x604] sm:$0xff]
                  %946 = vst [vmem:[%s874 + $0x118] sm:$0xff] %v945
                  %v947 = vld [vmem:[%s873 + $0x630] sm:$0xff]
                  %948 = vst [vmem:[%s874 + $0x120] sm:$0xff] %v947
                  %v949 = vld [vmem:[%s873 + $0x65c] sm:$0xff]
                  %950 = vst [vmem:[%s874 + $0x128] sm:$0xff] %v949
                  %v951 = vld [vmem:[%s873 + $0x688] sm:$0xff]
                  %952 = vst [vmem:[%s874 + $0x130] sm:$0xff] %v951
                  %v953 = vld [vmem:[%s873 + $0x6b4] sm:$0xff]
                  %954 = vst [vmem:[%s874 + $0x138] sm:$0xff] %v953
                  %v955 = vld [vmem:[%s873 + $0x6e0] sm:$0xff]
                  %956 = vst [vmem:[%s874 + $0x140] sm:$0xff] %v955
                  %v957 = vld [vmem:[%s873 + $0x70c] sm:$0xff]
                  %958 = vst [vmem:[%s874 + $0x148] sm:$0xff] %v957
                  %v959 = vld [vmem:[%s873 + $0x738] sm:$0xff]
                  %960 = vst [vmem:[%s874 + $0x150] sm:$0xff] %v959
                  %v961 = vld [vmem:[%s873 + $0x764] sm:$0xff]
                  %962 = vst [vmem:[%s874 + $0x158] sm:$0xff] %v961
                  %v963 = vld [vmem:[%s873 + $0x790] sm:$0xff]
                  %964 = vst [vmem:[%s874 + $0x160] sm:$0xff] %v963
                  %v965 = vld [vmem:[%s873 + $0x7bc] sm:$0xff]
                  %966 = vst [vmem:[%s874 + $0x168] sm:$0xff] %v965
                  %v967 = vld [vmem:[%s873 + $0x7e8] sm:$0xff]
                  %968 = vst [vmem:[%s874 + $0x170] sm:$0xff] %v967
                  %v969 = vld [vmem:[%s873 + $0x814] sm:$0xff]
                  %970 = vst [vmem:[%s874 + $0x178] sm:$0xff] %v969
                  %v971 = vld [vmem:[%s873 + $0x840] sm:$0xff]
                  %972 = vst [vmem:[%s874 + $0x180] sm:$0xff] %v971
                  %v973 = vld [vmem:[%s873 + $0x86c] sm:$0xff]
                  %974 = vst [vmem:[%s874 + $0x188] sm:$0xff] %v973
                  %v975 = vld [vmem:[%s873 + $0x898] sm:$0xff]
                  %976 = vst [vmem:[%s874 + $0x190] sm:$0xff] %v975
                  %v977 = vld [vmem:[%s873 + $0x8c4] sm:$0xff]
                  %978 = vst [vmem:[%s874 + $0x198] sm:$0xff] %v977
                  %v979 = vld [vmem:[%s873 + $0x8f0] sm:$0xff]
                  %980 = vst [vmem:[%s874 + $0x1a0] sm:$0xff] %v979
                  %v981 = vld [vmem:[%s873 + $0x91c] sm:$0xff]
                  %982 = vst [vmem:[%s874 + $0x1a8] sm:$0xff] %v981
                  %v983 = vld [vmem:[%s873 + $0x948] sm:$0xff]
                  %984 = vst [vmem:[%s874 + $0x1b0] sm:$0xff] %v983
                  %v985 = vld [vmem:[%s873 + $0x974] sm:$0xff]
                  %986 = vst [vmem:[%s874 + $0x1b8] sm:$0xff] %v985
                  %v987 = vld [vmem:[%s873 + $0x9a0] sm:$0xff]
                  %988 = vst [vmem:[%s874 + $0x1c0] sm:$0xff] %v987
                  %v989 = vld [vmem:[%s873 + $0x9cc] sm:$0xff]
                  %990 = vst [vmem:[%s874 + $0x1c8] sm:$0xff] %v989
                  %v991 = vld [vmem:[%s873 + $0x9f8] sm:$0xff]
                  %992 = vst [vmem:[%s874 + $0x1d0] sm:$0xff] %v991
                  %v993 = vld [vmem:[%s873 + $0xa24] sm:$0xff]
                  %994 = vst [vmem:[%s874 + $0x1d8] sm:$0xff] %v993
                  %v995 = vld [vmem:[%s873 + $0xa50] sm:$0xff]
                  %996 = vst [vmem:[%s874 + $0x1e0] sm:$0xff] %v995
                  %v997 = vld [vmem:[%s873 + $0xa7c] sm:$0xff]
                  %998 = vst [vmem:[%s874 + $0x1e8] sm:$0xff] %v997
                  %v999 = vld [vmem:[%s873 + $0xaa8] sm:$0xff]
                  %1000 = vst [vmem:[%s874 + $0x1f0] sm:$0xff] %v999
                  %v1001 = vld [vmem:[%s873 + $0xad4] sm:$0xff]
                  %1002 = vst [vmem:[%s874 + $0x1f8] sm:$0xff] %v1001
                  %v1003 = vld [vmem:[%s873 + $0xb00] sm:$0xff]
                  %1004 = vst [vmem:[%s874 + $0x200] sm:$0xff] %v1003
                  %v1005 = vld [vmem:[%s873 + $0xb2c] sm:$0xff]
                  %1006 = vst [vmem:[%s874 + $0x208] sm:$0xff] %v1005
                  %v1007 = vld [vmem:[%s873 + $0xb58] sm:$0xff]
                  %1008 = vst [vmem:[%s874 + $0x210] sm:$0xff] %v1007
                  %v1009 = vld [vmem:[%s873 + $0xb84] sm:$0xff]
                  %1010 = vst [vmem:[%s874 + $0x218] sm:$0xff] %v1009
                  %v1011 = vld [vmem:[%s873 + $0xbb0] sm:$0xff]
                  %1012 = vst [vmem:[%s874 + $0x220] sm:$0xff] %v1011
                  %v1013 = vld [vmem:[%s873 + $0xbdc] sm:$0xff]
                  %1014 = vst [vmem:[%s874 + $0x228] sm:$0xff] %v1013
                  %v1015 = vld [vmem:[%s873 + $0xc08] sm:$0xff]
                  %1016 = vst [vmem:[%s874 + $0x230] sm:$0xff] %v1015
                  %v1017 = vld [vmem:[%s873 + $0xc34] sm:$0xff]
                  %1018 = vst [vmem:[%s874 + $0x238] sm:$0xff] %v1017
                  %v1019 = vld [vmem:[%s873 + $0xc60] sm:$0xff]
                  %1020 = vst [vmem:[%s874 + $0x240] sm:$0xff] %v1019
                  %v1021 = vld [vmem:[%s873 + $0xc8c] sm:$0xff]
                  %1022 = vst [vmem:[%s874 + $0x248] sm:$0xff] %v1021
                  %v1023 = vld [vmem:[%s873 + $0xcb8] sm:$0xff]
                  %1024 = vst [vmem:[%s874 + $0x250] sm:$0xff] %v1023
                  %v1025 = vld [vmem:[%s873 + $0xce4] sm:$0xff]
                  %1026 = vst [vmem:[%s874 + $0x258] sm:$0xff] %v1025
                  %v1027 = vld [vmem:[%s873 + $0xd10] sm:$0xff]
                  %1028 = vst [vmem:[%s874 + $0x260] sm:$0xff] %v1027
                  %v1029 = vld [vmem:[%s873 + $0xd3c] sm:$0xff]
                  %1030 = vst [vmem:[%s874 + $0x268] sm:$0xff] %v1029
                  %v1031 = vld [vmem:[%s873 + $0xd68] sm:$0xff]
                  %1032 = vst [vmem:[%s874 + $0x270] sm:$0xff] %v1031
                  %v1033 = vld [vmem:[%s873 + $0xd94] sm:$0xff]
                  %1034 = vst [vmem:[%s874 + $0x278] sm:$0xff] %v1033
                  %v1035 = vld [vmem:[%s873 + $0xdc0] sm:$0xff]
                  %1036 = vst [vmem:[%s874 + $0x280] sm:$0xff] %v1035
                  %v1037 = vld [vmem:[%s873 + $0xdec] sm:$0xff]
                  %1038 = vst [vmem:[%s874 + $0x288] sm:$0xff] %v1037
                  %v1039 = vld [vmem:[%s873 + $0xe18] sm:$0xff]
                  %1040 = vst [vmem:[%s874 + $0x290] sm:$0xff] %v1039
                  %v1041 = vld [vmem:[%s873 + $0xe44] sm:$0xff]
                  %1042 = vst [vmem:[%s874 + $0x298] sm:$0xff] %v1041
                  %v1043 = vld [vmem:[%s873 + $0xe70] sm:$0xff]
                  %1044 = vst [vmem:[%s874 + $0x2a0] sm:$0xff] %v1043
                  %v1045 = vld [vmem:[%s873 + $0xe9c] sm:$0xff]
                  %1046 = vst [vmem:[%s874 + $0x2a8] sm:$0xff] %v1045
                  %v1047 = vld [vmem:[%s873 + $0xec8] sm:$0xff]
                  %1048 = vst [vmem:[%s874 + $0x2b0] sm:$0xff] %v1047
                  %v1049 = vld [vmem:[%s873 + $0xef4] sm:$0xff]
                  %1050 = vst [vmem:[%s874 + $0x2b8] sm:$0xff] %v1049
                  %v1051 = vld [vmem:[%s873 + $0xf20] sm:$0xff]
                  %1052 = vst [vmem:[%s874 + $0x2c0] sm:$0xff] %v1051
                  %v1053 = vld [vmem:[%s873 + $0xf4c] sm:$0xff]
                  %1054 = vst [vmem:[%s874 + $0x2c8] sm:$0xff] %v1053
                  %v1055 = vld [vmem:[%s873 + $0xf78] sm:$0xff]
                  %1056 = vst [vmem:[%s874 + $0x2d0] sm:$0xff] %v1055
                  %v1057 = vld [vmem:[%s873 + $0xfa4] sm:$0xff]
                  %1058 = vst [vmem:[%s874 + $0x2d8] sm:$0xff] %v1057
                  %v1059 = vld [vmem:[%s873 + $0xfd0] sm:$0xff]
                  %1060 = vst [vmem:[%s874 + $0x2e0] sm:$0xff] %v1059
                  %v1061 = vld [vmem:[%s873 + $0xffc] sm:$0xff]
                  %1062 = vst [vmem:[%s874 + $0x2e8] sm:$0xff] %v1061
                  %v1063 = vld [vmem:[%s873 + $0x1028] sm:$0xff]
                  %1064 = vst [vmem:[%s874 + $0x2f0] sm:$0xff] %v1063
                  %v1065 = vld [vmem:[%s873 + $0x1054] sm:$0xff]
                  %1066 = vst [vmem:[%s874 + $0x2f8] sm:$0xff] %v1065
                  %v1067 = vld [vmem:[%s873 + $0x1080] sm:$0xff]
                  %1068 = vst [vmem:[%s874 + $0x300] sm:$0xff] %v1067
                  %v1069 = vld [vmem:[%s873 + $0x10ac] sm:$0xff]
                  %1070 = vst [vmem:[%s874 + $0x308] sm:$0xff] %v1069
                  %v1071 = vld [vmem:[%s873 + $0x10d8] sm:$0xff]
                  %1072 = vst [vmem:[%s874 + $0x310] sm:$0xff] %v1071
                  %v1073 = vld [vmem:[%s873 + $0x1104] sm:$0xff]
                  %1074 = vst [vmem:[%s874 + $0x318] sm:$0xff] %v1073
                  %v1075 = vld [vmem:[%s873 + $0x1130] sm:$0xff]
                  %1076 = vst [vmem:[%s874 + $0x320] sm:$0xff] %v1075
                  %v1077 = vld [vmem:[%s873 + $0x115c] sm:$0xff]
                  %1078 = vst [vmem:[%s874 + $0x328] sm:$0xff] %v1077
                  %v1079 = vld [vmem:[%s873 + $0x1188] sm:$0xff]
                  %1080 = vst [vmem:[%s874 + $0x330] sm:$0xff] %v1079
                  %v1081 = vld [vmem:[%s873 + $0x11b4] sm:$0xff]
                  %1082 = vst [vmem:[%s874 + $0x338] sm:$0xff] %v1081
                  %v1083 = vld [vmem:[%s873 + $0x11e0] sm:$0xff]
                  %1084 = vst [vmem:[%s874 + $0x340] sm:$0xff] %v1083
                  %v1085 = vld [vmem:[%s873 + $0x120c] sm:$0xff]
                  %1086 = vst [vmem:[%s874 + $0x348] sm:$0xff] %v1085
                  %v1087 = vld [vmem:[%s873 + $0x1238] sm:$0xff]
                  %1088 = vst [vmem:[%s874 + $0x350] sm:$0xff] %v1087
                  %v1089 = vld [vmem:[%s873 + $0x1264] sm:$0xff]
                  %1090 = vst [vmem:[%s874 + $0x358] sm:$0xff] %v1089
                  %v1091 = vld [vmem:[%s873 + $0x1290] sm:$0xff]
                  %1092 = vst [vmem:[%s874 + $0x360] sm:$0xff] %v1091
                  %v1093 = vld [vmem:[%s873 + $0x12bc] sm:$0xff]
                  %1094 = vst [vmem:[%s874 + $0x368] sm:$0xff] %v1093
                  %v1095 = vld [vmem:[%s873 + $0x12e8] sm:$0xff]
                  %1096 = vst [vmem:[%s874 + $0x370] sm:$0xff] %v1095
                  %v1097 = vld [vmem:[%s873 + $0x1314] sm:$0xff]
                  %1098 = vst [vmem:[%s874 + $0x378] sm:$0xff] %v1097
                  %v1099 = vld [vmem:[%s873 + $0x1340] sm:$0xff]
                  %1100 = vst [vmem:[%s874 + $0x380] sm:$0xff] %v1099
                  %v1101 = vld [vmem:[%s873 + $0x136c] sm:$0xff]
                  %1102 = vst [vmem:[%s874 + $0x388] sm:$0xff] %v1101
                  %v1103 = vld [vmem:[%s873 + $0x1398] sm:$0xff]
                  %1104 = vst [vmem:[%s874 + $0x390] sm:$0xff] %v1103
                  %v1105 = vld [vmem:[%s873 + $0x13c4] sm:$0xff]
                  %1106 = vst [vmem:[%s874 + $0x398] sm:$0xff] %v1105
                  %v1107 = vld [vmem:[%s873 + $0x13f0] sm:$0xff]
                  %1108 = vst [vmem:[%s874 + $0x3a0] sm:$0xff] %v1107
                  %v1109 = vld [vmem:[%s873 + $0x141c] sm:$0xff]
                  %1110 = vst [vmem:[%s874 + $0x3a8] sm:$0xff] %v1109
                  %v1111 = vld [vmem:[%s873 + $0x1448] sm:$0xff]
                  %1112 = vst [vmem:[%s874 + $0x3b0] sm:$0xff] %v1111
                  %v1113 = vld [vmem:[%s873 + $0x1474] sm:$0xff]
                  %1114 = vst [vmem:[%s874 + $0x3b8] sm:$0xff] %v1113
                  %v1115 = vld [vmem:[%s873 + $0x14a0] sm:$0xff]
                  %1116 = vst [vmem:[%s874 + $0x3c0] sm:$0xff] %v1115
                  %v1117 = vld [vmem:[%s873 + $0x14cc] sm:$0xff]
                  %1118 = vst [vmem:[%s874 + $0x3c8] sm:$0xff] %v1117
                  %v1119 = vld [vmem:[%s873 + $0x14f8] sm:$0xff]
                  %1120 = vst [vmem:[%s874 + $0x3d0] sm:$0xff] %v1119
                  %v1121 = vld [vmem:[%s873 + $0x1524] sm:$0xff]
                  %1122 = vst [vmem:[%s874 + $0x3d8] sm:$0xff] %v1121
                  %v1123 = vld [vmem:[%s873 + $0x1550] sm:$0xff]
                  %1124 = vst [vmem:[%s874 + $0x3e0] sm:$0xff] %v1123
                  %v1125 = vld [vmem:[%s873 + $0x157c] sm:$0xff]
                  %1126 = vst [vmem:[%s874 + $0x3e8] sm:$0xff] %v1125
                  %v1127 = vld [vmem:[%s873 + $0x15a8] sm:$0xff]
                  %1128 = vst [vmem:[%s874 + $0x3f0] sm:$0xff] %v1127
                  %v1129 = vld [vmem:[%s873 + $0x15d4] sm:$0xff]
                  %1130 = vst [vmem:[%s874 + $0x3f8] sm:$0xff] %v1129
                  %v1131 = vld [vmem:[%s873 + $0x1600] sm:$0xff]
                  %1132 = vst [vmem:[%s874 + $0x400] sm:$0xff] %v1131
                  %v1133 = vld [vmem:[%s873 + $0x162c] sm:$0xff]
                  %1134 = vst [vmem:[%s874 + $0x408] sm:$0xff] %v1133
                  %v1135 = vld [vmem:[%s873 + $0x1658] sm:$0xff]
                  %1136 = vst [vmem:[%s874 + $0x410] sm:$0xff] %v1135
                  %v1137 = vld [vmem:[%s873 + $0x1684] sm:$0xff]
                  %1138 = vst [vmem:[%s874 + $0x418] sm:$0xff] %v1137
                  %v1139 = vld [vmem:[%s873 + $0x16b0] sm:$0xff]
                  %1140 = vst [vmem:[%s874 + $0x420] sm:$0xff] %v1139
                  %v1141 = vld [vmem:[%s873 + $0x16dc] sm:$0xff]
                  %1142 = vst [vmem:[%s874 + $0x428] sm:$0xff] %v1141
                  %v1143 = vld [vmem:[%s873 + $0x1708] sm:$0xff]
                  %1144 = vst [vmem:[%s874 + $0x430] sm:$0xff] %v1143
                  %v1145 = vld [vmem:[%s873 + $0x1734] sm:$0xff]
                  %1146 = vst [vmem:[%s874 + $0x438] sm:$0xff] %v1145
                  %v1147 = vld [vmem:[%s873 + $0x1760] sm:$0xff]
                  %1148 = vst [vmem:[%s874 + $0x440] sm:$0xff] %v1147
                  %v1149 = vld [vmem:[%s873 + $0x178c] sm:$0xff]
                  %1150 = vst [vmem:[%s874 + $0x448] sm:$0xff] %v1149
                  %v1151 = vld [vmem:[%s873 + $0x17b8] sm:$0xff]
                  %1152 = vst [vmem:[%s874 + $0x450] sm:$0xff] %v1151
                  %v1153 = vld [vmem:[%s873 + $0x17e4] sm:$0xff]
                  %1154 = vst [vmem:[%s874 + $0x458] sm:$0xff] %v1153
                  %v1155 = vld [vmem:[%s873 + $0x1810] sm:$0xff]
                  %1156 = vst [vmem:[%s874 + $0x460] sm:$0xff] %v1155
                  %v1157 = vld [vmem:[%s873 + $0x183c] sm:$0xff]
                  %1158 = vst [vmem:[%s874 + $0x468] sm:$0xff] %v1157
                  %v1159 = vld [vmem:[%s873 + $0x1868] sm:$0xff]
                  %1160 = vst [vmem:[%s874 + $0x470] sm:$0xff] %v1159
                  %v1161 = vld [vmem:[%s873 + $0x1894] sm:$0xff]
                  %1162 = vst [vmem:[%s874 + $0x478] sm:$0xff] %v1161
                  %v1163 = vld [vmem:[%s873 + $0x18c0] sm:$0xff]
                  %1164 = vst [vmem:[%s874 + $0x480] sm:$0xff] %v1163
                  %v1165 = vld [vmem:[%s873 + $0x18ec] sm:$0xff]
                  %1166 = vst [vmem:[%s874 + $0x488] sm:$0xff] %v1165
                  %v1167 = vld [vmem:[%s873 + $0x1918] sm:$0xff]
                  %1168 = vst [vmem:[%s874 + $0x490] sm:$0xff] %v1167
                  %v1169 = vld [vmem:[%s873 + $0x1944] sm:$0xff]
                  %1170 = vst [vmem:[%s874 + $0x498] sm:$0xff] %v1169
                  %v1171 = vld [vmem:[%s873 + $0x1970] sm:$0xff]
                  %1172 = vst [vmem:[%s874 + $0x4a0] sm:$0xff] %v1171
                  %v1173 = vld [vmem:[%s873 + $0x199c] sm:$0xff]
                  %1174 = vst [vmem:[%s874 + $0x4a8] sm:$0xff] %v1173
                  %v1175 = vld [vmem:[%s873 + $0x19c8] sm:$0xff]
                  %1176 = vst [vmem:[%s874 + $0x4b0] sm:$0xff] %v1175
                  %v1177 = vld [vmem:[%s873 + $0x19f4] sm:$0xff]
                  %1178 = vst [vmem:[%s874 + $0x4b8] sm:$0xff] %v1177
                  %v1179 = vld [vmem:[%s873 + $0x1a20] sm:$0xff]
                  %1180 = vst [vmem:[%s874 + $0x4c0] sm:$0xff] %v1179
                  %v1181 = vld [vmem:[%s873 + $0x1a4c] sm:$0xff]
                  %1182 = vst [vmem:[%s874 + $0x4c8] sm:$0xff] %v1181
                  %v1183 = vld [vmem:[%s873 + $0x1a78] sm:$0xff]
                  %1184 = vst [vmem:[%s874 + $0x4d0] sm:$0xff] %v1183
                  %v1185 = vld [vmem:[%s873 + $0x1aa4] sm:$0xff]
                  %1186 = vst [vmem:[%s874 + $0x4d8] sm:$0xff] %v1185
                  %v1187 = vld [vmem:[%s873 + $0x1ad0] sm:$0xff]
                  %1188 = vst [vmem:[%s874 + $0x4e0] sm:$0xff] %v1187
                  %v1189 = vld [vmem:[%s873 + $0x1afc] sm:$0xff]
                  %1190 = vst [vmem:[%s874 + $0x4e8] sm:$0xff] %v1189
                  %v1191 = vld [vmem:[%s873 + $0x1b28] sm:$0xff]
                  %1192 = vst [vmem:[%s874 + $0x4f0] sm:$0xff] %v1191
                  %v1193 = vld [vmem:[%s873 + $0x1b54] sm:$0xff]
                  %1194 = vst [vmem:[%s874 + $0x4f8] sm:$0xff] %v1193
                  %v1195 = vld [vmem:[%s873 + $0x1b80] sm:$0xff]
                  %1196 = vst [vmem:[%s874 + $0x500] sm:$0xff] %v1195
                  %v1197 = vld [vmem:[%s873 + $0x1bac] sm:$0xff]
                  %1198 = vst [vmem:[%s874 + $0x508] sm:$0xff] %v1197
                  %v1199 = vld [vmem:[%s873 + $0x1bd8] sm:$0xff]
                  %1200 = vst [vmem:[%s874 + $0x510] sm:$0xff] %v1199
                  %v1201 = vld [vmem:[%s873 + $0x1c04] sm:$0xff]
                  %1202 = vst [vmem:[%s874 + $0x518] sm:$0xff] %v1201
                  %v1203 = vld [vmem:[%s873 + $0x1c30] sm:$0xff]
                  %1204 = vst [vmem:[%s874 + $0x520] sm:$0xff] %v1203
                  %v1205 = vld [vmem:[%s873 + $0x1c5c] sm:$0xff]
                  %1206 = vst [vmem:[%s874 + $0x528] sm:$0xff] %v1205
                  %v1207 = vld [vmem:[%s873 + $0x1c88] sm:$0xff]
                  %1208 = vst [vmem:[%s874 + $0x530] sm:$0xff] %v1207
                  %v1209 = vld [vmem:[%s873 + $0x1cb4] sm:$0xff]
                  %1210 = vst [vmem:[%s874 + $0x538] sm:$0xff] %v1209
                  %v1211 = vld [vmem:[%s873 + $0x1ce0] sm:$0xff]
                  %1212 = vst [vmem:[%s874 + $0x540] sm:$0xff] %v1211
                  %v1213 = vld [vmem:[%s873 + $0x1d0c] sm:$0xff]
                  %1214 = vst [vmem:[%s874 + $0x548] sm:$0xff] %v1213
                  %v1215 = vld [vmem:[%s873 + $0x1d38] sm:$0xff]
                  %1216 = vst [vmem:[%s874 + $0x550] sm:$0xff] %v1215
                  %v1217 = vld [vmem:[%s873 + $0x1d64] sm:$0xff]
                  %1218 = vst [vmem:[%s874 + $0x558] sm:$0xff] %v1217
                  %v1219 = vld [vmem:[%s873 + $0x1d90] sm:$0xff]
                  %1220 = vst [vmem:[%s874 + $0x560] sm:$0xff] %v1219
                  %v1221 = vld [vmem:[%s873 + $0x1dbc] sm:$0xff]
                  %1222 = vst [vmem:[%s874 + $0x568] sm:$0xff] %v1221
                  %s1223 = sadd.s32 1, %s872
                  %p1224 = scmp.ge.s32.totalorder %s1223, %s865
                  %s1225 = scalar_select %p1224, 0, %s1223
                  %s1226 = smul.u32 %s1225, 8
                  %s1227 = smul.u32 %s1225, 8
                  %s1228 = scalar_lea.vmem %s117, %s1226
                  %s1229 = scalar_lea.vmem %s109, %s1227 [#allocation2]
                $region63: #{conv2d_1x1.1} parent=57 // loop_footer
                  %s869 = sadd.s32 %s867, 1
                $region64: #{conv2d_1x1.1} parent=57 // loop_footer_branch
                  %866 = sbr.rel target = $region60
                $region65: #{conv2d_1x1.1} parent=57 // loop_exit
                  _
                %s1230 = sshll.u32 1, %s860
                %s1231 = ssub.s32 %s1230, 1
                loop: start=0, step=1, limit=1
                $region66: #{conv2d_1x1.1} parent=57 // loop_pre_header
                  _
                $region67: #{conv2d_1x1.1} parent=57 // loop_header
                  %s1233 = sphi 0, %s1237
                  %p1234 = scmp.ge.s32.totalorder %s1233, 1
                  %s1238 = sphi %s862, %s862
                  %s1239 = sphi %s864, %s864
                $region68: #{conv2d_1x1.1} parent=57 // loop_header_branch
                  %1236 = sbr.rel (%p1234) target = $region72
                $region69: #{conv2d_1x1.1} parent=57 // loop_body
                  %v1240 = vld [vmem:[%s1238] sm:%s1231]
                  %1241 = vst [vmem:[%s1239] sm:%s1231] %v1240
                  %v1242 = vld [vmem:[%s1238 + $0x2c] sm:%s1231]
                  %1243 = vst [vmem:[%s1239 + $0x8] sm:%s1231] %v1242
                  %v1244 = vld [vmem:[%s1238 + $0x58] sm:%s1231]
                  %1245 = vst [vmem:[%s1239 + $0x10] sm:%s1231] %v1244
                  %v1246 = vld [vmem:[%s1238 + $0x84] sm:%s1231]
                  %1247 = vst [vmem:[%s1239 + $0x18] sm:%s1231] %v1246
                  %v1248 = vld [vmem:[%s1238 + $0xb0] sm:%s1231]
                  %1249 = vst [vmem:[%s1239 + $0x20] sm:%s1231] %v1248
                  %v1250 = vld [vmem:[%s1238 + $0xdc] sm:%s1231]
                  %1251 = vst [vmem:[%s1239 + $0x28] sm:%s1231] %v1250
                  %v1252 = vld [vmem:[%s1238 + $0x108] sm:%s1231]
                  %1253 = vst [vmem:[%s1239 + $0x30] sm:%s1231] %v1252
                  %v1254 = vld [vmem:[%s1238 + $0x134] sm:%s1231]
                  %1255 = vst [vmem:[%s1239 + $0x38] sm:%s1231] %v1254
                  %v1256 = vld [vmem:[%s1238 + $0x160] sm:%s1231]
                  %1257 = vst [vmem:[%s1239 + $0x40] sm:%s1231] %v1256
                  %v1258 = vld [vmem:[%s1238 + $0x18c] sm:%s1231]
                  %1259 = vst [vmem:[%s1239 + $0x48] sm:%s1231] %v1258
                  %v1260 = vld [vmem:[%s1238 + $0x1b8] sm:%s1231]
                  %1261 = vst [vmem:[%s1239 + $0x50] sm:%s1231] %v1260
                  %v1262 = vld [vmem:[%s1238 + $0x1e4] sm:%s1231]
                  %1263 = vst [vmem:[%s1239 + $0x58] sm:%s1231] %v1262
                  %v1264 = vld [vmem:[%s1238 + $0x210] sm:%s1231]
                  %1265 = vst [vmem:[%s1239 + $0x60] sm:%s1231] %v1264
                  %v1266 = vld [vmem:[%s1238 + $0x23c] sm:%s1231]
                  %1267 = vst [vmem:[%s1239 + $0x68] sm:%s1231] %v1266
                  %v1268 = vld [vmem:[%s1238 + $0x268] sm:%s1231]
                  %1269 = vst [vmem:[%s1239 + $0x70] sm:%s1231] %v1268
                  %v1270 = vld [vmem:[%s1238 + $0x294] sm:%s1231]
                  %1271 = vst [vmem:[%s1239 + $0x78] sm:%s1231] %v1270
                  %v1272 = vld [vmem:[%s1238 + $0x2c0] sm:%s1231]
                  %1273 = vst [vmem:[%s1239 + $0x80] sm:%s1231] %v1272
                  %v1274 = vld [vmem:[%s1238 + $0x2ec] sm:%s1231]
                  %1275 = vst [vmem:[%s1239 + $0x88] sm:%s1231] %v1274
                  %v1276 = vld [vmem:[%s1238 + $0x318] sm:%s1231]
                  %1277 = vst [vmem:[%s1239 + $0x90] sm:%s1231] %v1276
                  %v1278 = vld [vmem:[%s1238 + $0x344] sm:%s1231]
                  %1279 = vst [vmem:[%s1239 + $0x98] sm:%s1231] %v1278
                  %v1280 = vld [vmem:[%s1238 + $0x370] sm:%s1231]
                  %1281 = vst [vmem:[%s1239 + $0xa0] sm:%s1231] %v1280
                  %v1282 = vld [vmem:[%s1238 + $0x39c] sm:%s1231]
                  %1283 = vst [vmem:[%s1239 + $0xa8] sm:%s1231] %v1282
                  %v1284 = vld [vmem:[%s1238 + $0x3c8] sm:%s1231]
                  %1285 = vst [vmem:[%s1239 + $0xb0] sm:%s1231] %v1284
                  %v1286 = vld [vmem:[%s1238 + $0x3f4] sm:%s1231]
                  %1287 = vst [vmem:[%s1239 + $0xb8] sm:%s1231] %v1286
                  %v1288 = vld [vmem:[%s1238 + $0x420] sm:%s1231]
                  %1289 = vst [vmem:[%s1239 + $0xc0] sm:%s1231] %v1288
                  %v1290 = vld [vmem:[%s1238 + $0x44c] sm:%s1231]
                  %1291 = vst [vmem:[%s1239 + $0xc8] sm:%s1231] %v1290
                  %v1292 = vld [vmem:[%s1238 + $0x478] sm:%s1231]
                  %1293 = vst [vmem:[%s1239 + $0xd0] sm:%s1231] %v1292
                  %v1294 = vld [vmem:[%s1238 + $0x4a4] sm:%s1231]
                  %1295 = vst [vmem:[%s1239 + $0xd8] sm:%s1231] %v1294
                  %v1296 = vld [vmem:[%s1238 + $0x4d0] sm:%s1231]
                  %1297 = vst [vmem:[%s1239 + $0xe0] sm:%s1231] %v1296
                  %v1298 = vld [vmem:[%s1238 + $0x4fc] sm:%s1231]
                  %1299 = vst [vmem:[%s1239 + $0xe8] sm:%s1231] %v1298
                  %v1300 = vld [vmem:[%s1238 + $0x528] sm:%s1231]
                  %1301 = vst [vmem:[%s1239 + $0xf0] sm:%s1231] %v1300
                  %v1302 = vld [vmem:[%s1238 + $0x554] sm:%s1231]
                  %1303 = vst [vmem:[%s1239 + $0xf8] sm:%s1231] %v1302
                  %v1304 = vld [vmem:[%s1238 + $0x580] sm:%s1231]
                  %1305 = vst [vmem:[%s1239 + $0x100] sm:%s1231] %v1304
                  %v1306 = vld [vmem:[%s1238 + $0x5ac] sm:%s1231]
                  %1307 = vst [vmem:[%s1239 + $0x108] sm:%s1231] %v1306
                  %v1308 = vld [vmem:[%s1238 + $0x5d8] sm:%s1231]
                  %1309 = vst [vmem:[%s1239 + $0x110] sm:%s1231] %v1308
                  %v1310 = vld [vmem:[%s1238 + $0x604] sm:%s1231]
                  %1311 = vst [vmem:[%s1239 + $0x118] sm:%s1231] %v1310
                  %v1312 = vld [vmem:[%s1238 + $0x630] sm:%s1231]
                  %1313 = vst [vmem:[%s1239 + $0x120] sm:%s1231] %v1312
                  %v1314 = vld [vmem:[%s1238 + $0x65c] sm:%s1231]
                  %1315 = vst [vmem:[%s1239 + $0x128] sm:%s1231] %v1314
                  %v1316 = vld [vmem:[%s1238 + $0x688] sm:%s1231]
                  %1317 = vst [vmem:[%s1239 + $0x130] sm:%s1231] %v1316
                  %v1318 = vld [vmem:[%s1238 + $0x6b4] sm:%s1231]
                  %1319 = vst [vmem:[%s1239 + $0x138] sm:%s1231] %v1318
                  %v1320 = vld [vmem:[%s1238 + $0x6e0] sm:%s1231]
                  %1321 = vst [vmem:[%s1239 + $0x140] sm:%s1231] %v1320
                  %v1322 = vld [vmem:[%s1238 + $0x70c] sm:%s1231]
                  %1323 = vst [vmem:[%s1239 + $0x148] sm:%s1231] %v1322
                  %v1324 = vld [vmem:[%s1238 + $0x738] sm:%s1231]
                  %1325 = vst [vmem:[%s1239 + $0x150] sm:%s1231] %v1324
                  %v1326 = vld [vmem:[%s1238 + $0x764] sm:%s1231]
                  %1327 = vst [vmem:[%s1239 + $0x158] sm:%s1231] %v1326
                  %v1328 = vld [vmem:[%s1238 + $0x790] sm:%s1231]
                  %1329 = vst [vmem:[%s1239 + $0x160] sm:%s1231] %v1328
                  %v1330 = vld [vmem:[%s1238 + $0x7bc] sm:%s1231]
                  %1331 = vst [vmem:[%s1239 + $0x168] sm:%s1231] %v1330
                  %v1332 = vld [vmem:[%s1238 + $0x7e8] sm:%s1231]
                  %1333 = vst [vmem:[%s1239 + $0x170] sm:%s1231] %v1332
                  %v1334 = vld [vmem:[%s1238 + $0x814] sm:%s1231]
                  %1335 = vst [vmem:[%s1239 + $0x178] sm:%s1231] %v1334
                  %v1336 = vld [vmem:[%s1238 + $0x840] sm:%s1231]
                  %1337 = vst [vmem:[%s1239 + $0x180] sm:%s1231] %v1336
                  %v1338 = vld [vmem:[%s1238 + $0x86c] sm:%s1231]
                  %1339 = vst [vmem:[%s1239 + $0x188] sm:%s1231] %v1338
                  %v1340 = vld [vmem:[%s1238 + $0x898] sm:%s1231]
                  %1341 = vst [vmem:[%s1239 + $0x190] sm:%s1231] %v1340
                  %v1342 = vld [vmem:[%s1238 + $0x8c4] sm:%s1231]
                  %1343 = vst [vmem:[%s1239 + $0x198] sm:%s1231] %v1342
                  %v1344 = vld [vmem:[%s1238 + $0x8f0] sm:%s1231]
                  %1345 = vst [vmem:[%s1239 + $0x1a0] sm:%s1231] %v1344
                  %v1346 = vld [vmem:[%s1238 + $0x91c] sm:%s1231]
                  %1347 = vst [vmem:[%s1239 + $0x1a8] sm:%s1231] %v1346
                  %v1348 = vld [vmem:[%s1238 + $0x948] sm:%s1231]
                  %1349 = vst [vmem:[%s1239 + $0x1b0] sm:%s1231] %v1348
                  %v1350 = vld [vmem:[%s1238 + $0x974] sm:%s1231]
                  %1351 = vst [vmem:[%s1239 + $0x1b8] sm:%s1231] %v1350
                  %v1352 = vld [vmem:[%s1238 + $0x9a0] sm:%s1231]
                  %1353 = vst [vmem:[%s1239 + $0x1c0] sm:%s1231] %v1352
                  %v1354 = vld [vmem:[%s1238 + $0x9cc] sm:%s1231]
                  %1355 = vst [vmem:[%s1239 + $0x1c8] sm:%s1231] %v1354
                  %v1356 = vld [vmem:[%s1238 + $0x9f8] sm:%s1231]
                  %1357 = vst [vmem:[%s1239 + $0x1d0] sm:%s1231] %v1356
                  %v1358 = vld [vmem:[%s1238 + $0xa24] sm:%s1231]
                  %1359 = vst [vmem:[%s1239 + $0x1d8] sm:%s1231] %v1358
                  %v1360 = vld [vmem:[%s1238 + $0xa50] sm:%s1231]
                  %1361 = vst [vmem:[%s1239 + $0x1e0] sm:%s1231] %v1360
                  %v1362 = vld [vmem:[%s1238 + $0xa7c] sm:%s1231]
                  %1363 = vst [vmem:[%s1239 + $0x1e8] sm:%s1231] %v1362
                  %v1364 = vld [vmem:[%s1238 + $0xaa8] sm:%s1231]
                  %1365 = vst [vmem:[%s1239 + $0x1f0] sm:%s1231] %v1364
                  %v1366 = vld [vmem:[%s1238 + $0xad4] sm:%s1231]
                  %1367 = vst [vmem:[%s1239 + $0x1f8] sm:%s1231] %v1366
                  %v1368 = vld [vmem:[%s1238 + $0xb00] sm:%s1231]
                  %1369 = vst [vmem:[%s1239 + $0x200] sm:%s1231] %v1368
                  %v1370 = vld [vmem:[%s1238 + $0xb2c] sm:%s1231]
                  %1371 = vst [vmem:[%s1239 + $0x208] sm:%s1231] %v1370
                  %v1372 = vld [vmem:[%s1238 + $0xb58] sm:%s1231]
                  %1373 = vst [vmem:[%s1239 + $0x210] sm:%s1231] %v1372
                  %v1374 = vld [vmem:[%s1238 + $0xb84] sm:%s1231]
                  %1375 = vst [vmem:[%s1239 + $0x218] sm:%s1231] %v1374
                  %v1376 = vld [vmem:[%s1238 + $0xbb0] sm:%s1231]
                  %1377 = vst [vmem:[%s1239 + $0x220] sm:%s1231] %v1376
                  %v1378 = vld [vmem:[%s1238 + $0xbdc] sm:%s1231]
                  %1379 = vst [vmem:[%s1239 + $0x228] sm:%s1231] %v1378
                  %v1380 = vld [vmem:[%s1238 + $0xc08] sm:%s1231]
                  %1381 = vst [vmem:[%s1239 + $0x230] sm:%s1231] %v1380
                  %v1382 = vld [vmem:[%s1238 + $0xc34] sm:%s1231]
                  %1383 = vst [vmem:[%s1239 + $0x238] sm:%s1231] %v1382
                  %v1384 = vld [vmem:[%s1238 + $0xc60] sm:%s1231]
                  %1385 = vst [vmem:[%s1239 + $0x240] sm:%s1231] %v1384
                  %v1386 = vld [vmem:[%s1238 + $0xc8c] sm:%s1231]
                  %1387 = vst [vmem:[%s1239 + $0x248] sm:%s1231] %v1386
                  %v1388 = vld [vmem:[%s1238 + $0xcb8] sm:%s1231]
                  %1389 = vst [vmem:[%s1239 + $0x250] sm:%s1231] %v1388
                  %v1390 = vld [vmem:[%s1238 + $0xce4] sm:%s1231]
                  %1391 = vst [vmem:[%s1239 + $0x258] sm:%s1231] %v1390
                  %v1392 = vld [vmem:[%s1238 + $0xd10] sm:%s1231]
                  %1393 = vst [vmem:[%s1239 + $0x260] sm:%s1231] %v1392
                  %v1394 = vld [vmem:[%s1238 + $0xd3c] sm:%s1231]
                  %1395 = vst [vmem:[%s1239 + $0x268] sm:%s1231] %v1394
                  %v1396 = vld [vmem:[%s1238 + $0xd68] sm:%s1231]
                  %1397 = vst [vmem:[%s1239 + $0x270] sm:%s1231] %v1396
                  %v1398 = vld [vmem:[%s1238 + $0xd94] sm:%s1231]
                  %1399 = vst [vmem:[%s1239 + $0x278] sm:%s1231] %v1398
                  %v1400 = vld [vmem:[%s1238 + $0xdc0] sm:%s1231]
                  %1401 = vst [vmem:[%s1239 + $0x280] sm:%s1231] %v1400
                  %v1402 = vld [vmem:[%s1238 + $0xdec] sm:%s1231]
                  %1403 = vst [vmem:[%s1239 + $0x288] sm:%s1231] %v1402
                  %v1404 = vld [vmem:[%s1238 + $0xe18] sm:%s1231]
                  %1405 = vst [vmem:[%s1239 + $0x290] sm:%s1231] %v1404
                  %v1406 = vld [vmem:[%s1238 + $0xe44] sm:%s1231]
                  %1407 = vst [vmem:[%s1239 + $0x298] sm:%s1231] %v1406
                  %v1408 = vld [vmem:[%s1238 + $0xe70] sm:%s1231]
                  %1409 = vst [vmem:[%s1239 + $0x2a0] sm:%s1231] %v1408
                  %v1410 = vld [vmem:[%s1238 + $0xe9c] sm:%s1231]
                  %1411 = vst [vmem:[%s1239 + $0x2a8] sm:%s1231] %v1410
                  %v1412 = vld [vmem:[%s1238 + $0xec8] sm:%s1231]
                  %1413 = vst [vmem:[%s1239 + $0x2b0] sm:%s1231] %v1412
                  %v1414 = vld [vmem:[%s1238 + $0xef4] sm:%s1231]
                  %1415 = vst [vmem:[%s1239 + $0x2b8] sm:%s1231] %v1414
                  %v1416 = vld [vmem:[%s1238 + $0xf20] sm:%s1231]
                  %1417 = vst [vmem:[%s1239 + $0x2c0] sm:%s1231] %v1416
                  %v1418 = vld [vmem:[%s1238 + $0xf4c] sm:%s1231]
                  %1419 = vst [vmem:[%s1239 + $0x2c8] sm:%s1231] %v1418
                  %v1420 = vld [vmem:[%s1238 + $0xf78] sm:%s1231]
                  %1421 = vst [vmem:[%s1239 + $0x2d0] sm:%s1231] %v1420
                  %v1422 = vld [vmem:[%s1238 + $0xfa4] sm:%s1231]
                  %1423 = vst [vmem:[%s1239 + $0x2d8] sm:%s1231] %v1422
                  %v1424 = vld [vmem:[%s1238 + $0xfd0] sm:%s1231]
                  %1425 = vst [vmem:[%s1239 + $0x2e0] sm:%s1231] %v1424
                  %v1426 = vld [vmem:[%s1238 + $0xffc] sm:%s1231]
                  %1427 = vst [vmem:[%s1239 + $0x2e8] sm:%s1231] %v1426
                  %v1428 = vld [vmem:[%s1238 + $0x1028] sm:%s1231]
                  %1429 = vst [vmem:[%s1239 + $0x2f0] sm:%s1231] %v1428
                  %v1430 = vld [vmem:[%s1238 + $0x1054] sm:%s1231]
                  %1431 = vst [vmem:[%s1239 + $0x2f8] sm:%s1231] %v1430
                  %v1432 = vld [vmem:[%s1238 + $0x1080] sm:%s1231]
                  %1433 = vst [vmem:[%s1239 + $0x300] sm:%s1231] %v1432
                  %v1434 = vld [vmem:[%s1238 + $0x10ac] sm:%s1231]
                  %1435 = vst [vmem:[%s1239 + $0x308] sm:%s1231] %v1434
                  %v1436 = vld [vmem:[%s1238 + $0x10d8] sm:%s1231]
                  %1437 = vst [vmem:[%s1239 + $0x310] sm:%s1231] %v1436
                  %v1438 = vld [vmem:[%s1238 + $0x1104] sm:%s1231]
                  %1439 = vst [vmem:[%s1239 + $0x318] sm:%s1231] %v1438
                  %v1440 = vld [vmem:[%s1238 + $0x1130] sm:%s1231]
                  %1441 = vst [vmem:[%s1239 + $0x320] sm:%s1231] %v1440
                  %v1442 = vld [vmem:[%s1238 + $0x115c] sm:%s1231]
                  %1443 = vst [vmem:[%s1239 + $0x328] sm:%s1231] %v1442
                  %v1444 = vld [vmem:[%s1238 + $0x1188] sm:%s1231]
                  %1445 = vst [vmem:[%s1239 + $0x330] sm:%s1231] %v1444
                  %v1446 = vld [vmem:[%s1238 + $0x11b4] sm:%s1231]
                  %1447 = vst [vmem:[%s1239 + $0x338] sm:%s1231] %v1446
                  %v1448 = vld [vmem:[%s1238 + $0x11e0] sm:%s1231]
                  %1449 = vst [vmem:[%s1239 + $0x340] sm:%s1231] %v1448
                  %v1450 = vld [vmem:[%s1238 + $0x120c] sm:%s1231]
                  %1451 = vst [vmem:[%s1239 + $0x348] sm:%s1231] %v1450
                  %v1452 = vld [vmem:[%s1238 + $0x1238] sm:%s1231]
                  %1453 = vst [vmem:[%s1239 + $0x350] sm:%s1231] %v1452
                  %v1454 = vld [vmem:[%s1238 + $0x1264] sm:%s1231]
                  %1455 = vst [vmem:[%s1239 + $0x358] sm:%s1231] %v1454
                  %v1456 = vld [vmem:[%s1238 + $0x1290] sm:%s1231]
                  %1457 = vst [vmem:[%s1239 + $0x360] sm:%s1231] %v1456
                  %v1458 = vld [vmem:[%s1238 + $0x12bc] sm:%s1231]
                  %1459 = vst [vmem:[%s1239 + $0x368] sm:%s1231] %v1458
                  %v1460 = vld [vmem:[%s1238 + $0x12e8] sm:%s1231]
                  %1461 = vst [vmem:[%s1239 + $0x370] sm:%s1231] %v1460
                  %v1462 = vld [vmem:[%s1238 + $0x1314] sm:%s1231]
                  %1463 = vst [vmem:[%s1239 + $0x378] sm:%s1231] %v1462
                  %v1464 = vld [vmem:[%s1238 + $0x1340] sm:%s1231]
                  %1465 = vst [vmem:[%s1239 + $0x380] sm:%s1231] %v1464
                  %v1466 = vld [vmem:[%s1238 + $0x136c] sm:%s1231]
                  %1467 = vst [vmem:[%s1239 + $0x388] sm:%s1231] %v1466
                  %v1468 = vld [vmem:[%s1238 + $0x1398] sm:%s1231]
                  %1469 = vst [vmem:[%s1239 + $0x390] sm:%s1231] %v1468
                  %v1470 = vld [vmem:[%s1238 + $0x13c4] sm:%s1231]
                  %1471 = vst [vmem:[%s1239 + $0x398] sm:%s1231] %v1470
                  %v1472 = vld [vmem:[%s1238 + $0x13f0] sm:%s1231]
                  %1473 = vst [vmem:[%s1239 + $0x3a0] sm:%s1231] %v1472
                  %v1474 = vld [vmem:[%s1238 + $0x141c] sm:%s1231]
                  %1475 = vst [vmem:[%s1239 + $0x3a8] sm:%s1231] %v1474
                  %v1476 = vld [vmem:[%s1238 + $0x1448] sm:%s1231]
                  %1477 = vst [vmem:[%s1239 + $0x3b0] sm:%s1231] %v1476
                  %v1478 = vld [vmem:[%s1238 + $0x1474] sm:%s1231]
                  %1479 = vst [vmem:[%s1239 + $0x3b8] sm:%s1231] %v1478
                  %v1480 = vld [vmem:[%s1238 + $0x14a0] sm:%s1231]
                  %1481 = vst [vmem:[%s1239 + $0x3c0] sm:%s1231] %v1480
                  %v1482 = vld [vmem:[%s1238 + $0x14cc] sm:%s1231]
                  %1483 = vst [vmem:[%s1239 + $0x3c8] sm:%s1231] %v1482
                  %v1484 = vld [vmem:[%s1238 + $0x14f8] sm:%s1231]
                  %1485 = vst [vmem:[%s1239 + $0x3d0] sm:%s1231] %v1484
                  %v1486 = vld [vmem:[%s1238 + $0x1524] sm:%s1231]
                  %1487 = vst [vmem:[%s1239 + $0x3d8] sm:%s1231] %v1486
                  %v1488 = vld [vmem:[%s1238 + $0x1550] sm:%s1231]
                  %1489 = vst [vmem:[%s1239 + $0x3e0] sm:%s1231] %v1488
                  %v1490 = vld [vmem:[%s1238 + $0x157c] sm:%s1231]
                  %1491 = vst [vmem:[%s1239 + $0x3e8] sm:%s1231] %v1490
                  %v1492 = vld [vmem:[%s1238 + $0x15a8] sm:%s1231]
                  %1493 = vst [vmem:[%s1239 + $0x3f0] sm:%s1231] %v1492
                  %v1494 = vld [vmem:[%s1238 + $0x15d4] sm:%s1231]
                  %1495 = vst [vmem:[%s1239 + $0x3f8] sm:%s1231] %v1494
                  %v1496 = vld [vmem:[%s1238 + $0x1600] sm:%s1231]
                  %1497 = vst [vmem:[%s1239 + $0x400] sm:%s1231] %v1496
                  %v1498 = vld [vmem:[%s1238 + $0x162c] sm:%s1231]
                  %1499 = vst [vmem:[%s1239 + $0x408] sm:%s1231] %v1498
                  %v1500 = vld [vmem:[%s1238 + $0x1658] sm:%s1231]
                  %1501 = vst [vmem:[%s1239 + $0x410] sm:%s1231] %v1500
                  %v1502 = vld [vmem:[%s1238 + $0x1684] sm:%s1231]
                  %1503 = vst [vmem:[%s1239 + $0x418] sm:%s1231] %v1502
                  %v1504 = vld [vmem:[%s1238 + $0x16b0] sm:%s1231]
                  %1505 = vst [vmem:[%s1239 + $0x420] sm:%s1231] %v1504
                  %v1506 = vld [vmem:[%s1238 + $0x16dc] sm:%s1231]
                  %1507 = vst [vmem:[%s1239 + $0x428] sm:%s1231] %v1506
                  %v1508 = vld [vmem:[%s1238 + $0x1708] sm:%s1231]
                  %1509 = vst [vmem:[%s1239 + $0x430] sm:%s1231] %v1508
                  %v1510 = vld [vmem:[%s1238 + $0x1734] sm:%s1231]
                  %1511 = vst [vmem:[%s1239 + $0x438] sm:%s1231] %v1510
                  %v1512 = vld [vmem:[%s1238 + $0x1760] sm:%s1231]
                  %1513 = vst [vmem:[%s1239 + $0x440] sm:%s1231] %v1512
                  %v1514 = vld [vmem:[%s1238 + $0x178c] sm:%s1231]
                  %1515 = vst [vmem:[%s1239 + $0x448] sm:%s1231] %v1514
                  %v1516 = vld [vmem:[%s1238 + $0x17b8] sm:%s1231]
                  %1517 = vst [vmem:[%s1239 + $0x450] sm:%s1231] %v1516
                  %v1518 = vld [vmem:[%s1238 + $0x17e4] sm:%s1231]
                  %1519 = vst [vmem:[%s1239 + $0x458] sm:%s1231] %v1518
                  %v1520 = vld [vmem:[%s1238 + $0x1810] sm:%s1231]
                  %1521 = vst [vmem:[%s1239 + $0x460] sm:%s1231] %v1520
                  %v1522 = vld [vmem:[%s1238 + $0x183c] sm:%s1231]
                  %1523 = vst [vmem:[%s1239 + $0x468] sm:%s1231] %v1522
                  %v1524 = vld [vmem:[%s1238 + $0x1868] sm:%s1231]
                  %1525 = vst [vmem:[%s1239 + $0x470] sm:%s1231] %v1524
                  %v1526 = vld [vmem:[%s1238 + $0x1894] sm:%s1231]
                  %1527 = vst [vmem:[%s1239 + $0x478] sm:%s1231] %v1526
                  %v1528 = vld [vmem:[%s1238 + $0x18c0] sm:%s1231]
                  %1529 = vst [vmem:[%s1239 + $0x480] sm:%s1231] %v1528
                  %v1530 = vld [vmem:[%s1238 + $0x18ec] sm:%s1231]
                  %1531 = vst [vmem:[%s1239 + $0x488] sm:%s1231] %v1530
                  %v1532 = vld [vmem:[%s1238 + $0x1918] sm:%s1231]
                  %1533 = vst [vmem:[%s1239 + $0x490] sm:%s1231] %v1532
                  %v1534 = vld [vmem:[%s1238 + $0x1944] sm:%s1231]
                  %1535 = vst [vmem:[%s1239 + $0x498] sm:%s1231] %v1534
                  %v1536 = vld [vmem:[%s1238 + $0x1970] sm:%s1231]
                  %1537 = vst [vmem:[%s1239 + $0x4a0] sm:%s1231] %v1536
                  %v1538 = vld [vmem:[%s1238 + $0x199c] sm:%s1231]
                  %1539 = vst [vmem:[%s1239 + $0x4a8] sm:%s1231] %v1538
                  %v1540 = vld [vmem:[%s1238 + $0x19c8] sm:%s1231]
                  %1541 = vst [vmem:[%s1239 + $0x4b0] sm:%s1231] %v1540
                  %v1542 = vld [vmem:[%s1238 + $0x19f4] sm:%s1231]
                  %1543 = vst [vmem:[%s1239 + $0x4b8] sm:%s1231] %v1542
                  %v1544 = vld [vmem:[%s1238 + $0x1a20] sm:%s1231]
                  %1545 = vst [vmem:[%s1239 + $0x4c0] sm:%s1231] %v1544
                  %v1546 = vld [vmem:[%s1238 + $0x1a4c] sm:%s1231]
                  %1547 = vst [vmem:[%s1239 + $0x4c8] sm:%s1231] %v1546
                  %v1548 = vld [vmem:[%s1238 + $0x1a78] sm:%s1231]
                  %1549 = vst [vmem:[%s1239 + $0x4d0] sm:%s1231] %v1548
                  %v1550 = vld [vmem:[%s1238 + $0x1aa4] sm:%s1231]
                  %1551 = vst [vmem:[%s1239 + $0x4d8] sm:%s1231] %v1550
                  %v1552 = vld [vmem:[%s1238 + $0x1ad0] sm:%s1231]
                  %1553 = vst [vmem:[%s1239 + $0x4e0] sm:%s1231] %v1552
                  %v1554 = vld [vmem:[%s1238 + $0x1afc] sm:%s1231]
                  %1555 = vst [vmem:[%s1239 + $0x4e8] sm:%s1231] %v1554
                  %v1556 = vld [vmem:[%s1238 + $0x1b28] sm:%s1231]
                  %1557 = vst [vmem:[%s1239 + $0x4f0] sm:%s1231] %v1556
                  %v1558 = vld [vmem:[%s1238 + $0x1b54] sm:%s1231]
                  %1559 = vst [vmem:[%s1239 + $0x4f8] sm:%s1231] %v1558
                  %v1560 = vld [vmem:[%s1238 + $0x1b80] sm:%s1231]
                  %1561 = vst [vmem:[%s1239 + $0x500] sm:%s1231] %v1560
                  %v1562 = vld [vmem:[%s1238 + $0x1bac] sm:%s1231]
                  %1563 = vst [vmem:[%s1239 + $0x508] sm:%s1231] %v1562
                  %v1564 = vld [vmem:[%s1238 + $0x1bd8] sm:%s1231]
                  %1565 = vst [vmem:[%s1239 + $0x510] sm:%s1231] %v1564
                  %v1566 = vld [vmem:[%s1238 + $0x1c04] sm:%s1231]
                  %1567 = vst [vmem:[%s1239 + $0x518] sm:%s1231] %v1566
                  %v1568 = vld [vmem:[%s1238 + $0x1c30] sm:%s1231]
                  %1569 = vst [vmem:[%s1239 + $0x520] sm:%s1231] %v1568
                  %v1570 = vld [vmem:[%s1238 + $0x1c5c] sm:%s1231]
                  %1571 = vst [vmem:[%s1239 + $0x528] sm:%s1231] %v1570
                  %v1572 = vld [vmem:[%s1238 + $0x1c88] sm:%s1231]
                  %1573 = vst [vmem:[%s1239 + $0x530] sm:%s1231] %v1572
                  %v1574 = vld [vmem:[%s1238 + $0x1cb4] sm:%s1231]
                  %1575 = vst [vmem:[%s1239 + $0x538] sm:%s1231] %v1574
                  %v1576 = vld [vmem:[%s1238 + $0x1ce0] sm:%s1231]
                  %1577 = vst [vmem:[%s1239 + $0x540] sm:%s1231] %v1576
                  %v1578 = vld [vmem:[%s1238 + $0x1d0c] sm:%s1231]
                  %1579 = vst [vmem:[%s1239 + $0x548] sm:%s1231] %v1578
                  %v1580 = vld [vmem:[%s1238 + $0x1d38] sm:%s1231]
                  %1581 = vst [vmem:[%s1239 + $0x550] sm:%s1231] %v1580
                  %v1582 = vld [vmem:[%s1238 + $0x1d64] sm:%s1231]
                  %1583 = vst [vmem:[%s1239 + $0x558] sm:%s1231] %v1582
                  %v1584 = vld [vmem:[%s1238 + $0x1d90] sm:%s1231]
                  %1585 = vst [vmem:[%s1239 + $0x560] sm:%s1231] %v1584
                  %v1586 = vld [vmem:[%s1238 + $0x1dbc] sm:%s1231]
                  %1587 = vst [vmem:[%s1239 + $0x568] sm:%s1231] %v1586
                $region70: #{conv2d_1x1.1} parent=57 // loop_footer
                  %s1237 = sadd.s32 1, %s1233
                $region71: #{conv2d_1x1.1} parent=57 // loop_footer_branch
                  %1232 = sbr.rel target = $region67
                $region72: #{conv2d_1x1.1} parent=57 // loop_exit
                  _
              $region58: #{conv2d_1x1.1} parent=31 // pred_fallthru
                _
            $region32: #{conv2d_1x1.1} parent=27 // pred_fallthru
              _
            // Predicated region
            $region33: #{conv2d_1x1.1} parent=27 // pred_check
              %p126 = pneg %p122
            $region34: #{conv2d_1x1.1} parent=27 // pred_check_branch
              %128 = sbr.rel (%p126) target = $region36
            $region35: #{conv2d_1x1.1} parent=27 // pred_region
              %s129 = sshll.u32 1, %s118
              %s130 = ssub.s32 %s129, 1
              loop: start=0, step=1, limit=1
              $region37: #{conv2d_1x1.1} parent=35 // loop_pre_header
                _
              $region38: #{conv2d_1x1.1} parent=35 // loop_header
                %s132 = sphi 0, %s136
                %p133 = scmp.ge.s32.totalorder %s132, 1
                %s137 = sphi %s117, %s117
                %s138 = sphi %s109, %s109
              $region39: #{conv2d_1x1.1} parent=35 // loop_header_branch
                %135 = sbr.rel (%p133) target = $region43
              $region40: #{conv2d_1x1.1} parent=35 // loop_body
                %v139 = vld [vmem:[%s137] sm:%s130]
                %140 = vst [vmem:[%s138] sm:%s130] %v139
                %v141 = vld [vmem:[%s137 + $0x2c] sm:%s130]
                %142 = vst [vmem:[%s138 + $0x8] sm:%s130] %v141
                %v143 = vld [vmem:[%s137 + $0x58] sm:%s130]
                %144 = vst [vmem:[%s138 + $0x10] sm:%s130] %v143
                %v145 = vld [vmem:[%s137 + $0x84] sm:%s130]
                %146 = vst [vmem:[%s138 + $0x18] sm:%s130] %v145
                %v147 = vld [vmem:[%s137 + $0xb0] sm:%s130]
                %148 = vst [vmem:[%s138 + $0x20] sm:%s130] %v147
                %v149 = vld [vmem:[%s137 + $0xdc] sm:%s130]
                %150 = vst [vmem:[%s138 + $0x28] sm:%s130] %v149
                %v151 = vld [vmem:[%s137 + $0x108] sm:%s130]
                %152 = vst [vmem:[%s138 + $0x30] sm:%s130] %v151
                %v153 = vld [vmem:[%s137 + $0x134] sm:%s130]
                %154 = vst [vmem:[%s138 + $0x38] sm:%s130] %v153
                %v155 = vld [vmem:[%s137 + $0x160] sm:%s130]
                %156 = vst [vmem:[%s138 + $0x40] sm:%s130] %v155
                %v157 = vld [vmem:[%s137 + $0x18c] sm:%s130]
                %158 = vst [vmem:[%s138 + $0x48] sm:%s130] %v157
                %v159 = vld [vmem:[%s137 + $0x1b8] sm:%s130]
                %160 = vst [vmem:[%s138 + $0x50] sm:%s130] %v159
                %v161 = vld [vmem:[%s137 + $0x1e4] sm:%s130]
                %162 = vst [vmem:[%s138 + $0x58] sm:%s130] %v161
                %v163 = vld [vmem:[%s137 + $0x210] sm:%s130]
                %164 = vst [vmem:[%s138 + $0x60] sm:%s130] %v163
                %v165 = vld [vmem:[%s137 + $0x23c] sm:%s130]
                %166 = vst [vmem:[%s138 + $0x68] sm:%s130] %v165
                %v167 = vld [vmem:[%s137 + $0x268] sm:%s130]
                %168 = vst [vmem:[%s138 + $0x70] sm:%s130] %v167
                %v169 = vld [vmem:[%s137 + $0x294] sm:%s130]
                %170 = vst [vmem:[%s138 + $0x78] sm:%s130] %v169
                %v171 = vld [vmem:[%s137 + $0x2c0] sm:%s130]
                %172 = vst [vmem:[%s138 + $0x80] sm:%s130] %v171
                %v173 = vld [vmem:[%s137 + $0x2ec] sm:%s130]
                %174 = vst [vmem:[%s138 + $0x88] sm:%s130] %v173
                %v175 = vld [vmem:[%s137 + $0x318] sm:%s130]
                %176 = vst [vmem:[%s138 + $0x90] sm:%s130] %v175
                %v177 = vld [vmem:[%s137 + $0x344] sm:%s130]
                %178 = vst [vmem:[%s138 + $0x98] sm:%s130] %v177
                %v179 = vld [vmem:[%s137 + $0x370] sm:%s130]
                %180 = vst [vmem:[%s138 + $0xa0] sm:%s130] %v179
                %v181 = vld [vmem:[%s137 + $0x39c] sm:%s130]
                %182 = vst [vmem:[%s138 + $0xa8] sm:%s130] %v181
                %v183 = vld [vmem:[%s137 + $0x3c8] sm:%s130]
                %184 = vst [vmem:[%s138 + $0xb0] sm:%s130] %v183
                %v185 = vld [vmem:[%s137 + $0x3f4] sm:%s130]
                %186 = vst [vmem:[%s138 + $0xb8] sm:%s130] %v185
                %v187 = vld [vmem:[%s137 + $0x420] sm:%s130]
                %188 = vst [vmem:[%s138 + $0xc0] sm:%s130] %v187
                %v189 = vld [vmem:[%s137 + $0x44c] sm:%s130]
                %190 = vst [vmem:[%s138 + $0xc8] sm:%s130] %v189
                %v191 = vld [vmem:[%s137 + $0x478] sm:%s130]
                %192 = vst [vmem:[%s138 + $0xd0] sm:%s130] %v191
                %v193 = vld [vmem:[%s137 + $0x4a4] sm:%s130]
                %194 = vst [vmem:[%s138 + $0xd8] sm:%s130] %v193
                %v195 = vld [vmem:[%s137 + $0x4d0] sm:%s130]
                %196 = vst [vmem:[%s138 + $0xe0] sm:%s130] %v195
                %v197 = vld [vmem:[%s137 + $0x4fc] sm:%s130]
                %198 = vst [vmem:[%s138 + $0xe8] sm:%s130] %v197
                %v199 = vld [vmem:[%s137 + $0x528] sm:%s130]
                %200 = vst [vmem:[%s138 + $0xf0] sm:%s130] %v199
                %v201 = vld [vmem:[%s137 + $0x554] sm:%s130]
                %202 = vst [vmem:[%s138 + $0xf8] sm:%s130] %v201
                %v203 = vld [vmem:[%s137 + $0x580] sm:%s130]
                %204 = vst [vmem:[%s138 + $0x100] sm:%s130] %v203
                %v205 = vld [vmem:[%s137 + $0x5ac] sm:%s130]
                %206 = vst [vmem:[%s138 + $0x108] sm:%s130] %v205
                %v207 = vld [vmem:[%s137 + $0x5d8] sm:%s130]
                %208 = vst [vmem:[%s138 + $0x110] sm:%s130] %v207
                %v209 = vld [vmem:[%s137 + $0x604] sm:%s130]
                %210 = vst [vmem:[%s138 + $0x118] sm:%s130] %v209
                %v211 = vld [vmem:[%s137 + $0x630] sm:%s130]
                %212 = vst [vmem:[%s138 + $0x120] sm:%s130] %v211
                %v213 = vld [vmem:[%s137 + $0x65c] sm:%s130]
                %214 = vst [vmem:[%s138 + $0x128] sm:%s130] %v213
                %v215 = vld [vmem:[%s137 + $0x688] sm:%s130]
                %216 = vst [vmem:[%s138 + $0x130] sm:%s130] %v215
                %v217 = vld [vmem:[%s137 + $0x6b4] sm:%s130]
                %218 = vst [vmem:[%s138 + $0x138] sm:%s130] %v217
                %v219 = vld [vmem:[%s137 + $0x6e0] sm:%s130]
                %220 = vst [vmem:[%s138 + $0x140] sm:%s130] %v219
                %v221 = vld [vmem:[%s137 + $0x70c] sm:%s130]
                %222 = vst [vmem:[%s138 + $0x148] sm:%s130] %v221
                %v223 = vld [vmem:[%s137 + $0x738] sm:%s130]
                %224 = vst [vmem:[%s138 + $0x150] sm:%s130] %v223
                %v225 = vld [vmem:[%s137 + $0x764] sm:%s130]
                %226 = vst [vmem:[%s138 + $0x158] sm:%s130] %v225
                %v227 = vld [vmem:[%s137 + $0x790] sm:%s130]
                %228 = vst [vmem:[%s138 + $0x160] sm:%s130] %v227
                %v229 = vld [vmem:[%s137 + $0x7bc] sm:%s130]
                %230 = vst [vmem:[%s138 + $0x168] sm:%s130] %v229
                %v231 = vld [vmem:[%s137 + $0x7e8] sm:%s130]
                %232 = vst [vmem:[%s138 + $0x170] sm:%s130] %v231
                %v233 = vld [vmem:[%s137 + $0x814] sm:%s130]
                %234 = vst [vmem:[%s138 + $0x178] sm:%s130] %v233
                %v235 = vld [vmem:[%s137 + $0x840] sm:%s130]
                %236 = vst [vmem:[%s138 + $0x180] sm:%s130] %v235
                %v237 = vld [vmem:[%s137 + $0x86c] sm:%s130]
                %238 = vst [vmem:[%s138 + $0x188] sm:%s130] %v237
                %v239 = vld [vmem:[%s137 + $0x898] sm:%s130]
                %240 = vst [vmem:[%s138 + $0x190] sm:%s130] %v239
                %v241 = vld [vmem:[%s137 + $0x8c4] sm:%s130]
                %242 = vst [vmem:[%s138 + $0x198] sm:%s130] %v241
                %v243 = vld [vmem:[%s137 + $0x8f0] sm:%s130]
                %244 = vst [vmem:[%s138 + $0x1a0] sm:%s130] %v243
                %v245 = vld [vmem:[%s137 + $0x91c] sm:%s130]
                %246 = vst [vmem:[%s138 + $0x1a8] sm:%s130] %v245
                %v247 = vld [vmem:[%s137 + $0x948] sm:%s130]
                %248 = vst [vmem:[%s138 + $0x1b0] sm:%s130] %v247
                %v249 = vld [vmem:[%s137 + $0x974] sm:%s130]
                %250 = vst [vmem:[%s138 + $0x1b8] sm:%s130] %v249
                %v251 = vld [vmem:[%s137 + $0x9a0] sm:%s130]
                %252 = vst [vmem:[%s138 + $0x1c0] sm:%s130] %v251
                %v253 = vld [vmem:[%s137 + $0x9cc] sm:%s130]
                %254 = vst [vmem:[%s138 + $0x1c8] sm:%s130] %v253
                %v255 = vld [vmem:[%s137 + $0x9f8] sm:%s130]
                %256 = vst [vmem:[%s138 + $0x1d0] sm:%s130] %v255
                %v257 = vld [vmem:[%s137 + $0xa24] sm:%s130]
                %258 = vst [vmem:[%s138 + $0x1d8] sm:%s130] %v257
                %v259 = vld [vmem:[%s137 + $0xa50] sm:%s130]
                %260 = vst [vmem:[%s138 + $0x1e0] sm:%s130] %v259
                %v261 = vld [vmem:[%s137 + $0xa7c] sm:%s130]
                %262 = vst [vmem:[%s138 + $0x1e8] sm:%s130] %v261
                %v263 = vld [vmem:[%s137 + $0xaa8] sm:%s130]
                %264 = vst [vmem:[%s138 + $0x1f0] sm:%s130] %v263
                %v265 = vld [vmem:[%s137 + $0xad4] sm:%s130]
                %266 = vst [vmem:[%s138 + $0x1f8] sm:%s130] %v265
                %v267 = vld [vmem:[%s137 + $0xb00] sm:%s130]
                %268 = vst [vmem:[%s138 + $0x200] sm:%s130] %v267
                %v269 = vld [vmem:[%s137 + $0xb2c] sm:%s130]
                %270 = vst [vmem:[%s138 + $0x208] sm:%s130] %v269
                %v271 = vld [vmem:[%s137 + $0xb58] sm:%s130]
                %272 = vst [vmem:[%s138 + $0x210] sm:%s130] %v271
                %v273 = vld [vmem:[%s137 + $0xb84] sm:%s130]
                %274 = vst [vmem:[%s138 + $0x218] sm:%s130] %v273
                %v275 = vld [vmem:[%s137 + $0xbb0] sm:%s130]
                %276 = vst [vmem:[%s138 + $0x220] sm:%s130] %v275
                %v277 = vld [vmem:[%s137 + $0xbdc] sm:%s130]
                %278 = vst [vmem:[%s138 + $0x228] sm:%s130] %v277
                %v279 = vld [vmem:[%s137 + $0xc08] sm:%s130]
                %280 = vst [vmem:[%s138 + $0x230] sm:%s130] %v279
                %v281 = vld [vmem:[%s137 + $0xc34] sm:%s130]
                %282 = vst [vmem:[%s138 + $0x238] sm:%s130] %v281
                %v283 = vld [vmem:[%s137 + $0xc60] sm:%s130]
                %284 = vst [vmem:[%s138 + $0x240] sm:%s130] %v283
                %v285 = vld [vmem:[%s137 + $0xc8c] sm:%s130]
                %286 = vst [vmem:[%s138 + $0x248] sm:%s130] %v285
                %v287 = vld [vmem:[%s137 + $0xcb8] sm:%s130]
                %288 = vst [vmem:[%s138 + $0x250] sm:%s130] %v287
                %v289 = vld [vmem:[%s137 + $0xce4] sm:%s130]
                %290 = vst [vmem:[%s138 + $0x258] sm:%s130] %v289
                %v291 = vld [vmem:[%s137 + $0xd10] sm:%s130]
                %292 = vst [vmem:[%s138 + $0x260] sm:%s130] %v291
                %v293 = vld [vmem:[%s137 + $0xd3c] sm:%s130]
                %294 = vst [vmem:[%s138 + $0x268] sm:%s130] %v293
                %v295 = vld [vmem:[%s137 + $0xd68] sm:%s130]
                %296 = vst [vmem:[%s138 + $0x270] sm:%s130] %v295
                %v297 = vld [vmem:[%s137 + $0xd94] sm:%s130]
                %298 = vst [vmem:[%s138 + $0x278] sm:%s130] %v297
                %v299 = vld [vmem:[%s137 + $0xdc0] sm:%s130]
                %300 = vst [vmem:[%s138 + $0x280] sm:%s130] %v299
                %v301 = vld [vmem:[%s137 + $0xdec] sm:%s130]
                %302 = vst [vmem:[%s138 + $0x288] sm:%s130] %v301
                %v303 = vld [vmem:[%s137 + $0xe18] sm:%s130]
                %304 = vst [vmem:[%s138 + $0x290] sm:%s130] %v303
                %v305 = vld [vmem:[%s137 + $0xe44] sm:%s130]
                %306 = vst [vmem:[%s138 + $0x298] sm:%s130] %v305
                %v307 = vld [vmem:[%s137 + $0xe70] sm:%s130]
                %308 = vst [vmem:[%s138 + $0x2a0] sm:%s130] %v307
                %v309 = vld [vmem:[%s137 + $0xe9c] sm:%s130]
                %310 = vst [vmem:[%s138 + $0x2a8] sm:%s130] %v309
                %v311 = vld [vmem:[%s137 + $0xec8] sm:%s130]
                %312 = vst [vmem:[%s138 + $0x2b0] sm:%s130] %v311
                %v313 = vld [vmem:[%s137 + $0xef4] sm:%s130]
                %314 = vst [vmem:[%s138 + $0x2b8] sm:%s130] %v313
                %v315 = vld [vmem:[%s137 + $0xf20] sm:%s130]
                %316 = vst [vmem:[%s138 + $0x2c0] sm:%s130] %v315
                %v317 = vld [vmem:[%s137 + $0xf4c] sm:%s130]
                %318 = vst [vmem:[%s138 + $0x2c8] sm:%s130] %v317
                %v319 = vld [vmem:[%s137 + $0xf78] sm:%s130]
                %320 = vst [vmem:[%s138 + $0x2d0] sm:%s130] %v319
                %v321 = vld [vmem:[%s137 + $0xfa4] sm:%s130]
                %322 = vst [vmem:[%s138 + $0x2d8] sm:%s130] %v321
                %v323 = vld [vmem:[%s137 + $0xfd0] sm:%s130]
                %324 = vst [vmem:[%s138 + $0x2e0] sm:%s130] %v323
                %v325 = vld [vmem:[%s137 + $0xffc] sm:%s130]
                %326 = vst [vmem:[%s138 + $0x2e8] sm:%s130] %v325
                %v327 = vld [vmem:[%s137 + $0x1028] sm:%s130]
                %328 = vst [vmem:[%s138 + $0x2f0] sm:%s130] %v327
                %v329 = vld [vmem:[%s137 + $0x1054] sm:%s130]
                %330 = vst [vmem:[%s138 + $0x2f8] sm:%s130] %v329
                %v331 = vld [vmem:[%s137 + $0x1080] sm:%s130]
                %332 = vst [vmem:[%s138 + $0x300] sm:%s130] %v331
                %v333 = vld [vmem:[%s137 + $0x10ac] sm:%s130]
                %334 = vst [vmem:[%s138 + $0x308] sm:%s130] %v333
                %v335 = vld [vmem:[%s137 + $0x10d8] sm:%s130]
                %336 = vst [vmem:[%s138 + $0x310] sm:%s130] %v335
                %v337 = vld [vmem:[%s137 + $0x1104] sm:%s130]
                %338 = vst [vmem:[%s138 + $0x318] sm:%s130] %v337
                %v339 = vld [vmem:[%s137 + $0x1130] sm:%s130]
                %340 = vst [vmem:[%s138 + $0x320] sm:%s130] %v339
                %v341 = vld [vmem:[%s137 + $0x115c] sm:%s130]
                %342 = vst [vmem:[%s138 + $0x328] sm:%s130] %v341
                %v343 = vld [vmem:[%s137 + $0x1188] sm:%s130]
                %344 = vst [vmem:[%s138 + $0x330] sm:%s130] %v343
                %v345 = vld [vmem:[%s137 + $0x11b4] sm:%s130]
                %346 = vst [vmem:[%s138 + $0x338] sm:%s130] %v345
                %v347 = vld [vmem:[%s137 + $0x11e0] sm:%s130]
                %348 = vst [vmem:[%s138 + $0x340] sm:%s130] %v347
                %v349 = vld [vmem:[%s137 + $0x120c] sm:%s130]
                %350 = vst [vmem:[%s138 + $0x348] sm:%s130] %v349
                %v351 = vld [vmem:[%s137 + $0x1238] sm:%s130]
                %352 = vst [vmem:[%s138 + $0x350] sm:%s130] %v351
                %v353 = vld [vmem:[%s137 + $0x1264] sm:%s130]
                %354 = vst [vmem:[%s138 + $0x358] sm:%s130] %v353
                %v355 = vld [vmem:[%s137 + $0x1290] sm:%s130]
                %356 = vst [vmem:[%s138 + $0x360] sm:%s130] %v355
                %v357 = vld [vmem:[%s137 + $0x12bc] sm:%s130]
                %358 = vst [vmem:[%s138 + $0x368] sm:%s130] %v357
                %v359 = vld [vmem:[%s137 + $0x12e8] sm:%s130]
                %360 = vst [vmem:[%s138 + $0x370] sm:%s130] %v359
                %v361 = vld [vmem:[%s137 + $0x1314] sm:%s130]
                %362 = vst [vmem:[%s138 + $0x378] sm:%s130] %v361
                %v363 = vld [vmem:[%s137 + $0x1340] sm:%s130]
                %364 = vst [vmem:[%s138 + $0x380] sm:%s130] %v363
                %v365 = vld [vmem:[%s137 + $0x136c] sm:%s130]
                %366 = vst [vmem:[%s138 + $0x388] sm:%s130] %v365
                %v367 = vld [vmem:[%s137 + $0x1398] sm:%s130]
                %368 = vst [vmem:[%s138 + $0x390] sm:%s130] %v367
                %v369 = vld [vmem:[%s137 + $0x13c4] sm:%s130]
                %370 = vst [vmem:[%s138 + $0x398] sm:%s130] %v369
                %v371 = vld [vmem:[%s137 + $0x13f0] sm:%s130]
                %372 = vst [vmem:[%s138 + $0x3a0] sm:%s130] %v371
                %v373 = vld [vmem:[%s137 + $0x141c] sm:%s130]
                %374 = vst [vmem:[%s138 + $0x3a8] sm:%s130] %v373
                %v375 = vld [vmem:[%s137 + $0x1448] sm:%s130]
                %376 = vst [vmem:[%s138 + $0x3b0] sm:%s130] %v375
                %v377 = vld [vmem:[%s137 + $0x1474] sm:%s130]
                %378 = vst [vmem:[%s138 + $0x3b8] sm:%s130] %v377
                %v379 = vld [vmem:[%s137 + $0x14a0] sm:%s130]
                %380 = vst [vmem:[%s138 + $0x3c0] sm:%s130] %v379
                %v381 = vld [vmem:[%s137 + $0x14cc] sm:%s130]
                %382 = vst [vmem:[%s138 + $0x3c8] sm:%s130] %v381
                %v383 = vld [vmem:[%s137 + $0x14f8] sm:%s130]
                %384 = vst [vmem:[%s138 + $0x3d0] sm:%s130] %v383
                %v385 = vld [vmem:[%s137 + $0x1524] sm:%s130]
                %386 = vst [vmem:[%s138 + $0x3d8] sm:%s130] %v385
                %v387 = vld [vmem:[%s137 + $0x1550] sm:%s130]
                %388 = vst [vmem:[%s138 + $0x3e0] sm:%s130] %v387
                %v389 = vld [vmem:[%s137 + $0x157c] sm:%s130]
                %390 = vst [vmem:[%s138 + $0x3e8] sm:%s130] %v389
                %v391 = vld [vmem:[%s137 + $0x15a8] sm:%s130]
                %392 = vst [vmem:[%s138 + $0x3f0] sm:%s130] %v391
                %v393 = vld [vmem:[%s137 + $0x15d4] sm:%s130]
                %394 = vst [vmem:[%s138 + $0x3f8] sm:%s130] %v393
                %v395 = vld [vmem:[%s137 + $0x1600] sm:%s130]
                %396 = vst [vmem:[%s138 + $0x400] sm:%s130] %v395
                %v397 = vld [vmem:[%s137 + $0x162c] sm:%s130]
                %398 = vst [vmem:[%s138 + $0x408] sm:%s130] %v397
                %v399 = vld [vmem:[%s137 + $0x1658] sm:%s130]
                %400 = vst [vmem:[%s138 + $0x410] sm:%s130] %v399
                %v401 = vld [vmem:[%s137 + $0x1684] sm:%s130]
                %402 = vst [vmem:[%s138 + $0x418] sm:%s130] %v401
                %v403 = vld [vmem:[%s137 + $0x16b0] sm:%s130]
                %404 = vst [vmem:[%s138 + $0x420] sm:%s130] %v403
                %v405 = vld [vmem:[%s137 + $0x16dc] sm:%s130]
                %406 = vst [vmem:[%s138 + $0x428] sm:%s130] %v405
                %v407 = vld [vmem:[%s137 + $0x1708] sm:%s130]
                %408 = vst [vmem:[%s138 + $0x430] sm:%s130] %v407
                %v409 = vld [vmem:[%s137 + $0x1734] sm:%s130]
                %410 = vst [vmem:[%s138 + $0x438] sm:%s130] %v409
                %v411 = vld [vmem:[%s137 + $0x1760] sm:%s130]
                %412 = vst [vmem:[%s138 + $0x440] sm:%s130] %v411
                %v413 = vld [vmem:[%s137 + $0x178c] sm:%s130]
                %414 = vst [vmem:[%s138 + $0x448] sm:%s130] %v413
                %v415 = vld [vmem:[%s137 + $0x17b8] sm:%s130]
                %416 = vst [vmem:[%s138 + $0x450] sm:%s130] %v415
                %v417 = vld [vmem:[%s137 + $0x17e4] sm:%s130]
                %418 = vst [vmem:[%s138 + $0x458] sm:%s130] %v417
                %v419 = vld [vmem:[%s137 + $0x1810] sm:%s130]
                %420 = vst [vmem:[%s138 + $0x460] sm:%s130] %v419
                %v421 = vld [vmem:[%s137 + $0x183c] sm:%s130]
                %422 = vst [vmem:[%s138 + $0x468] sm:%s130] %v421
                %v423 = vld [vmem:[%s137 + $0x1868] sm:%s130]
                %424 = vst [vmem:[%s138 + $0x470] sm:%s130] %v423
                %v425 = vld [vmem:[%s137 + $0x1894] sm:%s130]
                %426 = vst [vmem:[%s138 + $0x478] sm:%s130] %v425
                %v427 = vld [vmem:[%s137 + $0x18c0] sm:%s130]
                %428 = vst [vmem:[%s138 + $0x480] sm:%s130] %v427
                %v429 = vld [vmem:[%s137 + $0x18ec] sm:%s130]
                %430 = vst [vmem:[%s138 + $0x488] sm:%s130] %v429
                %v431 = vld [vmem:[%s137 + $0x1918] sm:%s130]
                %432 = vst [vmem:[%s138 + $0x490] sm:%s130] %v431
                %v433 = vld [vmem:[%s137 + $0x1944] sm:%s130]
                %434 = vst [vmem:[%s138 + $0x498] sm:%s130] %v433
                %v435 = vld [vmem:[%s137 + $0x1970] sm:%s130]
                %436 = vst [vmem:[%s138 + $0x4a0] sm:%s130] %v435
                %v437 = vld [vmem:[%s137 + $0x199c] sm:%s130]
                %438 = vst [vmem:[%s138 + $0x4a8] sm:%s130] %v437
                %v439 = vld [vmem:[%s137 + $0x19c8] sm:%s130]
                %440 = vst [vmem:[%s138 + $0x4b0] sm:%s130] %v439
                %v441 = vld [vmem:[%s137 + $0x19f4] sm:%s130]
                %442 = vst [vmem:[%s138 + $0x4b8] sm:%s130] %v441
                %v443 = vld [vmem:[%s137 + $0x1a20] sm:%s130]
                %444 = vst [vmem:[%s138 + $0x4c0] sm:%s130] %v443
                %v445 = vld [vmem:[%s137 + $0x1a4c] sm:%s130]
                %446 = vst [vmem:[%s138 + $0x4c8] sm:%s130] %v445
                %v447 = vld [vmem:[%s137 + $0x1a78] sm:%s130]
                %448 = vst [vmem:[%s138 + $0x4d0] sm:%s130] %v447
                %v449 = vld [vmem:[%s137 + $0x1aa4] sm:%s130]
                %450 = vst [vmem:[%s138 + $0x4d8] sm:%s130] %v449
                %v451 = vld [vmem:[%s137 + $0x1ad0] sm:%s130]
                %452 = vst [vmem:[%s138 + $0x4e0] sm:%s130] %v451
                %v453 = vld [vmem:[%s137 + $0x1afc] sm:%s130]
                %454 = vst [vmem:[%s138 + $0x4e8] sm:%s130] %v453
                %v455 = vld [vmem:[%s137 + $0x1b28] sm:%s130]
                %456 = vst [vmem:[%s138 + $0x4f0] sm:%s130] %v455
                %v457 = vld [vmem:[%s137 + $0x1b54] sm:%s130]
                %458 = vst [vmem:[%s138 + $0x4f8] sm:%s130] %v457
                %v459 = vld [vmem:[%s137 + $0x1b80] sm:%s130]
                %460 = vst [vmem:[%s138 + $0x500] sm:%s130] %v459
                %v461 = vld [vmem:[%s137 + $0x1bac] sm:%s130]
                %462 = vst [vmem:[%s138 + $0x508] sm:%s130] %v461
                %v463 = vld [vmem:[%s137 + $0x1bd8] sm:%s130]
                %464 = vst [vmem:[%s138 + $0x510] sm:%s130] %v463
                %v465 = vld [vmem:[%s137 + $0x1c04] sm:%s130]
                %466 = vst [vmem:[%s138 + $0x518] sm:%s130] %v465
                %v467 = vld [vmem:[%s137 + $0x1c30] sm:%s130]
                %468 = vst [vmem:[%s138 + $0x520] sm:%s130] %v467
                %v469 = vld [vmem:[%s137 + $0x1c5c] sm:%s130]
                %470 = vst [vmem:[%s138 + $0x528] sm:%s130] %v469
                %v471 = vld [vmem:[%s137 + $0x1c88] sm:%s130]
                %472 = vst [vmem:[%s138 + $0x530] sm:%s130] %v471
                %v473 = vld [vmem:[%s137 + $0x1cb4] sm:%s130]
                %474 = vst [vmem:[%s138 + $0x538] sm:%s130] %v473
                %v475 = vld [vmem:[%s137 + $0x1ce0] sm:%s130]
                %476 = vst [vmem:[%s138 + $0x540] sm:%s130] %v475
                %v477 = vld [vmem:[%s137 + $0x1d0c] sm:%s130]
                %478 = vst [vmem:[%s138 + $0x548] sm:%s130] %v477
                %v479 = vld [vmem:[%s137 + $0x1d38] sm:%s130]
                %480 = vst [vmem:[%s138 + $0x550] sm:%s130] %v479
                %v481 = vld [vmem:[%s137 + $0x1d64] sm:%s130]
                %482 = vst [vmem:[%s138 + $0x558] sm:%s130] %v481
                %v483 = vld [vmem:[%s137 + $0x1d90] sm:%s130]
                %484 = vst [vmem:[%s138 + $0x560] sm:%s130] %v483
                %v485 = vld [vmem:[%s137 + $0x1dbc] sm:%s130]
                %486 = vst [vmem:[%s138 + $0x568] sm:%s130] %v485
              $region41: #{conv2d_1x1.1} parent=35 // loop_footer
                %s136 = sadd.s32 1, %s132
              $region42: #{conv2d_1x1.1} parent=35 // loop_footer_branch
                %131 = sbr.rel target = $region38
              $region43: #{conv2d_1x1.1} parent=35 // loop_exit
                _
            $region36: #{conv2d_1x1.1} parent=27 // pred_fallthru
              _
          $region28: #{conv2d_1x1.1} parent=23 // pred_fallthru
            _
          %1588 = vnop
        $region24: #{conv2d_1x1.1} parent=19 // pred_fallthru
          _
      $region20: #{conv2d_1x1.1} parent=5 // pred_fallthru
        _
      %p1589 = scmp.le.s32.totalorder 1, %s8
      %p1590 = scmp.lt.s32.totalorder %s8, 7
      %p1591 = pnand %p1589, %p1590
      %p1592 = pneg %p1591
      // Predicated region
      $region73: #{conv2d_1x1.1} parent=5 // pred_check
        _
      $region74: #{conv2d_1x1.1} parent=5 // pred_check_branch
        %1594 = sbr.rel (%p1591) target = $region76
      $region75: #{conv2d_1x1.1} parent=5 // pred_region
        %s1595 = ssub.s32 %s8, 1
        %s1596 = sand.u32 %s42, 1
        %s1597 = sand.u32 %s42, 1
        %s1598 = smul.addr %s1597, 1392
        %s1599 = scalar_lea.vmem [#allocation2], %s1598
        // Predicated region
        $region77: #{conv2d_1x1.1} parent=75 // pred_check
          %p1600 = pneg %p55
        $region78: #{conv2d_1x1.1} parent=75 // pred_check_branch
          %1602 = sbr.rel (%p1600) target = $region80
        $region79: #{conv2d_1x1.1} parent=75 // pred_region
          _
        $region80: #{conv2d_1x1.1} parent=75 // pred_fallthru
          _
        %p1603 = pneg %p29
        %p1604 = pneg %p26
        %s1605 = sand.u32 %s42, 1
        %s1606 = sand.u32 %s42, 1
        %s1607 = smul.addr %s1606, 1392
        %s1608 = scalar_lea.vmem [#allocation2], %s1607
        %p1609 = pneg %p55
        %p1610 = pneg %p52
        %p1611 = pneg %p81
        %p1612 = pneg %p78
        %s1613 = sand.u32 %s68, 1
        %s1614 = sand.u32 %s68, 1
        %s1615 = smul.addr %s1614, 400
        %s1616 = scalar_lea.vmem [#allocation3], %s1615
        %s1617 = smul.u32 2, %s13
        %s1618 = ssub.s32 11, %s1617
        %p1619 = scmp.lt.s32.totalorder %s1618, 2
        %s1620 = scalar_select %p1619, %s1618, 2
        %s1621 = smul.u32 696, %s1620
        %s1622 = smul.u32 2, %s13
        %s1623 = ssub.s32 11, %s1622
        %p1624 = scmp.lt.s32.totalorder %s1623, 2
        %s1625 = scalar_select %p1624, %s1623, 2
        %s1626 = smul.u32 200, %s1625
        %v1628 = vld [vmem:[%s0] sm:$0xff]
        %v1629 = vld [vmem:[%s0 + $0x8] sm:$0xff]
        %v1630 = vld [vmem:[%s0 + $0x10] sm:$0xff]
        %v1631 = vld [vmem:[%s0 + $0x18] sm:$0xff]
        %v1632 = vld [vmem:[%s0 + $0x20] sm:$0xff]
        %v1633 = vld [vmem:[%s0 + $0x28] sm:$0xf]
        %v1634 = vld [vmem:[%s0 + $0x2c] sm:$0xff]
        %v1635 = vld [vmem:[%s0 + $0x34] sm:$0xff]
        %v1636 = vld [vmem:[%s0 + $0x3c] sm:$0xff]
        %v1637 = vld [vmem:[%s0 + $0x44] sm:$0xff]
        %v1638 = vld [vmem:[%s0 + $0x4c] sm:$0xff]
        %v1639 = vld [vmem:[%s0 + $0x54] sm:$0xf]
        %v1640 = vld [vmem:[%s0 + $0x58] sm:$0xff]
        %v1641 = vld [vmem:[%s0 + $0x60] sm:$0xff]
        %v1642 = vld [vmem:[%s0 + $0x68] sm:$0xff]
        %v1643 = vld [vmem:[%s0 + $0x70] sm:$0xff]
        %v1644 = vld [vmem:[%s0 + $0x78] sm:$0xff]
        %v1645 = vld [vmem:[%s0 + $0x80] sm:$0xf]
        %v1646 = vld [vmem:[%s0 + $0x84] sm:$0xff]
        %v1647 = vld [vmem:[%s0 + $0x8c] sm:$0xff]
        %v1648 = vld [vmem:[%s0 + $0x94] sm:$0xff]
        %v1649 = vld [vmem:[%s0 + $0x9c] sm:$0xff]
        %v1650 = vld [vmem:[%s0 + $0xa4] sm:$0xff]
        %v1651 = vld [vmem:[%s0 + $0xac] sm:$0xf]
        %v1652 = vld [vmem:[%s0 + $0xb0] sm:$0xff]
        %v1653 = vld [vmem:[%s0 + $0xb8] sm:$0xff]
        %v1654 = vld [vmem:[%s0 + $0xc0] sm:$0xff]
        %v1655 = vld [vmem:[%s0 + $0xc8] sm:$0xff]
        %v1656 = vld [vmem:[%s0 + $0xd0] sm:$0xff]
        %v1657 = vld [vmem:[%s0 + $0xd8] sm:$0xf]
        %v1658 = vld [vmem:[%s0 + $0xdc] sm:$0xff]
        %v1659 = vld [vmem:[%s0 + $0xe4] sm:$0xff]
        %v1660 = vld [vmem:[%s0 + $0xec] sm:$0xff]
        %v1661 = vld [vmem:[%s0 + $0xf4] sm:$0xff]
        %v1662 = vld [vmem:[%s0 + $0xfc] sm:$0xff]
        %v1663 = vld [vmem:[%s0 + $0x104] sm:$0xf]
        %v1664 = vld [vmem:[%s0 + $0x108] sm:$0xff]
        %v1665 = vld [vmem:[%s0 + $0x110] sm:$0xff]
        %v1666 = vld [vmem:[%s0 + $0x118] sm:$0xff]
        %v1667 = vld [vmem:[%s0 + $0x120] sm:$0xff]
        %v1668 = vld [vmem:[%s0 + $0x128] sm:$0xff]
        %v1669 = vld [vmem:[%s0 + $0x130] sm:$0xf]
        %v1670 = vld [vmem:[%s0 + $0x134] sm:$0xff]
        %v1671 = vld [vmem:[%s0 + $0x13c] sm:$0xff]
        %v1672 = vld [vmem:[%s0 + $0x144] sm:$0xff]
        %v1673 = vld [vmem:[%s0 + $0x14c] sm:$0xff]
        %v1674 = vld [vmem:[%s0 + $0x154] sm:$0xff]
        %v1675 = vld [vmem:[%s0 + $0x15c] sm:$0xf]
        %v1676 = vld [vmem:[%s0 + $0x160] sm:$0xff]
        %v1677 = vld [vmem:[%s0 + $0x168] sm:$0xff]
        %v1678 = vld [vmem:[%s0 + $0x170] sm:$0xff]
        %v1679 = vld [vmem:[%s0 + $0x178] sm:$0xff]
        %v1680 = vld [vmem:[%s0 + $0x180] sm:$0xff]
        %v1681 = vld [vmem:[%s0 + $0x188] sm:$0xf]
        %v1682 = vld [vmem:[%s0 + $0x18c] sm:$0xff]
        %v1683 = vld [vmem:[%s0 + $0x194] sm:$0xff]
        %v1684 = vld [vmem:[%s0 + $0x19c] sm:$0xff]
        %v1685 = vld [vmem:[%s0 + $0x1a4] sm:$0xff]
        %v1686 = vld [vmem:[%s0 + $0x1ac] sm:$0xff]
        %v1687 = vld [vmem:[%s0 + $0x1b4] sm:$0xf]
        %v1688 = vld [vmem:[%s0 + $0x1b8] sm:$0xff]
        %v1689 = vld [vmem:[%s0 + $0x1c0] sm:$0xff]
        %v1690 = vld [vmem:[%s0 + $0x1c8] sm:$0xff]
        %v1691 = vld [vmem:[%s0 + $0x1d0] sm:$0xff]
        %v1692 = vld [vmem:[%s0 + $0x1d8] sm:$0xff]
        %v1693 = vld [vmem:[%s0 + $0x1e0] sm:$0xf]
        %v1694 = vld [vmem:[%s0 + $0x1e4] sm:$0xff]
        %v1695 = vld [vmem:[%s0 + $0x1ec] sm:$0xff]
        %v1696 = vld [vmem:[%s0 + $0x1f4] sm:$0xff]
        %v1697 = vld [vmem:[%s0 + $0x1fc] sm:$0xff]
        %v1698 = vld [vmem:[%s0 + $0x204] sm:$0xff]
        %v1699 = vld [vmem:[%s0 + $0x20c] sm:$0xf]
        %v1700 = vld [vmem:[%s0 + $0x210] sm:$0xff]
        %v1701 = vld [vmem:[%s0 + $0x218] sm:$0xff]
        %v1702 = vld [vmem:[%s0 + $0x220] sm:$0xff]
        %v1703 = vld [vmem:[%s0 + $0x228] sm:$0xff]
        %v1704 = vld [vmem:[%s0 + $0x230] sm:$0xff]
        %v1705 = vld [vmem:[%s0 + $0x238] sm:$0xf]
        %v1706 = vld [vmem:[%s0 + $0x23c] sm:$0xff]
        %v1707 = vld [vmem:[%s0 + $0x244] sm:$0xff]
        %v1708 = vld [vmem:[%s0 + $0x24c] sm:$0xff]
        %v1709 = vld [vmem:[%s0 + $0x254] sm:$0xff]
        %v1710 = vld [vmem:[%s0 + $0x25c] sm:$0xff]
        %v1711 = vld [vmem:[%s0 + $0x264] sm:$0xf]
        %v1712 = vld [vmem:[%s0 + $0x268] sm:$0xff]
        %v1713 = vld [vmem:[%s0 + $0x270] sm:$0xff]
        %v1714 = vld [vmem:[%s0 + $0x278] sm:$0xff]
        %v1715 = vld [vmem:[%s0 + $0x280] sm:$0xff]
        %v1716 = vld [vmem:[%s0 + $0x288] sm:$0xff]
        %v1717 = vld [vmem:[%s0 + $0x290] sm:$0xf]
        %v1718 = vld [vmem:[%s0 + $0x294] sm:$0xff]
        %v1719 = vld [vmem:[%s0 + $0x29c] sm:$0xff]
        %v1720 = vld [vmem:[%s0 + $0x2a4] sm:$0xff]
        %v1721 = vld [vmem:[%s0 + $0x2ac] sm:$0xff]
        %v1722 = vld [vmem:[%s0 + $0x2b4] sm:$0xff]
        %v1723 = vld [vmem:[%s0 + $0x2bc] sm:$0xf]
        %v1724 = vld [vmem:[%s0 + $0x2c0] sm:$0xff]
        %v1725 = vld [vmem:[%s0 + $0x2c8] sm:$0xff]
        %v1726 = vld [vmem:[%s0 + $0x2d0] sm:$0xff]
        %v1727 = vld [vmem:[%s0 + $0x2d8] sm:$0xff]
        %v1728 = vld [vmem:[%s0 + $0x2e0] sm:$0xff]
        %v1729 = vld [vmem:[%s0 + $0x2e8] sm:$0xf]
        %v1730 = vld [vmem:[%s0 + $0x2ec] sm:$0xff]
        %v1731 = vld [vmem:[%s0 + $0x2f4] sm:$0xff]
        %v1732 = vld [vmem:[%s0 + $0x2fc] sm:$0xff]
        %v1733 = vld [vmem:[%s0 + $0x304] sm:$0xff]
        %v1734 = vld [vmem:[%s0 + $0x30c] sm:$0xff]
        %v1735 = vld [vmem:[%s0 + $0x314] sm:$0xf]
        %v1736 = vld [vmem:[%s0 + $0x318] sm:$0xff]
        %v1737 = vld [vmem:[%s0 + $0x320] sm:$0xff]
        %v1738 = vld [vmem:[%s0 + $0x328] sm:$0xff]
        %v1739 = vld [vmem:[%s0 + $0x330] sm:$0xff]
        %v1740 = vld [vmem:[%s0 + $0x338] sm:$0xff]
        %v1741 = vld [vmem:[%s0 + $0x340] sm:$0xf]
        %v1742 = vld [vmem:[%s0 + $0x344] sm:$0xff]
        %v1743 = vld [vmem:[%s0 + $0x34c] sm:$0xff]
        %v1744 = vld [vmem:[%s0 + $0x354] sm:$0xff]
        %v1745 = vld [vmem:[%s0 + $0x35c] sm:$0xff]
        %v1746 = vld [vmem:[%s0 + $0x364] sm:$0xff]
        %v1747 = vld [vmem:[%s0 + $0x36c] sm:$0xf]
        %v1748 = vld [vmem:[%s0 + $0x370] sm:$0xff]
        %v1749 = vld [vmem:[%s0 + $0x378] sm:$0xff]
        %v1750 = vld [vmem:[%s0 + $0x380] sm:$0xff]
        %v1751 = vld [vmem:[%s0 + $0x388] sm:$0xff]
        %v1752 = vld [vmem:[%s0 + $0x390] sm:$0xff]
        %v1753 = vld [vmem:[%s0 + $0x398] sm:$0xf]
        %v1754 = vld [vmem:[%s0 + $0x39c] sm:$0xff]
        %v1755 = vld [vmem:[%s0 + $0x3a4] sm:$0xff]
        %v1756 = vld [vmem:[%s0 + $0x3ac] sm:$0xff]
        %v1757 = vld [vmem:[%s0 + $0x3b4] sm:$0xff]
        %v1758 = vld [vmem:[%s0 + $0x3bc] sm:$0xff]
        %v1759 = vld [vmem:[%s0 + $0x3c4] sm:$0xf]
        %v1760 = vld [vmem:[%s0 + $0x3c8] sm:$0xff]
        %v1761 = vld [vmem:[%s0 + $0x3d0] sm:$0xff]
        %v1762 = vld [vmem:[%s0 + $0x3d8] sm:$0xff]
        %v1763 = vld [vmem:[%s0 + $0x3e0] sm:$0xff]
        %v1764 = vld [vmem:[%s0 + $0x3e8] sm:$0xff]
        %v1765 = vld [vmem:[%s0 + $0x3f0] sm:$0xf]
        %v1766 = vld [vmem:[%s0 + $0x3f4] sm:$0xff]
        %v1767 = vld [vmem:[%s0 + $0x3fc] sm:$0xff]
        %v1768 = vld [vmem:[%s0 + $0x404] sm:$0xff]
        %v1769 = vld [vmem:[%s0 + $0x40c] sm:$0xff]
        %v1770 = vld [vmem:[%s0 + $0x414] sm:$0xff]
        %v1771 = vld [vmem:[%s0 + $0x41c] sm:$0xf]
        %v1772 = vld [vmem:[%s0 + $0x420] sm:$0x33]
        %v1773 = vld [vmem:[%s0 + $0x428] sm:$0x33]
        %v1774 = vld [vmem:[%s0 + $0x430] sm:$0x33]
        %v1775 = vld [vmem:[%s0 + $0x438] sm:$0x33]
        %v1776 = vld [vmem:[%s0 + $0x440] sm:$0x33]
        %v1777 = vld [vmem:[%s0 + $0x448] sm:$0x3]
        %v1778 = vld [vmem:[%s1599] sm:$0xff]
        %v1779 = vld [vmem:[%s1599 + $0x8] sm:$0xff]
        %v1780 = vld [vmem:[%s1599 + $0x10] sm:$0xff]
        %v1781 = vld [vmem:[%s1599 + $0x18] sm:$0xff]
        %v1782 = vld [vmem:[%s1599 + $0x20] sm:$0xff]
        %v1783 = vld [vmem:[%s1599 + $0x28] sm:$0xff]
        %v1784 = vld [vmem:[%s1599 + $0x30] sm:$0xff]
        %v1785 = vld [vmem:[%s1599 + $0x38] sm:$0xff]
        %v1786 = vld [vmem:[%s1599 + $0x40] sm:$0xff]
        %v1787 = vld [vmem:[%s1599 + $0x48] sm:$0xff]
        %v1788 = vld [vmem:[%s1599 + $0x50] sm:$0xff]
        %v1789 = vld [vmem:[%s1599 + $0x58] sm:$0xff]
        %v1790 = vld [vmem:[%s1599 + $0x60] sm:$0xff]
        %v1791 = vld [vmem:[%s1599 + $0x68] sm:$0xff]
        %v1792 = vld [vmem:[%s1599 + $0x70] sm:$0xff]
        %v1793 = vld [vmem:[%s1599 + $0x78] sm:$0xff]
        %v1794 = vld [vmem:[%s1599 + $0x80] sm:$0xff]
        %v1795 = vld [vmem:[%s1599 + $0x88] sm:$0xff]
        %v1796 = vld [vmem:[%s1599 + $0x90] sm:$0xff]
        %v1797 = vld [vmem:[%s1599 + $0x98] sm:$0xff]
        %v1798 = vld [vmem:[%s1599 + $0xa0] sm:$0xff]
        %v1799 = vld [vmem:[%s1599 + $0xa8] sm:$0xff]
        %v1800 = vld [vmem:[%s1599 + $0xb0] sm:$0xff]
        %v1801 = vld [vmem:[%s1599 + $0xb8] sm:$0xff]
        %v1802 = vld [vmem:[%s1599 + $0xc0] sm:$0xff]
        %v1803 = vld [vmem:[%s1599 + $0xc8] sm:$0xff]
        %v1804 = vld [vmem:[%s1599 + $0xd0] sm:$0xff]
        %v1805 = vld [vmem:[%s1599 + $0xd8] sm:$0xff]
        %v1806 = vld [vmem:[%s1599 + $0xe0] sm:$0xff]
        %v1807 = vld [vmem:[%s1599 + $0xe8] sm:$0xff]
        %v1808 = vld [vmem:[%s1599 + $0xf0] sm:$0xff]
        %v1809 = vld [vmem:[%s1599 + $0xf8] sm:$0xff]
        %v1810 = vld [vmem:[%s1599 + $0x100] sm:$0xff]
        %v1811 = vld [vmem:[%s1599 + $0x108] sm:$0xff]
        %v1812 = vld [vmem:[%s1599 + $0x110] sm:$0xff]
        %v1813 = vld [vmem:[%s1599 + $0x118] sm:$0xff]
        %v1814 = vld [vmem:[%s1599 + $0x120] sm:$0xff]
        %v1815 = vld [vmem:[%s1599 + $0x128] sm:$0xff]
        %v1816 = vld [vmem:[%s1599 + $0x130] sm:$0xff]
        %v1817 = vld [vmem:[%s1599 + $0x138] sm:$0xff]
        %v1818 = vld [vmem:[%s1599 + $0x140] sm:$0xff]
        %v1819 = vld [vmem:[%s1599 + $0x148] sm:$0xff]
        %v1820 = vld [vmem:[%s1599 + $0x150] sm:$0xff]
        %v1821 = vld [vmem:[%s1599 + $0x158] sm:$0xff]
        %v1822 = vld [vmem:[%s1599 + $0x160] sm:$0xff]
        %v1823 = vld [vmem:[%s1599 + $0x168] sm:$0xff]
        %v1824 = vld [vmem:[%s1599 + $0x170] sm:$0xff]
        %v1825 = vld [vmem:[%s1599 + $0x178] sm:$0xff]
        %v1826 = vld [vmem:[%s1599 + $0x180] sm:$0xff]
        %v1827 = vld [vmem:[%s1599 + $0x188] sm:$0xff]
        %v1828 = vld [vmem:[%s1599 + $0x190] sm:$0xff]
        %v1829 = vld [vmem:[%s1599 + $0x198] sm:$0xff]
        %v1830 = vld [vmem:[%s1599 + $0x1a0] sm:$0xff]
        %v1831 = vld [vmem:[%s1599 + $0x1a8] sm:$0xff]
        %v1832 = vld [vmem:[%s1599 + $0x1b0] sm:$0xff]
        %v1833 = vld [vmem:[%s1599 + $0x1b8] sm:$0xff]
        %v1834 = vld [vmem:[%s1599 + $0x1c0] sm:$0xff]
        %v1835 = vld [vmem:[%s1599 + $0x1c8] sm:$0xff]
        %v1836 = vld [vmem:[%s1599 + $0x1d0] sm:$0xff]
        %v1837 = vld [vmem:[%s1599 + $0x1d8] sm:$0xff]
        %v1838 = vld [vmem:[%s1599 + $0x1e0] sm:$0xff]
        %v1839 = vld [vmem:[%s1599 + $0x1e8] sm:$0xff]
        %v1840 = vld [vmem:[%s1599 + $0x1f0] sm:$0xff]
        %v1841 = vld [vmem:[%s1599 + $0x1f8] sm:$0xff]
        %v1842 = vld [vmem:[%s1599 + $0x200] sm:$0xff]
        %v1843 = vld [vmem:[%s1599 + $0x208] sm:$0xff]
        %v1844 = vld [vmem:[%s1599 + $0x210] sm:$0xff]
        %v1845 = vld [vmem:[%s1599 + $0x218] sm:$0xff]
        %v1846 = vld [vmem:[%s1599 + $0x220] sm:$0xff]
        %v1847 = vld [vmem:[%s1599 + $0x228] sm:$0xff]
        %v1848 = vld [vmem:[%s1599 + $0x230] sm:$0xff]
        %v1849 = vld [vmem:[%s1599 + $0x238] sm:$0xff]
        %v1850 = vld [vmem:[%s1599 + $0x240] sm:$0xff]
        %v1851 = vld [vmem:[%s1599 + $0x248] sm:$0xff]
        %v1852 = vld [vmem:[%s1599 + $0x250] sm:$0xff]
        %v1853 = vld [vmem:[%s1599 + $0x258] sm:$0xff]
        %v1854 = vld [vmem:[%s1599 + $0x260] sm:$0xff]
        %v1855 = vld [vmem:[%s1599 + $0x268] sm:$0xff]
        %v1856 = vld [vmem:[%s1599 + $0x270] sm:$0xff]
        %v1857 = vld [vmem:[%s1599 + $0x278] sm:$0xff]
        %v1858 = vld [vmem:[%s1599 + $0x280] sm:$0xff]
        %v1859 = vld [vmem:[%s1599 + $0x288] sm:$0xff]
        %v1860 = vld [vmem:[%s1599 + $0x290] sm:$0xff]
        %v1861 = vld [vmem:[%s1599 + $0x298] sm:$0xff]
        %v1862 = vld [vmem:[%s1599 + $0x2a0] sm:$0xff]
        %v1863 = vld [vmem:[%s1599 + $0x2a8] sm:$0xff]
        %v1864 = vld [vmem:[%s1599 + $0x2b0] sm:$0xff]
        %v1865 = vld [vmem:[%s1599 + $0x2b8] sm:$0xff]
        %v1866 = vld [vmem:[%s1599 + $0x2c0] sm:$0xff]
        %v1867 = vld [vmem:[%s1599 + $0x2c8] sm:$0xff]
        %v1868 = vld [vmem:[%s1599 + $0x2d0] sm:$0xff]
        %v1869 = vld [vmem:[%s1599 + $0x2d8] sm:$0xff]
        %v1870 = vld [vmem:[%s1599 + $0x2e0] sm:$0xff]
        %v1871 = vld [vmem:[%s1599 + $0x2e8] sm:$0xff]
        %v1872 = vld [vmem:[%s1599 + $0x2f0] sm:$0xff]
        %v1873 = vld [vmem:[%s1599 + $0x2f8] sm:$0xff]
        %v1874 = vld [vmem:[%s1599 + $0x300] sm:$0xff]
        %v1875 = vld [vmem:[%s1599 + $0x308] sm:$0xff]
        %v1876 = vld [vmem:[%s1599 + $0x310] sm:$0xff]
        %v1877 = vld [vmem:[%s1599 + $0x318] sm:$0xff]
        %v1878 = vld [vmem:[%s1599 + $0x320] sm:$0xff]
        %v1879 = vld [vmem:[%s1599 + $0x328] sm:$0xff]
        %v1880 = vld [vmem:[%s1599 + $0x330] sm:$0xff]
        %v1881 = vld [vmem:[%s1599 + $0x338] sm:$0xff]
        %v1882 = vld [vmem:[%s1599 + $0x340] sm:$0xff]
        %v1883 = vld [vmem:[%s1599 + $0x348] sm:$0xff]
        %v1884 = vld [vmem:[%s1599 + $0x350] sm:$0xff]
        %v1885 = vld [vmem:[%s1599 + $0x358] sm:$0xff]
        %v1886 = vld [vmem:[%s1599 + $0x360] sm:$0xff]
        %v1887 = vld [vmem:[%s1599 + $0x368] sm:$0xff]
        %v1888 = vld [vmem:[%s1599 + $0x370] sm:$0xff]
        %v1889 = vld [vmem:[%s1599 + $0x378] sm:$0xff]
        %v1890 = vld [vmem:[%s1599 + $0x380] sm:$0xff]
        %v1891 = vld [vmem:[%s1599 + $0x388] sm:$0xff]
        %v1892 = vld [vmem:[%s1599 + $0x390] sm:$0xff]
        %v1893 = vld [vmem:[%s1599 + $0x398] sm:$0xff]
        %v1894 = vld [vmem:[%s1599 + $0x3a0] sm:$0xff]
        %v1895 = vld [vmem:[%s1599 + $0x3a8] sm:$0xff]
        %v1896 = vld [vmem:[%s1599 + $0x3b0] sm:$0xff]
        %v1897 = vld [vmem:[%s1599 + $0x3b8] sm:$0xff]
        %v1898 = vld [vmem:[%s1599 + $0x3c0] sm:$0xff]
        %v1899 = vld [vmem:[%s1599 + $0x3c8] sm:$0xff]
        %v1900 = vld [vmem:[%s1599 + $0x3d0] sm:$0xff]
        %v1901 = vld [vmem:[%s1599 + $0x3d8] sm:$0xff]
        %v1902 = vld [vmem:[%s1599 + $0x3e0] sm:$0xff]
        %v1903 = vld [vmem:[%s1599 + $0x3e8] sm:$0xff]
        %v1904 = vld [vmem:[%s1599 + $0x3f0] sm:$0xff]
        %v1905 = vld [vmem:[%s1599 + $0x3f8] sm:$0xff]
        %v1906 = vld [vmem:[%s1599 + $0x400] sm:$0xff]
        %v1907 = vld [vmem:[%s1599 + $0x408] sm:$0xff]
        %v1908 = vld [vmem:[%s1599 + $0x410] sm:$0xff]
        %v1909 = vld [vmem:[%s1599 + $0x418] sm:$0xff]
        %v1910 = vld [vmem:[%s1599 + $0x420] sm:$0xff]
        %v1911 = vld [vmem:[%s1599 + $0x428] sm:$0xff]
        %v1912 = vld [vmem:[%s1599 + $0x430] sm:$0xff]
        %v1913 = vld [vmem:[%s1599 + $0x438] sm:$0xff]
        %v1914 = vld [vmem:[%s1599 + $0x440] sm:$0xff]
        %v1915 = vld [vmem:[%s1599 + $0x448] sm:$0xff]
        %v1916 = vld [vmem:[%s1599 + $0x450] sm:$0xff]
        %v1917 = vld [vmem:[%s1599 + $0x458] sm:$0xff]
        %v1918 = vld [vmem:[%s1599 + $0x460] sm:$0xff]
        %v1919 = vld [vmem:[%s1599 + $0x468] sm:$0xff]
        %v1920 = vld [vmem:[%s1599 + $0x470] sm:$0xff]
        %v1921 = vld [vmem:[%s1599 + $0x478] sm:$0xff]
        %v1922 = vld [vmem:[%s1599 + $0x480] sm:$0xff]
        %v1923 = vld [vmem:[%s1599 + $0x488] sm:$0xff]
        %v1924 = vld [vmem:[%s1599 + $0x490] sm:$0xff]
        %v1925 = vld [vmem:[%s1599 + $0x498] sm:$0xff]
        %v1926 = vld [vmem:[%s1599 + $0x4a0] sm:$0xff]
        %v1927 = vld [vmem:[%s1599 + $0x4a8] sm:$0xff]
        %v1928 = vld [vmem:[%s1599 + $0x4b0] sm:$0xff]
        %v1929 = vld [vmem:[%s1599 + $0x4b8] sm:$0xff]
        %v1930 = vld [vmem:[%s1599 + $0x4c0] sm:$0xff]
        %v1931 = vld [vmem:[%s1599 + $0x4c8] sm:$0xff]
        %v1932 = vld [vmem:[%s1599 + $0x4d0] sm:$0xff]
        %v1933 = vld [vmem:[%s1599 + $0x4d8] sm:$0xff]
        %v1934 = vld [vmem:[%s1599 + $0x4e0] sm:$0xff]
        %v1935 = vld [vmem:[%s1599 + $0x4e8] sm:$0xff]
        %v1936 = vld [vmem:[%s1599 + $0x4f0] sm:$0xff]
        %v1937 = vld [vmem:[%s1599 + $0x4f8] sm:$0xff]
        %v1938 = vld [vmem:[%s1599 + $0x500] sm:$0xff]
        %v1939 = vld [vmem:[%s1599 + $0x508] sm:$0xff]
        %v1940 = vld [vmem:[%s1599 + $0x510] sm:$0xff]
        %v1941 = vld [vmem:[%s1599 + $0x518] sm:$0xff]
        %v1942 = vld [vmem:[%s1599 + $0x520] sm:$0xff]
        %v1943 = vld [vmem:[%s1599 + $0x528] sm:$0xff]
        %v1944 = vld [vmem:[%s1599 + $0x530] sm:$0xff]
        %v1945 = vld [vmem:[%s1599 + $0x538] sm:$0xff]
        %v1946 = vld [vmem:[%s1599 + $0x540] sm:$0xff]
        %v1947 = vld [vmem:[%s1599 + $0x548] sm:$0xff]
        %v1948 = vld [vmem:[%s1599 + $0x550] sm:$0xff]
        %v1949 = vld [vmem:[%s1599 + $0x558] sm:$0xff]
        %v1950 = vld [vmem:[%s1599 + $0x560] sm:$0xff]
        %v1951 = vld [vmem:[%s1599 + $0x568] sm:$0xff]
        %v2102 = vunpack.c.l.b16 %v1628
        %v2103 = vunpack.c.h.b16 %v1628
        %v2104 = vunpack.c.l.b16 %v1629
        %v2105 = vunpack.c.h.b16 %v1629
        %v2106 = vunpack.c.l.b16 %v1630
        %v2107 = vunpack.c.h.b16 %v1630
        %v2108 = vunpack.c.l.b16 %v1631
        %v2109 = vunpack.c.h.b16 %v1631
        %v2110 = vunpack.c.l.b16 %v1632
        %v2111 = vunpack.c.h.b16 %v1632
        %v2112 = vunpack.c.l.b16 %v1633
        %v2113 = vunpack.c.l.b16 %v1634
        %v2114 = vunpack.c.h.b16 %v1634
        %v2115 = vunpack.c.l.b16 %v1635
        %v2116 = vunpack.c.h.b16 %v1635
        %v2117 = vunpack.c.l.b16 %v1636
        %v2118 = vunpack.c.h.b16 %v1636
        %v2119 = vunpack.c.l.b16 %v1637
        %v2120 = vunpack.c.h.b16 %v1637
        %v2121 = vunpack.c.l.b16 %v1638
        %v2122 = vunpack.c.h.b16 %v1638
        %v2123 = vunpack.c.l.b16 %v1639
        %v2124 = vunpack.c.l.b16 %v1640
        %v2125 = vunpack.c.h.b16 %v1640
        %v2126 = vunpack.c.l.b16 %v1641
        %v2127 = vunpack.c.h.b16 %v1641
        %v2128 = vunpack.c.l.b16 %v1642
        %v2129 = vunpack.c.h.b16 %v1642
        %v2130 = vunpack.c.l.b16 %v1643
        %v2131 = vunpack.c.h.b16 %v1643
        %v2132 = vunpack.c.l.b16 %v1644
        %v2133 = vunpack.c.h.b16 %v1644
        %v2134 = vunpack.c.l.b16 %v1645
        %v2135 = vunpack.c.l.b16 %v1646
        %v2136 = vunpack.c.h.b16 %v1646
        %v2137 = vunpack.c.l.b16 %v1647
        %v2138 = vunpack.c.h.b16 %v1647
        %v2139 = vunpack.c.l.b16 %v1648
        %v2140 = vunpack.c.h.b16 %v1648
        %v2141 = vunpack.c.l.b16 %v1649
        %v2142 = vunpack.c.h.b16 %v1649
        %v2143 = vunpack.c.l.b16 %v1650
        %v2144 = vunpack.c.h.b16 %v1650
        %v2145 = vunpack.c.l.b16 %v1651
        %v2146 = vunpack.c.l.b16 %v1652
        %v2147 = vunpack.c.h.b16 %v1652
        %v2148 = vunpack.c.l.b16 %v1653
        %v2149 = vunpack.c.h.b16 %v1653
        %v2150 = vunpack.c.l.b16 %v1654
        %v2151 = vunpack.c.h.b16 %v1654
        %v2152 = vunpack.c.l.b16 %v1655
        %v2153 = vunpack.c.h.b16 %v1655
        %v2154 = vunpack.c.l.b16 %v1656
        %v2155 = vunpack.c.h.b16 %v1656
        %v2156 = vunpack.c.l.b16 %v1657
        %v2157 = vunpack.c.l.b16 %v1658
        %v2158 = vunpack.c.h.b16 %v1658
        %v2159 = vunpack.c.l.b16 %v1659
        %v2160 = vunpack.c.h.b16 %v1659
        %v2161 = vunpack.c.l.b16 %v1660
        %v2162 = vunpack.c.h.b16 %v1660
        %v2163 = vunpack.c.l.b16 %v1661
        %v2164 = vunpack.c.h.b16 %v1661
        %v2165 = vunpack.c.l.b16 %v1662
        %v2166 = vunpack.c.h.b16 %v1662
        %v2167 = vunpack.c.l.b16 %v1663
        %v2168 = vunpack.c.l.b16 %v1664
        %v2169 = vunpack.c.h.b16 %v1664
        %v2170 = vunpack.c.l.b16 %v1665
        %v2171 = vunpack.c.h.b16 %v1665
        %v2172 = vunpack.c.l.b16 %v1666
        %v2173 = vunpack.c.h.b16 %v1666
        %v2174 = vunpack.c.l.b16 %v1667
        %v2175 = vunpack.c.h.b16 %v1667
        %v2176 = vunpack.c.l.b16 %v1668
        %v2177 = vunpack.c.h.b16 %v1668
        %v2178 = vunpack.c.l.b16 %v1669
        %v2179 = vunpack.c.l.b16 %v1670
        %v2180 = vunpack.c.h.b16 %v1670
        %v2181 = vunpack.c.l.b16 %v1671
        %v2182 = vunpack.c.h.b16 %v1671
        %v2183 = vunpack.c.l.b16 %v1672
        %v2184 = vunpack.c.h.b16 %v1672
        %v2185 = vunpack.c.l.b16 %v1673
        %v2186 = vunpack.c.h.b16 %v1673
        %v2187 = vunpack.c.l.b16 %v1674
        %v2188 = vunpack.c.h.b16 %v1674
        %v2189 = vunpack.c.l.b16 %v1675
        %v2190 = vunpack.c.l.b16 %v1676
        %v2191 = vunpack.c.h.b16 %v1676
        %v2192 = vunpack.c.l.b16 %v1677
        %v2193 = vunpack.c.h.b16 %v1677
        %v2194 = vunpack.c.l.b16 %v1678
        %v2195 = vunpack.c.h.b16 %v1678
        %v2196 = vunpack.c.l.b16 %v1679
        %v2197 = vunpack.c.h.b16 %v1679
        %v2198 = vunpack.c.l.b16 %v1680
        %v2199 = vunpack.c.h.b16 %v1680
        %v2200 = vunpack.c.l.b16 %v1681
        %v2201 = vunpack.c.l.b16 %v1682
        %v2202 = vunpack.c.h.b16 %v1682
        %v2203 = vunpack.c.l.b16 %v1683
        %v2204 = vunpack.c.h.b16 %v1683
        %v2205 = vunpack.c.l.b16 %v1684
        %v2206 = vunpack.c.h.b16 %v1684
        %v2207 = vunpack.c.l.b16 %v1685
        %v2208 = vunpack.c.h.b16 %v1685
        %v2209 = vunpack.c.l.b16 %v1686
        %v2210 = vunpack.c.h.b16 %v1686
        %v2211 = vunpack.c.l.b16 %v1687
        %v2212 = vunpack.c.l.b16 %v1688
        %v2213 = vunpack.c.h.b16 %v1688
        %v2214 = vunpack.c.l.b16 %v1689
        %v2215 = vunpack.c.h.b16 %v1689
        %v2216 = vunpack.c.l.b16 %v1690
        %v2217 = vunpack.c.h.b16 %v1690
        %v2218 = vunpack.c.l.b16 %v1691
        %v2219 = vunpack.c.h.b16 %v1691
        %v2220 = vunpack.c.l.b16 %v1692
        %v2221 = vunpack.c.h.b16 %v1692
        %v2222 = vunpack.c.l.b16 %v1693
        %v2223 = vunpack.c.l.b16 %v1694
        %v2224 = vunpack.c.h.b16 %v1694
        %v2225 = vunpack.c.l.b16 %v1695
        %v2226 = vunpack.c.h.b16 %v1695
        %v2227 = vunpack.c.l.b16 %v1696
        %v2228 = vunpack.c.h.b16 %v1696
        %v2229 = vunpack.c.l.b16 %v1697
        %v2230 = vunpack.c.h.b16 %v1697
        %v2231 = vunpack.c.l.b16 %v1698
        %v2232 = vunpack.c.h.b16 %v1698
        %v2233 = vunpack.c.l.b16 %v1699
        %v2234 = vunpack.c.l.b16 %v1700
        %v2235 = vunpack.c.h.b16 %v1700
        %v2236 = vunpack.c.l.b16 %v1701
        %v2237 = vunpack.c.h.b16 %v1701
        %v2238 = vunpack.c.l.b16 %v1702
        %v2239 = vunpack.c.h.b16 %v1702
        %v2240 = vunpack.c.l.b16 %v1703
        %v2241 = vunpack.c.h.b16 %v1703
        %v2242 = vunpack.c.l.b16 %v1704
        %v2243 = vunpack.c.h.b16 %v1704
        %v2244 = vunpack.c.l.b16 %v1705
        %v2245 = vunpack.c.l.b16 %v1706
        %v2246 = vunpack.c.h.b16 %v1706
        %v2247 = vunpack.c.l.b16 %v1707
        %v2248 = vunpack.c.h.b16 %v1707
        %v2249 = vunpack.c.l.b16 %v1708
        %v2250 = vunpack.c.h.b16 %v1708
        %v2251 = vunpack.c.l.b16 %v1709
        %v2252 = vunpack.c.h.b16 %v1709
        %v2253 = vunpack.c.l.b16 %v1710
        %v2254 = vunpack.c.h.b16 %v1710
        %v2255 = vunpack.c.l.b16 %v1711
        %v2256 = vunpack.c.l.b16 %v1712
        %v2257 = vunpack.c.h.b16 %v1712
        %v2258 = vunpack.c.l.b16 %v1713
        %v2259 = vunpack.c.h.b16 %v1713
        %v2260 = vunpack.c.l.b16 %v1714
        %v2261 = vunpack.c.h.b16 %v1714
        %v2262 = vunpack.c.l.b16 %v1715
        %v2263 = vunpack.c.h.b16 %v1715
        %v2264 = vunpack.c.l.b16 %v1716
        %v2265 = vunpack.c.h.b16 %v1716
        %v2266 = vunpack.c.l.b16 %v1717
        %v2267 = vunpack.c.l.b16 %v1718
        %v2268 = vunpack.c.h.b16 %v1718
        %v2269 = vunpack.c.l.b16 %v1719
        %v2270 = vunpack.c.h.b16 %v1719
        %v2271 = vunpack.c.l.b16 %v1720
        %v2272 = vunpack.c.h.b16 %v1720
        %v2273 = vunpack.c.l.b16 %v1721
        %v2274 = vunpack.c.h.b16 %v1721
        %v2275 = vunpack.c.l.b16 %v1722
        %v2276 = vunpack.c.h.b16 %v1722
        %v2277 = vunpack.c.l.b16 %v1723
        %v2278 = vunpack.c.l.b16 %v1724
        %v2279 = vunpack.c.h.b16 %v1724
        %v2280 = vunpack.c.l.b16 %v1725
        %v2281 = vunpack.c.h.b16 %v1725
        %v2282 = vunpack.c.l.b16 %v1726
        %v2283 = vunpack.c.h.b16 %v1726
        %v2284 = vunpack.c.l.b16 %v1727
        %v2285 = vunpack.c.h.b16 %v1727
        %v2286 = vunpack.c.l.b16 %v1728
        %v2287 = vunpack.c.h.b16 %v1728
        %v2288 = vunpack.c.l.b16 %v1729
        %v2289 = vunpack.c.l.b16 %v1730
        %v2290 = vunpack.c.h.b16 %v1730
        %v2291 = vunpack.c.l.b16 %v1731
        %v2292 = vunpack.c.h.b16 %v1731
        %v2293 = vunpack.c.l.b16 %v1732
        %v2294 = vunpack.c.h.b16 %v1732
        %v2295 = vunpack.c.l.b16 %v1733
        %v2296 = vunpack.c.h.b16 %v1733
        %v2297 = vunpack.c.l.b16 %v1734
        %v2298 = vunpack.c.h.b16 %v1734
        %v2299 = vunpack.c.l.b16 %v1735
        %v2300 = vunpack.c.l.b16 %v1736
        %v2301 = vunpack.c.h.b16 %v1736
        %v2302 = vunpack.c.l.b16 %v1737
        %v2303 = vunpack.c.h.b16 %v1737
        %v2304 = vunpack.c.l.b16 %v1738
        %v2305 = vunpack.c.h.b16 %v1738
        %v2306 = vunpack.c.l.b16 %v1739
        %v2307 = vunpack.c.h.b16 %v1739
        %v2308 = vunpack.c.l.b16 %v1740
        %v2309 = vunpack.c.h.b16 %v1740
        %v2310 = vunpack.c.l.b16 %v1741
        %v2311 = vunpack.c.l.b16 %v1742
        %v2312 = vunpack.c.h.b16 %v1742
        %v2313 = vunpack.c.l.b16 %v1743
        %v2314 = vunpack.c.h.b16 %v1743
        %v2315 = vunpack.c.l.b16 %v1744
        %v2316 = vunpack.c.h.b16 %v1744
        %v2317 = vunpack.c.l.b16 %v1745
        %v2318 = vunpack.c.h.b16 %v1745
        %v2319 = vunpack.c.l.b16 %v1746
        %v2320 = vunpack.c.h.b16 %v1746
        %v2321 = vunpack.c.l.b16 %v1747
        %v2322 = vunpack.c.l.b16 %v1748
        %v2323 = vunpack.c.h.b16 %v1748
        %v2324 = vunpack.c.l.b16 %v1749
        %v2325 = vunpack.c.h.b16 %v1749
        %v2326 = vunpack.c.l.b16 %v1750
        %v2327 = vunpack.c.h.b16 %v1750
        %v2328 = vunpack.c.l.b16 %v1751
        %v2329 = vunpack.c.h.b16 %v1751
        %v2330 = vunpack.c.l.b16 %v1752
        %v2331 = vunpack.c.h.b16 %v1752
        %v2332 = vunpack.c.l.b16 %v1753
        %v2333 = vunpack.c.l.b16 %v1754
        %v2334 = vunpack.c.h.b16 %v1754
        %v2335 = vunpack.c.l.b16 %v1755
        %v2336 = vunpack.c.h.b16 %v1755
        %v2337 = vunpack.c.l.b16 %v1756
        %v2338 = vunpack.c.h.b16 %v1756
        %v2339 = vunpack.c.l.b16 %v1757
        %v2340 = vunpack.c.h.b16 %v1757
        %v2341 = vunpack.c.l.b16 %v1758
        %v2342 = vunpack.c.h.b16 %v1758
        %v2343 = vunpack.c.l.b16 %v1759
        %v2344 = vunpack.c.l.b16 %v1760
        %v2345 = vunpack.c.h.b16 %v1760
        %v2346 = vunpack.c.l.b16 %v1761
        %v2347 = vunpack.c.h.b16 %v1761
        %v2348 = vunpack.c.l.b16 %v1762
        %v2349 = vunpack.c.h.b16 %v1762
        %v2350 = vunpack.c.l.b16 %v1763
        %v2351 = vunpack.c.h.b16 %v1763
        %v2352 = vunpack.c.l.b16 %v1764
        %v2353 = vunpack.c.h.b16 %v1764
        %v2354 = vunpack.c.l.b16 %v1765
        %v2355 = vunpack.c.l.b16 %v1766
        %v2356 = vunpack.c.h.b16 %v1766
        %v2357 = vunpack.c.l.b16 %v1767
        %v2358 = vunpack.c.h.b16 %v1767
        %v2359 = vunpack.c.l.b16 %v1768
        %v2360 = vunpack.c.h.b16 %v1768
        %v2361 = vunpack.c.l.b16 %v1769
        %v2362 = vunpack.c.h.b16 %v1769
        %v2363 = vunpack.c.l.b16 %v1770
        %v2364 = vunpack.c.h.b16 %v1770
        %v2365 = vunpack.c.l.b16 %v1771
        %v2366 = vunpack.c.l.b16 %v1772
        %v2367 = vunpack.c.h.b16 %v1772
        %v2368 = vunpack.c.l.b16 %v1773
        %v2369 = vunpack.c.h.b16 %v1773
        %v2370 = vunpack.c.l.b16 %v1774
        %v2371 = vunpack.c.h.b16 %v1774
        %v2372 = vunpack.c.l.b16 %v1775
        %v2373 = vunpack.c.h.b16 %v1775
        %v2374 = vunpack.c.l.b16 %v1776
        %v2375 = vunpack.c.h.b16 %v1776
        %v2376 = vunpack.c.l.b16 %v1777
        %v2377 = vpack.c.b16 %v2113, %v2102
        %v2378 = vpack.c.b16 %v2114, %v2103
        %v2379 = vpack.c.b16 %v2115, %v2104
        %v2380 = vpack.c.b16 %v2116, %v2105
        %v2381 = vpack.c.b16 %v2117, %v2106
        %v2382 = vpack.c.b16 %v2118, %v2107
        %v2383 = vpack.c.b16 %v2119, %v2108
        %v2384 = vpack.c.b16 %v2120, %v2109
        %v2385 = vpack.c.b16 %v2121, %v2110
        %v2386 = vpack.c.b16 %v2122, %v2111
        %v2387 = vpack.c.b16 %v2123, %v2112
        %v2388 = vpack.c.b16 %v2135, %v2124
        %v2389 = vpack.c.b16 %v2136, %v2125
        %v2390 = vpack.c.b16 %v2137, %v2126
        %v2391 = vpack.c.b16 %v2138, %v2127
        %v2392 = vpack.c.b16 %v2139, %v2128
        %v2393 = vpack.c.b16 %v2140, %v2129
        %v2394 = vpack.c.b16 %v2141, %v2130
        %v2395 = vpack.c.b16 %v2142, %v2131
        %v2396 = vpack.c.b16 %v2143, %v2132
        %v2397 = vpack.c.b16 %v2144, %v2133
        %v2398 = vpack.c.b16 %v2145, %v2134
        %v2399 = vpack.c.b16 %v2157, %v2146
        %v2400 = vpack.c.b16 %v2158, %v2147
        %v2401 = vpack.c.b16 %v2159, %v2148
        %v2402 = vpack.c.b16 %v2160, %v2149
        %v2403 = vpack.c.b16 %v2161, %v2150
        %v2404 = vpack.c.b16 %v2162, %v2151
        %v2405 = vpack.c.b16 %v2163, %v2152
        %v2406 = vpack.c.b16 %v2164, %v2153
        %v2407 = vpack.c.b16 %v2165, %v2154
        %v2408 = vpack.c.b16 %v2166, %v2155
        %v2409 = vpack.c.b16 %v2167, %v2156
        %v2410 = vpack.c.b16 %v2179, %v2168
        %v2411 = vpack.c.b16 %v2180, %v2169
        %v2412 = vpack.c.b16 %v2181, %v2170
        %v2413 = vpack.c.b16 %v2182, %v2171
        %v2414 = vpack.c.b16 %v2183, %v2172
        %v2415 = vpack.c.b16 %v2184, %v2173
        %v2416 = vpack.c.b16 %v2185, %v2174
        %v2417 = vpack.c.b16 %v2186, %v2175
        %v2418 = vpack.c.b16 %v2187, %v2176
        %v2419 = vpack.c.b16 %v2188, %v2177
        %v2420 = vpack.c.b16 %v2189, %v2178
        %v2421 = vpack.c.b16 %v2201, %v2190
        %v2422 = vpack.c.b16 %v2202, %v2191
        %v2423 = vpack.c.b16 %v2203, %v2192
        %v2424 = vpack.c.b16 %v2204, %v2193
        %v2425 = vpack.c.b16 %v2205, %v2194
        %v2426 = vpack.c.b16 %v2206, %v2195
        %v2427 = vpack.c.b16 %v2207, %v2196
        %v2428 = vpack.c.b16 %v2208, %v2197
        %v2429 = vpack.c.b16 %v2209, %v2198
        %v2430 = vpack.c.b16 %v2210, %v2199
        %v2431 = vpack.c.b16 %v2211, %v2200
        %v2432 = vpack.c.b16 %v2223, %v2212
        %v2433 = vpack.c.b16 %v2224, %v2213
        %v2434 = vpack.c.b16 %v2225, %v2214
        %v2435 = vpack.c.b16 %v2226, %v2215
        %v2436 = vpack.c.b16 %v2227, %v2216
        %v2437 = vpack.c.b16 %v2228, %v2217
        %v2438 = vpack.c.b16 %v2229, %v2218
        %v2439 = vpack.c.b16 %v2230, %v2219
        %v2440 = vpack.c.b16 %v2231, %v2220
        %v2441 = vpack.c.b16 %v2232, %v2221
        %v2442 = vpack.c.b16 %v2233, %v2222
        %v2443 = vpack.c.b16 %v2245, %v2234
        %v2444 = vpack.c.b16 %v2246, %v2235
        %v2445 = vpack.c.b16 %v2247, %v2236
        %v2446 = vpack.c.b16 %v2248, %v2237
        %v2447 = vpack.c.b16 %v2249, %v2238
        %v2448 = vpack.c.b16 %v2250, %v2239
        %v2449 = vpack.c.b16 %v2251, %v2240
        %v2450 = vpack.c.b16 %v2252, %v2241
        %v2451 = vpack.c.b16 %v2253, %v2242
        %v2452 = vpack.c.b16 %v2254, %v2243
        %v2453 = vpack.c.b16 %v2255, %v2244
        %v2454 = vpack.c.b16 %v2267, %v2256
        %v2455 = vpack.c.b16 %v2268, %v2257
        %v2456 = vpack.c.b16 %v2269, %v2258
        %v2457 = vpack.c.b16 %v2270, %v2259
        %v2458 = vpack.c.b16 %v2271, %v2260
        %v2459 = vpack.c.b16 %v2272, %v2261
        %v2460 = vpack.c.b16 %v2273, %v2262
        %v2461 = vpack.c.b16 %v2274, %v2263
        %v2462 = vpack.c.b16 %v2275, %v2264
        %v2463 = vpack.c.b16 %v2276, %v2265
        %v2464 = vpack.c.b16 %v2277, %v2266
        %v2465 = vpack.c.b16 %v2289, %v2278
        %v2466 = vpack.c.b16 %v2290, %v2279
        %v2467 = vpack.c.b16 %v2291, %v2280
        %v2468 = vpack.c.b16 %v2292, %v2281
        %v2469 = vpack.c.b16 %v2293, %v2282
        %v2470 = vpack.c.b16 %v2294, %v2283
        %v2471 = vpack.c.b16 %v2295, %v2284
        %v2472 = vpack.c.b16 %v2296, %v2285
        %v2473 = vpack.c.b16 %v2297, %v2286
        %v2474 = vpack.c.b16 %v2298, %v2287
        %v2475 = vpack.c.b16 %v2299, %v2288
        %v2476 = vpack.c.b16 %v2311, %v2300
        %v2477 = vpack.c.b16 %v2312, %v2301
        %v2478 = vpack.c.b16 %v2313, %v2302
        %v2479 = vpack.c.b16 %v2314, %v2303
        %v2480 = vpack.c.b16 %v2315, %v2304
        %v2481 = vpack.c.b16 %v2316, %v2305
        %v2482 = vpack.c.b16 %v2317, %v2306
        %v2483 = vpack.c.b16 %v2318, %v2307
        %v2484 = vpack.c.b16 %v2319, %v2308
        %v2485 = vpack.c.b16 %v2320, %v2309
        %v2486 = vpack.c.b16 %v2321, %v2310
        %v2487 = vpack.c.b16 %v2333, %v2322
        %v2488 = vpack.c.b16 %v2334, %v2323
        %v2489 = vpack.c.b16 %v2335, %v2324
        %v2490 = vpack.c.b16 %v2336, %v2325
        %v2491 = vpack.c.b16 %v2337, %v2326
        %v2492 = vpack.c.b16 %v2338, %v2327
        %v2493 = vpack.c.b16 %v2339, %v2328
        %v2494 = vpack.c.b16 %v2340, %v2329
        %v2495 = vpack.c.b16 %v2341, %v2330
        %v2496 = vpack.c.b16 %v2342, %v2331
        %v2497 = vpack.c.b16 %v2343, %v2332
        %v2498 = vpack.c.b16 %v2355, %v2344
        %v2499 = vpack.c.b16 %v2356, %v2345
        %v2500 = vpack.c.b16 %v2357, %v2346
        %v2501 = vpack.c.b16 %v2358, %v2347
        %v2502 = vpack.c.b16 %v2359, %v2348
        %v2503 = vpack.c.b16 %v2360, %v2349
        %v2504 = vpack.c.b16 %v2361, %v2350
        %v2505 = vpack.c.b16 %v2362, %v2351
        %v2506 = vpack.c.b16 %v2363, %v2352
        %v2507 = vpack.c.b16 %v2364, %v2353
        %v2508 = vpack.c.b16 %v2365, %v2354
        %v2509 = vpack.c.b16 %v2366, %v2366
        %v2510 = vpack.c.b16 %v2367, %v2367
        %v2511 = vpack.c.b16 %v2368, %v2368
        %v2512 = vpack.c.b16 %v2369, %v2369
        %v2513 = vpack.c.b16 %v2370, %v2370
        %v2514 = vpack.c.b16 %v2371, %v2371
        %v2515 = vpack.c.b16 %v2372, %v2372
        %v2516 = vpack.c.b16 %v2373, %v2373
        %v2517 = vpack.c.b16 %v2374, %v2374
        %v2518 = vpack.c.b16 %v2375, %v2375
        %v2519 = vpack.c.b16 %v2376, %v2376
        %v2824 = vunpack.c.l.b16 %v1778
        %v2825 = vunpack.c.h.b16 %v1778
        %v2826 = vunpack.c.l.b16 %v1779
        %v2827 = vunpack.c.h.b16 %v1779
        %v2828 = vunpack.c.l.b16 %v1780
        %v2829 = vunpack.c.h.b16 %v1780
        %v2830 = vunpack.c.l.b16 %v1781
        %v2831 = vunpack.c.h.b16 %v1781
        %v2832 = vunpack.c.l.b16 %v1782
        %v2833 = vunpack.c.h.b16 %v1782
        %v2834 = vunpack.c.l.b16 %v1783
        %v2835 = vunpack.c.h.b16 %v1783
        %v2836 = vunpack.c.l.b16 %v1784
        %v2837 = vunpack.c.h.b16 %v1784
        %v2838 = vunpack.c.l.b16 %v1785
        %v2839 = vunpack.c.h.b16 %v1785
        %v2840 = vunpack.c.l.b16 %v1786
        %v2841 = vunpack.c.h.b16 %v1786
        %v2842 = vunpack.c.l.b16 %v1787
        %v2843 = vunpack.c.h.b16 %v1787
        %v2844 = vunpack.c.l.b16 %v1788
        %v2845 = vunpack.c.h.b16 %v1788
        %v2846 = vunpack.c.l.b16 %v1789
        %v2847 = vunpack.c.h.b16 %v1789
        %v2848 = vunpack.c.l.b16 %v1790
        %v2849 = vunpack.c.h.b16 %v1790
        %v2850 = vunpack.c.l.b16 %v1791
        %v2851 = vunpack.c.h.b16 %v1791
        %v2852 = vunpack.c.l.b16 %v1792
        %v2853 = vunpack.c.h.b16 %v1792
        %v2854 = vunpack.c.l.b16 %v1793
        %v2855 = vunpack.c.h.b16 %v1793
        %v2856 = vunpack.c.l.b16 %v1794
        %v2857 = vunpack.c.h.b16 %v1794
        %v2858 = vunpack.c.l.b16 %v1795
        %v2859 = vunpack.c.h.b16 %v1795
        %v2860 = vunpack.c.l.b16 %v1796
        %v2861 = vunpack.c.h.b16 %v1796
        %v2862 = vunpack.c.l.b16 %v1797
        %v2863 = vunpack.c.h.b16 %v1797
        %v2864 = vunpack.c.l.b16 %v1798
        %v2865 = vunpack.c.h.b16 %v1798
        %v2866 = vunpack.c.l.b16 %v1799
        %v2867 = vunpack.c.h.b16 %v1799
        %v2868 = vunpack.c.l.b16 %v1800
        %v2869 = vunpack.c.h.b16 %v1800
        %v2870 = vunpack.c.l.b16 %v1801
        %v2871 = vunpack.c.h.b16 %v1801
        %v2872 = vunpack.c.l.b16 %v1802
        %v2873 = vunpack.c.h.b16 %v1802
        %v2874 = vunpack.c.l.b16 %v1803
        %v2875 = vunpack.c.h.b16 %v1803
        %v2876 = vunpack.c.l.b16 %v1804
        %v2877 = vunpack.c.h.b16 %v1804
        %v2878 = vunpack.c.l.b16 %v1805
        %v2879 = vunpack.c.h.b16 %v1805
        %v2880 = vunpack.c.l.b16 %v1806
        %v2881 = vunpack.c.h.b16 %v1806
        %v2882 = vunpack.c.l.b16 %v1807
        %v2883 = vunpack.c.h.b16 %v1807
        %v2884 = vunpack.c.l.b16 %v1808
        %v2885 = vunpack.c.h.b16 %v1808
        %v2886 = vunpack.c.l.b16 %v1809
        %v2887 = vunpack.c.h.b16 %v1809
        %v2888 = vunpack.c.l.b16 %v1810
        %v2889 = vunpack.c.h.b16 %v1810
        %v2890 = vunpack.c.l.b16 %v1811
        %v2891 = vunpack.c.h.b16 %v1811
        %v2892 = vunpack.c.l.b16 %v1812
        %v2893 = vunpack.c.h.b16 %v1812
        %v2894 = vunpack.c.l.b16 %v1813
        %v2895 = vunpack.c.h.b16 %v1813
        %v2896 = vunpack.c.l.b16 %v1814
        %v2897 = vunpack.c.h.b16 %v1814
        %v2898 = vunpack.c.l.b16 %v1815
        %v2899 = vunpack.c.h.b16 %v1815
        %v2900 = vunpack.c.l.b16 %v1816
        %v2901 = vunpack.c.h.b16 %v1816
        %v2902 = vunpack.c.l.b16 %v1817
        %v2903 = vunpack.c.h.b16 %v1817
        %v2904 = vunpack.c.l.b16 %v1818
        %v2905 = vunpack.c.h.b16 %v1818
        %v2906 = vunpack.c.l.b16 %v1819
        %v2907 = vunpack.c.h.b16 %v1819
        %v2908 = vunpack.c.l.b16 %v1820
        %v2909 = vunpack.c.h.b16 %v1820
        %v2910 = vunpack.c.l.b16 %v1821
        %v2911 = vunpack.c.h.b16 %v1821
        %v2912 = vunpack.c.l.b16 %v1822
        %v2913 = vunpack.c.h.b16 %v1822
        %v2914 = vunpack.c.l.b16 %v1823
        %v2915 = vunpack.c.h.b16 %v1823
        %v2916 = vunpack.c.l.b16 %v1824
        %v2917 = vunpack.c.h.b16 %v1824
        %v2918 = vunpack.c.l.b16 %v1825
        %v2919 = vunpack.c.h.b16 %v1825
        %v2920 = vunpack.c.l.b16 %v1826
        %v2921 = vunpack.c.h.b16 %v1826
        %v2922 = vunpack.c.l.b16 %v1827
        %v2923 = vunpack.c.h.b16 %v1827
        %v2924 = vunpack.c.l.b16 %v1828
        %v2925 = vunpack.c.h.b16 %v1828
        %v2926 = vunpack.c.l.b16 %v1829
        %v2927 = vunpack.c.h.b16 %v1829
        %v2928 = vunpack.c.l.b16 %v1830
        %v2929 = vunpack.c.h.b16 %v1830
        %v2930 = vunpack.c.l.b16 %v1831
        %v2931 = vunpack.c.h.b16 %v1831
        %v2932 = vunpack.c.l.b16 %v1832
        %v2933 = vunpack.c.h.b16 %v1832
        %v2934 = vunpack.c.l.b16 %v1833
        %v2935 = vunpack.c.h.b16 %v1833
        %v2936 = vunpack.c.l.b16 %v1834
        %v2937 = vunpack.c.h.b16 %v1834
        %v2938 = vunpack.c.l.b16 %v1835
        %v2939 = vunpack.c.h.b16 %v1835
        %v2940 = vunpack.c.l.b16 %v1836
        %v2941 = vunpack.c.h.b16 %v1836
        %v2942 = vunpack.c.l.b16 %v1837
        %v2943 = vunpack.c.h.b16 %v1837
        %v2944 = vunpack.c.l.b16 %v1838
        %v2945 = vunpack.c.h.b16 %v1838
        %v2946 = vunpack.c.l.b16 %v1839
        %v2947 = vunpack.c.h.b16 %v1839
        %v2948 = vunpack.c.l.b16 %v1840
        %v2949 = vunpack.c.h.b16 %v1840
        %v2950 = vunpack.c.l.b16 %v1841
        %v2951 = vunpack.c.h.b16 %v1841
        %v2952 = vunpack.c.l.b16 %v1842
        %v2953 = vunpack.c.h.b16 %v1842
        %v2954 = vunpack.c.l.b16 %v1843
        %v2955 = vunpack.c.h.b16 %v1843
        %v2956 = vunpack.c.l.b16 %v1844
        %v2957 = vunpack.c.h.b16 %v1844
        %v2958 = vunpack.c.l.b16 %v1845
        %v2959 = vunpack.c.h.b16 %v1845
        %v2960 = vunpack.c.l.b16 %v1846
        %v2961 = vunpack.c.h.b16 %v1846
        %v2962 = vunpack.c.l.b16 %v1847
        %v2963 = vunpack.c.h.b16 %v1847
        %v2964 = vunpack.c.l.b16 %v1848
        %v2965 = vunpack.c.h.b16 %v1848
        %v2966 = vunpack.c.l.b16 %v1849
        %v2967 = vunpack.c.h.b16 %v1849
        %v2968 = vunpack.c.l.b16 %v1850
        %v2969 = vunpack.c.h.b16 %v1850
        %v2970 = vunpack.c.l.b16 %v1851
        %v2971 = vunpack.c.h.b16 %v1851
        %v2972 = vunpack.c.l.b16 %v1852
        %v2973 = vunpack.c.h.b16 %v1852
        %v2974 = vunpack.c.l.b16 %v1853
        %v2975 = vunpack.c.h.b16 %v1853
        %v2976 = vunpack.c.l.b16 %v1854
        %v2977 = vunpack.c.h.b16 %v1854
        %v2978 = vunpack.c.l.b16 %v1855
        %v2979 = vunpack.c.h.b16 %v1855
        %v2980 = vunpack.c.l.b16 %v1856
        %v2981 = vunpack.c.h.b16 %v1856
        %v2982 = vunpack.c.l.b16 %v1857
        %v2983 = vunpack.c.h.b16 %v1857
        %v2984 = vunpack.c.l.b16 %v1858
        %v2985 = vunpack.c.h.b16 %v1858
        %v2986 = vunpack.c.l.b16 %v1859
        %v2987 = vunpack.c.h.b16 %v1859
        %v2988 = vunpack.c.l.b16 %v1860
        %v2989 = vunpack.c.h.b16 %v1860
        %v2990 = vunpack.c.l.b16 %v1861
        %v2991 = vunpack.c.h.b16 %v1861
        %v2992 = vunpack.c.l.b16 %v1862
        %v2993 = vunpack.c.h.b16 %v1862
        %v2994 = vunpack.c.l.b16 %v1863
        %v2995 = vunpack.c.h.b16 %v1863
        %v2996 = vunpack.c.l.b16 %v1864
        %v2997 = vunpack.c.h.b16 %v1864
        %v2998 = vunpack.c.l.b16 %v1865
        %v2999 = vunpack.c.h.b16 %v1865
        %v3000 = vunpack.c.l.b16 %v1866
        %v3001 = vunpack.c.h.b16 %v1866
        %v3002 = vunpack.c.l.b16 %v1867
        %v3003 = vunpack.c.h.b16 %v1867
        %v3004 = vunpack.c.l.b16 %v1868
        %v3005 = vunpack.c.h.b16 %v1868
        %v3006 = vunpack.c.l.b16 %v1869
        %v3007 = vunpack.c.h.b16 %v1869
        %v3008 = vunpack.c.l.b16 %v1870
        %v3009 = vunpack.c.h.b16 %v1870
        %v3010 = vunpack.c.l.b16 %v1871
        %v3011 = vunpack.c.h.b16 %v1871
        %v3012 = vunpack.c.l.b16 %v1872
        %v3013 = vunpack.c.h.b16 %v1872
        %v3014 = vunpack.c.l.b16 %v1873
        %v3015 = vunpack.c.h.b16 %v1873
        %v3016 = vunpack.c.l.b16 %v1874
        %v3017 = vunpack.c.h.b16 %v1874
        %v3018 = vunpack.c.l.b16 %v1875
        %v3019 = vunpack.c.h.b16 %v1875
        %v3020 = vunpack.c.l.b16 %v1876
        %v3021 = vunpack.c.h.b16 %v1876
        %v3022 = vunpack.c.l.b16 %v1877
        %v3023 = vunpack.c.h.b16 %v1877
        %v3024 = vunpack.c.l.b16 %v1878
        %v3025 = vunpack.c.h.b16 %v1878
        %v3026 = vunpack.c.l.b16 %v1879
        %v3027 = vunpack.c.h.b16 %v1879
        %v3028 = vunpack.c.l.b16 %v1880
        %v3029 = vunpack.c.h.b16 %v1880
        %v3030 = vunpack.c.l.b16 %v1881
        %v3031 = vunpack.c.h.b16 %v1881
        %v3032 = vunpack.c.l.b16 %v1882
        %v3033 = vunpack.c.h.b16 %v1882
        %v3034 = vunpack.c.l.b16 %v1883
        %v3035 = vunpack.c.h.b16 %v1883
        %v3036 = vunpack.c.l.b16 %v1884
        %v3037 = vunpack.c.h.b16 %v1884
        %v3038 = vunpack.c.l.b16 %v1885
        %v3039 = vunpack.c.h.b16 %v1885
        %v3040 = vunpack.c.l.b16 %v1886
        %v3041 = vunpack.c.h.b16 %v1886
        %v3042 = vunpack.c.l.b16 %v1887
        %v3043 = vunpack.c.h.b16 %v1887
        %v3044 = vunpack.c.l.b16 %v1888
        %v3045 = vunpack.c.h.b16 %v1888
        %v3046 = vunpack.c.l.b16 %v1889
        %v3047 = vunpack.c.h.b16 %v1889
        %v3048 = vunpack.c.l.b16 %v1890
        %v3049 = vunpack.c.h.b16 %v1890
        %v3050 = vunpack.c.l.b16 %v1891
        %v3051 = vunpack.c.h.b16 %v1891
        %v3052 = vunpack.c.l.b16 %v1892
        %v3053 = vunpack.c.h.b16 %v1892
        %v3054 = vunpack.c.l.b16 %v1893
        %v3055 = vunpack.c.h.b16 %v1893
        %v3056 = vunpack.c.l.b16 %v1894
        %v3057 = vunpack.c.h.b16 %v1894
        %v3058 = vunpack.c.l.b16 %v1895
        %v3059 = vunpack.c.h.b16 %v1895
        %v3060 = vunpack.c.l.b16 %v1896
        %v3061 = vunpack.c.h.b16 %v1896
        %v3062 = vunpack.c.l.b16 %v1897
        %v3063 = vunpack.c.h.b16 %v1897
        %v3064 = vunpack.c.l.b16 %v1898
        %v3065 = vunpack.c.h.b16 %v1898
        %v3066 = vunpack.c.l.b16 %v1899
        %v3067 = vunpack.c.h.b16 %v1899
        %v3068 = vunpack.c.l.b16 %v1900
        %v3069 = vunpack.c.h.b16 %v1900
        %v3070 = vunpack.c.l.b16 %v1901
        %v3071 = vunpack.c.h.b16 %v1901
        %v3072 = vunpack.c.l.b16 %v1902
        %v3073 = vunpack.c.h.b16 %v1902
        %v3074 = vunpack.c.l.b16 %v1903
        %v3075 = vunpack.c.h.b16 %v1903
        %v3076 = vunpack.c.l.b16 %v1904
        %v3077 = vunpack.c.h.b16 %v1904
        %v3078 = vunpack.c.l.b16 %v1905
        %v3079 = vunpack.c.h.b16 %v1905
        %v3080 = vunpack.c.l.b16 %v1906
        %v3081 = vunpack.c.h.b16 %v1906
        %v3082 = vunpack.c.l.b16 %v1907
        %v3083 = vunpack.c.h.b16 %v1907
        %v3084 = vunpack.c.l.b16 %v1908
        %v3085 = vunpack.c.h.b16 %v1908
        %v3086 = vunpack.c.l.b16 %v1909
        %v3087 = vunpack.c.h.b16 %v1909
        %v3088 = vunpack.c.l.b16 %v1910
        %v3089 = vunpack.c.h.b16 %v1910
        %v3090 = vunpack.c.l.b16 %v1911
        %v3091 = vunpack.c.h.b16 %v1911
        %v3092 = vunpack.c.l.b16 %v1912
        %v3093 = vunpack.c.h.b16 %v1912
        %v3094 = vunpack.c.l.b16 %v1913
        %v3095 = vunpack.c.h.b16 %v1913
        %v3096 = vunpack.c.l.b16 %v1914
        %v3097 = vunpack.c.h.b16 %v1914
        %v3098 = vunpack.c.l.b16 %v1915
        %v3099 = vunpack.c.h.b16 %v1915
        %v3100 = vunpack.c.l.b16 %v1916
        %v3101 = vunpack.c.h.b16 %v1916
        %v3102 = vunpack.c.l.b16 %v1917
        %v3103 = vunpack.c.h.b16 %v1917
        %v3104 = vunpack.c.l.b16 %v1918
        %v3105 = vunpack.c.h.b16 %v1918
        %v3106 = vunpack.c.l.b16 %v1919
        %v3107 = vunpack.c.h.b16 %v1919
        %v3108 = vunpack.c.l.b16 %v1920
        %v3109 = vunpack.c.h.b16 %v1920
        %v3110 = vunpack.c.l.b16 %v1921
        %v3111 = vunpack.c.h.b16 %v1921
        %v3112 = vunpack.c.l.b16 %v1922
        %v3113 = vunpack.c.h.b16 %v1922
        %v3114 = vunpack.c.l.b16 %v1923
        %v3115 = vunpack.c.h.b16 %v1923
        %v3116 = vunpack.c.l.b16 %v1924
        %v3117 = vunpack.c.h.b16 %v1924
        %v3118 = vunpack.c.l.b16 %v1925
        %v3119 = vunpack.c.h.b16 %v1925
        %v3120 = vunpack.c.l.b16 %v1926
        %v3121 = vunpack.c.h.b16 %v1926
        %v3122 = vunpack.c.l.b16 %v1927
        %v3123 = vunpack.c.h.b16 %v1927
        %v3124 = vunpack.c.l.b16 %v1928
        %v3125 = vunpack.c.h.b16 %v1928
        %v3126 = vunpack.c.l.b16 %v1929
        %v3127 = vunpack.c.h.b16 %v1929
        %v3128 = vunpack.c.l.b16 %v1930
        %v3129 = vunpack.c.h.b16 %v1930
        %v3130 = vunpack.c.l.b16 %v1931
        %v3131 = vunpack.c.h.b16 %v1931
        %v3132 = vunpack.c.l.b16 %v1932
        %v3133 = vunpack.c.h.b16 %v1932
        %v3134 = vunpack.c.l.b16 %v1933
        %v3135 = vunpack.c.h.b16 %v1933
        %v3136 = vunpack.c.l.b16 %v1934
        %v3137 = vunpack.c.h.b16 %v1934
        %v3138 = vunpack.c.l.b16 %v1935
        %v3139 = vunpack.c.h.b16 %v1935
        %v3140 = vunpack.c.l.b16 %v1936
        %v3141 = vunpack.c.h.b16 %v1936
        %v3142 = vunpack.c.l.b16 %v1937
        %v3143 = vunpack.c.h.b16 %v1937
        %v3144 = vunpack.c.l.b16 %v1938
        %v3145 = vunpack.c.h.b16 %v1938
        %v3146 = vunpack.c.l.b16 %v1939
        %v3147 = vunpack.c.h.b16 %v1939
        %v3148 = vunpack.c.l.b16 %v1940
        %v3149 = vunpack.c.h.b16 %v1940
        %v3150 = vunpack.c.l.b16 %v1941
        %v3151 = vunpack.c.h.b16 %v1941
        %v3152 = vunpack.c.l.b16 %v1942
        %v3153 = vunpack.c.h.b16 %v1942
        %v3154 = vunpack.c.l.b16 %v1943
        %v3155 = vunpack.c.h.b16 %v1943
        %v3156 = vunpack.c.l.b16 %v1944
        %v3157 = vunpack.c.h.b16 %v1944
        %v3158 = vunpack.c.l.b16 %v1945
        %v3159 = vunpack.c.h.b16 %v1945
        %v3160 = vunpack.c.l.b16 %v1946
        %v3161 = vunpack.c.h.b16 %v1946
        %v3162 = vunpack.c.l.b16 %v1947
        %v3163 = vunpack.c.h.b16 %v1947
        %v3164 = vunpack.c.l.b16 %v1948
        %v3165 = vunpack.c.h.b16 %v1948
        %v3166 = vunpack.c.l.b16 %v1949
        %v3167 = vunpack.c.h.b16 %v1949
        %v3168 = vunpack.c.l.b16 %v1950
        %v3169 = vunpack.c.h.b16 %v1950
        %v3170 = vunpack.c.l.b16 %v1951
        %v3171 = vunpack.c.h.b16 %v1951
        %v3172 = vpack.c.b16 %v2826, %v2824
        %v3173 = vpack.c.b16 %v2827, %v2825
        %v3174 = vpack.c.b16 %v2830, %v2828
        %v3175 = vpack.c.b16 %v2831, %v2829
        %v3176 = vpack.c.b16 %v2834, %v2832
        %v3177 = vpack.c.b16 %v2835, %v2833
        %v3178 = vpack.c.b16 %v2838, %v2836
        %v3179 = vpack.c.b16 %v2839, %v2837
        %v3180 = vpack.c.b16 %v2842, %v2840
        %v3181 = vpack.c.b16 %v2843, %v2841
        %v3182 = vpack.c.b16 %v2846, %v2844
        %v3183 = vpack.c.b16 %v2847, %v2845
        %v3184 = vpack.c.b16 %v2850, %v2848
        %v3185 = vpack.c.b16 %v2851, %v2849
        %v3186 = vpack.c.b16 %v2854, %v2852
        %v3187 = vpack.c.b16 %v2855, %v2853
        %v3188 = vpack.c.b16 %v2858, %v2856
        %v3189 = vpack.c.b16 %v2859, %v2857
        %v3190 = vpack.c.b16 %v2862, %v2860
        %v3191 = vpack.c.b16 %v2863, %v2861
        %v3192 = vpack.c.b16 %v2866, %v2864
        %v3193 = vpack.c.b16 %v2867, %v2865
        %v3194 = vpack.c.b16 %v2870, %v2868
        %v3195 = vpack.c.b16 %v2871, %v2869
        %v3196 = vpack.c.b16 %v2874, %v2872
        %v3197 = vpack.c.b16 %v2875, %v2873
        %v3198 = vpack.c.b16 %v2878, %v2876
        %v3199 = vpack.c.b16 %v2879, %v2877
        %v3200 = vpack.c.b16 %v2882, %v2880
        %v3201 = vpack.c.b16 %v2883, %v2881
        %v3202 = vpack.c.b16 %v2886, %v2884
        %v3203 = vpack.c.b16 %v2887, %v2885
        %v3204 = vpack.c.b16 %v2890, %v2888
        %v3205 = vpack.c.b16 %v2891, %v2889
        %v3206 = vpack.c.b16 %v2894, %v2892
        %v3207 = vpack.c.b16 %v2895, %v2893
        %v3208 = vpack.c.b16 %v2898, %v2896
        %v3209 = vpack.c.b16 %v2899, %v2897
        %v3210 = vpack.c.b16 %v2902, %v2900
        %v3211 = vpack.c.b16 %v2903, %v2901
        %v3212 = vpack.c.b16 %v2906, %v2904
        %v3213 = vpack.c.b16 %v2907, %v2905
        %v3214 = vpack.c.b16 %v2910, %v2908
        %v3215 = vpack.c.b16 %v2911, %v2909
        %v3216 = vpack.c.b16 %v2914, %v2912
        %v3217 = vpack.c.b16 %v2915, %v2913
        %v3218 = vpack.c.b16 %v2918, %v2916
        %v3219 = vpack.c.b16 %v2919, %v2917
        %v3220 = vpack.c.b16 %v2922, %v2920
        %v3221 = vpack.c.b16 %v2923, %v2921
        %v3222 = vpack.c.b16 %v2926, %v2924
        %v3223 = vpack.c.b16 %v2927, %v2925
        %v3224 = vpack.c.b16 %v2930, %v2928
        %v3225 = vpack.c.b16 %v2931, %v2929
        %v3226 = vpack.c.b16 %v2934, %v2932
        %v3227 = vpack.c.b16 %v2935, %v2933
        %v3228 = vpack.c.b16 %v2938, %v2936
        %v3229 = vpack.c.b16 %v2939, %v2937
        %v3230 = vpack.c.b16 %v2942, %v2940
        %v3231 = vpack.c.b16 %v2943, %v2941
        %v3232 = vpack.c.b16 %v2946, %v2944
        %v3233 = vpack.c.b16 %v2947, %v2945
        %v3234 = vpack.c.b16 %v2950, %v2948
        %v3235 = vpack.c.b16 %v2951, %v2949
        %v3236 = vpack.c.b16 %v2954, %v2952
        %v3237 = vpack.c.b16 %v2955, %v2953
        %v3238 = vpack.c.b16 %v2958, %v2956
        %v3239 = vpack.c.b16 %v2959, %v2957
        %v3240 = vpack.c.b16 %v2962, %v2960
        %v3241 = vpack.c.b16 %v2963, %v2961
        %v3242 = vpack.c.b16 %v2966, %v2964
        %v3243 = vpack.c.b16 %v2967, %v2965
        %v3244 = vpack.c.b16 %v2970, %v2968
        %v3245 = vpack.c.b16 %v2971, %v2969
        %v3246 = vpack.c.b16 %v2974, %v2972
        %v3247 = vpack.c.b16 %v2975, %v2973
        %v3248 = vpack.c.b16 %v2978, %v2976
        %v3249 = vpack.c.b16 %v2979, %v2977
        %v3250 = vpack.c.b16 %v2982, %v2980
        %v3251 = vpack.c.b16 %v2983, %v2981
        %v3252 = vpack.c.b16 %v2986, %v2984
        %v3253 = vpack.c.b16 %v2987, %v2985
        %v3254 = vpack.c.b16 %v2990, %v2988
        %v3255 = vpack.c.b16 %v2991, %v2989
        %v3256 = vpack.c.b16 %v2994, %v2992
        %v3257 = vpack.c.b16 %v2995, %v2993
        %v3258 = vpack.c.b16 %v2998, %v2996
        %v3259 = vpack.c.b16 %v2999, %v2997
        %v3260 = vpack.c.b16 %v3002, %v3000
        %v3261 = vpack.c.b16 %v3003, %v3001
        %v3262 = vpack.c.b16 %v3006, %v3004
        %v3263 = vpack.c.b16 %v3007, %v3005
        %v3264 = vpack.c.b16 %v3010, %v3008
        %v3265 = vpack.c.b16 %v3011, %v3009
        %v3266 = vpack.c.b16 %v3014, %v3012
        %v3267 = vpack.c.b16 %v3015, %v3013
        %v3268 = vpack.c.b16 %v3018, %v3016
        %v3269 = vpack.c.b16 %v3019, %v3017
        %v3270 = vpack.c.b16 %v3022, %v3020
        %v3271 = vpack.c.b16 %v3023, %v3021
        %v3272 = vpack.c.b16 %v3026, %v3024
        %v3273 = vpack.c.b16 %v3027, %v3025
        %v3274 = vpack.c.b16 %v3030, %v3028
        %v3275 = vpack.c.b16 %v3031, %v3029
        %v3276 = vpack.c.b16 %v3034, %v3032
        %v3277 = vpack.c.b16 %v3035, %v3033
        %v3278 = vpack.c.b16 %v3038, %v3036
        %v3279 = vpack.c.b16 %v3039, %v3037
        %v3280 = vpack.c.b16 %v3042, %v3040
        %v3281 = vpack.c.b16 %v3043, %v3041
        %v3282 = vpack.c.b16 %v3046, %v3044
        %v3283 = vpack.c.b16 %v3047, %v3045
        %v3284 = vpack.c.b16 %v3050, %v3048
        %v3285 = vpack.c.b16 %v3051, %v3049
        %v3286 = vpack.c.b16 %v3054, %v3052
        %v3287 = vpack.c.b16 %v3055, %v3053
        %v3288 = vpack.c.b16 %v3058, %v3056
        %v3289 = vpack.c.b16 %v3059, %v3057
        %v3290 = vpack.c.b16 %v3062, %v3060
        %v3291 = vpack.c.b16 %v3063, %v3061
        %v3292 = vpack.c.b16 %v3066, %v3064
        %v3293 = vpack.c.b16 %v3067, %v3065
        %v3294 = vpack.c.b16 %v3070, %v3068
        %v3295 = vpack.c.b16 %v3071, %v3069
        %v3296 = vpack.c.b16 %v3074, %v3072
        %v3297 = vpack.c.b16 %v3075, %v3073
        %v3298 = vpack.c.b16 %v3078, %v3076
        %v3299 = vpack.c.b16 %v3079, %v3077
        %v3300 = vpack.c.b16 %v3082, %v3080
        %v3301 = vpack.c.b16 %v3083, %v3081
        %v3302 = vpack.c.b16 %v3086, %v3084
        %v3303 = vpack.c.b16 %v3087, %v3085
        %v3304 = vpack.c.b16 %v3090, %v3088
        %v3305 = vpack.c.b16 %v3091, %v3089
        %v3306 = vpack.c.b16 %v3094, %v3092
        %v3307 = vpack.c.b16 %v3095, %v3093
        %v3308 = vpack.c.b16 %v3098, %v3096
        %v3309 = vpack.c.b16 %v3099, %v3097
        %v3310 = vpack.c.b16 %v3102, %v3100
        %v3311 = vpack.c.b16 %v3103, %v3101
        %v3312 = vpack.c.b16 %v3106, %v3104
        %v3313 = vpack.c.b16 %v3107, %v3105
        %v3314 = vpack.c.b16 %v3110, %v3108
        %v3315 = vpack.c.b16 %v3111, %v3109
        %v3316 = vpack.c.b16 %v3114, %v3112
        %v3317 = vpack.c.b16 %v3115, %v3113
        %v3318 = vpack.c.b16 %v3118, %v3116
        %v3319 = vpack.c.b16 %v3119, %v3117
        %v3320 = vpack.c.b16 %v3122, %v3120
        %v3321 = vpack.c.b16 %v3123, %v3121
        %v3322 = vpack.c.b16 %v3126, %v3124
        %v3323 = vpack.c.b16 %v3127, %v3125
        %v3324 = vpack.c.b16 %v3130, %v3128
        %v3325 = vpack.c.b16 %v3131, %v3129
        %v3326 = vpack.c.b16 %v3134, %v3132
        %v3327 = vpack.c.b16 %v3135, %v3133
        %v3328 = vpack.c.b16 %v3138, %v3136
        %v3329 = vpack.c.b16 %v3139, %v3137
        %v3330 = vpack.c.b16 %v3142, %v3140
        %v3331 = vpack.c.b16 %v3143, %v3141
        %v3332 = vpack.c.b16 %v3146, %v3144
        %v3333 = vpack.c.b16 %v3147, %v3145
        %v3334 = vpack.c.b16 %v3150, %v3148
        %v3335 = vpack.c.b16 %v3151, %v3149
        %v3336 = vpack.c.b16 %v3154, %v3152
        %v3337 = vpack.c.b16 %v3155, %v3153
        %v3338 = vpack.c.b16 %v3158, %v3156
        %v3339 = vpack.c.b16 %v3159, %v3157
        %v3340 = vpack.c.b16 %v3162, %v3160
        %v3341 = vpack.c.b16 %v3163, %v3161
        %v3342 = vpack.c.b16 %v3166, %v3164
        %v3343 = vpack.c.b16 %v3167, %v3165
        %v3344 = vpack.c.b16 %v3170, %v3168
        %v3345 = vpack.c.b16 %v3171, %v3169
        %vm3520 = vcmask 916480
        %v3522 = vsel %vm3520, %v2387, 0
        %v3525 = vsel %vm3520, %v2398, 0
        %v3528 = vsel %vm3520, %v2409, 0
        %v3531 = vsel %vm3520, %v2420, 0
        %v3534 = vsel %vm3520, %v2431, 0
        %v3537 = vsel %vm3520, %v2442, 0
        %v3540 = vsel %vm3520, %v2453, 0
        %v3543 = vsel %vm3520, %v2464, 0
        %v3546 = vsel %vm3520, %v2475, 0
        %v3549 = vsel %vm3520, %v2486, 0
        %v3552 = vsel %vm3520, %v2497, 0
        %v3555 = vsel %vm3520, %v2508, 0
        %v3558 = vsel %vm3520, %v2519, 0
        %3560 = vmatpush.bf16.msra.mxu0 %v3186
        %3561 = vmatpush.bf16.msra.mxu0 %v3184
        %3562 = vmatpush.bf16.msra.mxu0 %v3182
        %3563 = vmatpush.bf16.msra.mxu0 %v3180
        %3564 = vmatpush.bf16.msra.mxu0 %v3178
        %3565 = vmatpush.bf16.msra.mxu0 %v3176
        %3566 = vmatpush.bf16.msra.mxu0 %v3174
        %3567 = vmatpush.bf16.msra.mxu0 %v3172
        %3568 = vmatmul.bf16.gmra.mxu0 %v2377
        %v3569 = vpop.f32.mrf.mxu0
        %v3570 = vadd.f32 0.0, %v3569
        %v3571 = vpop.f32.mrf.mxu0
        %v3572 = vadd.f32 0.0, %v3571
        %3573 = vmatmul.bf16.gmra.mxu0 %v2388
        %v3574 = vpop.f32.mrf.mxu0
        %v3575 = vadd.f32 0.0, %v3574
        %v3576 = vpop.f32.mrf.mxu0
        %v3577 = vadd.f32 0.0, %v3576
        %3578 = vmatmul.bf16.gmra.mxu0 %v2399
        %v3579 = vpop.f32.mrf.mxu0
        %v3580 = vadd.f32 0.0, %v3579
        %v3581 = vpop.f32.mrf.mxu0
        %v3582 = vadd.f32 0.0, %v3581
        %3583 = vmatmul.bf16.gmra.mxu0 %v2410
        %v3584 = vpop.f32.mrf.mxu0
        %v3585 = vadd.f32 0.0, %v3584
        %v3586 = vpop.f32.mrf.mxu0
        %v3587 = vadd.f32 0.0, %v3586
        %3588 = vmatmul.bf16.gmra.mxu0 %v2421
        %v3589 = vpop.f32.mrf.mxu0
        %v3590 = vadd.f32 0.0, %v3589
        %v3591 = vpop.f32.mrf.mxu0
        %v3592 = vadd.f32 0.0, %v3591
        %3593 = vmatmul.bf16.gmra.mxu0 %v2432
        %v3594 = vpop.f32.mrf.mxu0
        %v3595 = vadd.f32 0.0, %v3594
        %v3596 = vpop.f32.mrf.mxu0
        %v3597 = vadd.f32 0.0, %v3596
        %3598 = vmatmul.bf16.gmra.mxu0 %v2443
        %v3599 = vpop.f32.mrf.mxu0
        %v3600 = vadd.f32 0.0, %v3599
        %v3601 = vpop.f32.mrf.mxu0
        %v3602 = vadd.f32 0.0, %v3601
        %3603 = vmatmul.bf16.gmra.mxu0 %v2454
        %v3604 = vpop.f32.mrf.mxu0
        %v3605 = vadd.f32 0.0, %v3604
        %v3606 = vpop.f32.mrf.mxu0
        %v3607 = vadd.f32 0.0, %v3606
        %3608 = vmatmul.bf16.gmra.mxu0 %v2465
        %v3609 = vpop.f32.mrf.mxu0
        %v3610 = vadd.f32 0.0, %v3609
        %v3611 = vpop.f32.mrf.mxu0
        %v3612 = vadd.f32 0.0, %v3611
        %3613 = vmatmul.bf16.gmra.mxu0 %v2476
        %v3614 = vpop.f32.mrf.mxu0
        %v3615 = vadd.f32 0.0, %v3614
        %v3616 = vpop.f32.mrf.mxu0
        %v3617 = vadd.f32 0.0, %v3616
        %3618 = vmatmul.bf16.gmra.mxu0 %v2487
        %v3619 = vpop.f32.mrf.mxu0
        %v3620 = vadd.f32 0.0, %v3619
        %v3621 = vpop.f32.mrf.mxu0
        %v3622 = vadd.f32 0.0, %v3621
        %3623 = vmatmul.bf16.gmra.mxu0 %v2498
        %v3624 = vpop.f32.mrf.mxu0
        %v3625 = vadd.f32 0.0, %v3624
        %v3626 = vpop.f32.mrf.mxu0
        %v3627 = vadd.f32 0.0, %v3626
        %3628 = vmatmul.bf16.gmra.mxu0 %v2509
        %v3629 = vpop.f32.mrf.mxu0
        %v3630 = vadd.f32 0.0, %v3629
        %v3631 = vpop.f32.mrf.mxu0
        %3632 = vdwg.mxu0
        %3633 = vmatpush.bf16.msra.mxu0 %v3202
        %3634 = vmatpush.bf16.msra.mxu0 %v3200
        %3635 = vmatpush.bf16.msra.mxu0 %v3198
        %3636 = vmatpush.bf16.msra.mxu0 %v3196
        %3637 = vmatpush.bf16.msra.mxu0 %v3194
        %3638 = vmatpush.bf16.msra.mxu0 %v3192
        %3639 = vmatpush.bf16.msra.mxu0 %v3190
        %3640 = vmatpush.bf16.msra.mxu0 %v3188
        %3641 = vmatmul.bf16.gmra.mxu0 %v2378
        %v3642 = vpop.f32.mrf.mxu0
        %v3643 = vadd.f32 %v3570, %v3642
        %v3644 = vpop.f32.mrf.mxu0
        %v3645 = vadd.f32 %v3572, %v3644
        %3646 = vmatmul.bf16.gmra.mxu0 %v2389
        %v3647 = vpop.f32.mrf.mxu0
        %v3648 = vadd.f32 %v3575, %v3647
        %v3649 = vpop.f32.mrf.mxu0
        %v3650 = vadd.f32 %v3577, %v3649
        %3651 = vmatmul.bf16.gmra.mxu0 %v2400
        %v3652 = vpop.f32.mrf.mxu0
        %v3653 = vadd.f32 %v3580, %v3652
        %v3654 = vpop.f32.mrf.mxu0
        %v3655 = vadd.f32 %v3582, %v3654
        %3656 = vmatmul.bf16.gmra.mxu0 %v2411
        %v3657 = vpop.f32.mrf.mxu0
        %v3658 = vadd.f32 %v3585, %v3657
        %v3659 = vpop.f32.mrf.mxu0
        %v3660 = vadd.f32 %v3587, %v3659
        %3661 = vmatmul.bf16.gmra.mxu0 %v2422
        %v3662 = vpop.f32.mrf.mxu0
        %v3663 = vadd.f32 %v3590, %v3662
        %v3664 = vpop.f32.mrf.mxu0
        %v3665 = vadd.f32 %v3592, %v3664
        %3666 = vmatmul.bf16.gmra.mxu0 %v2433
        %v3667 = vpop.f32.mrf.mxu0
        %v3668 = vadd.f32 %v3595, %v3667
        %v3669 = vpop.f32.mrf.mxu0
        %v3670 = vadd.f32 %v3597, %v3669
        %3671 = vmatmul.bf16.gmra.mxu0 %v2444
        %v3672 = vpop.f32.mrf.mxu0
        %v3673 = vadd.f32 %v3600, %v3672
        %v3674 = vpop.f32.mrf.mxu0
        %v3675 = vadd.f32 %v3602, %v3674
        %3676 = vmatmul.bf16.gmra.mxu0 %v2455
        %v3677 = vpop.f32.mrf.mxu0
        %v3678 = vadd.f32 %v3605, %v3677
        %v3679 = vpop.f32.mrf.mxu0
        %v3680 = vadd.f32 %v3607, %v3679
        %3681 = vmatmul.bf16.gmra.mxu0 %v2466
        %v3682 = vpop.f32.mrf.mxu0
        %v3683 = vadd.f32 %v3610, %v3682
        %v3684 = vpop.f32.mrf.mxu0
        %v3685 = vadd.f32 %v3612, %v3684
        %3686 = vmatmul.bf16.gmra.mxu0 %v2477
        %v3687 = vpop.f32.mrf.mxu0
        %v3688 = vadd.f32 %v3615, %v3687
        %v3689 = vpop.f32.mrf.mxu0
        %v3690 = vadd.f32 %v3617, %v3689
        %3691 = vmatmul.bf16.gmra.mxu0 %v2488
        %v3692 = vpop.f32.mrf.mxu0
        %v3693 = vadd.f32 %v3620, %v3692
        %v3694 = vpop.f32.mrf.mxu0
        %v3695 = vadd.f32 %v3622, %v3694
        %3696 = vmatmul.bf16.gmra.mxu0 %v2499
        %v3697 = vpop.f32.mrf.mxu0
        %v3698 = vadd.f32 %v3625, %v3697
        %v3699 = vpop.f32.mrf.mxu0
        %v3700 = vadd.f32 %v3627, %v3699
        %3701 = vmatmul.bf16.gmra.mxu0 %v2510
        %v3702 = vpop.f32.mrf.mxu0
        %v3703 = vadd.f32 %v3630, %v3702
        %v3704 = vpop.f32.mrf.mxu0
        %3705 = vdwg.mxu0
        %3706 = vmatpush.bf16.msra.mxu0 %v3218
        %3707 = vmatpush.bf16.msra.mxu0 %v3216
        %3708 = vmatpush.bf16.msra.mxu0 %v3214
        %3709 = vmatpush.bf16.msra.mxu0 %v3212
        %3710 = vmatpush.bf16.msra.mxu0 %v3210
        %3711 = vmatpush.bf16.msra.mxu0 %v3208
        %3712 = vmatpush.bf16.msra.mxu0 %v3206
        %3713 = vmatpush.bf16.msra.mxu0 %v3204
        %3714 = vmatmul.bf16.gmra.mxu0 %v2379
        %v3715 = vpop.f32.mrf.mxu0
        %v3716 = vadd.f32 %v3643, %v3715
        %v3717 = vpop.f32.mrf.mxu0
        %v3718 = vadd.f32 %v3645, %v3717
        %3719 = vmatmul.bf16.gmra.mxu0 %v2390
        %v3720 = vpop.f32.mrf.mxu0
        %v3721 = vadd.f32 %v3648, %v3720
        %v3722 = vpop.f32.mrf.mxu0
        %v3723 = vadd.f32 %v3650, %v3722
        %3724 = vmatmul.bf16.gmra.mxu0 %v2401
        %v3725 = vpop.f32.mrf.mxu0
        %v3726 = vadd.f32 %v3653, %v3725
        %v3727 = vpop.f32.mrf.mxu0
        %v3728 = vadd.f32 %v3655, %v3727
        %3729 = vmatmul.bf16.gmra.mxu0 %v2412
        %v3730 = vpop.f32.mrf.mxu0
        %v3731 = vadd.f32 %v3658, %v3730
        %v3732 = vpop.f32.mrf.mxu0
        %v3733 = vadd.f32 %v3660, %v3732
        %3734 = vmatmul.bf16.gmra.mxu0 %v2423
        %v3735 = vpop.f32.mrf.mxu0
        %v3736 = vadd.f32 %v3663, %v3735
        %v3737 = vpop.f32.mrf.mxu0
        %v3738 = vadd.f32 %v3665, %v3737
        %3739 = vmatmul.bf16.gmra.mxu0 %v2434
        %v3740 = vpop.f32.mrf.mxu0
        %v3741 = vadd.f32 %v3668, %v3740
        %v3742 = vpop.f32.mrf.mxu0
        %v3743 = vadd.f32 %v3670, %v3742
        %3744 = vmatmul.bf16.gmra.mxu0 %v2445
        %v3745 = vpop.f32.mrf.mxu0
        %v3746 = vadd.f32 %v3673, %v3745
        %v3747 = vpop.f32.mrf.mxu0
        %v3748 = vadd.f32 %v3675, %v3747
        %3749 = vmatmul.bf16.gmra.mxu0 %v2456
        %v3750 = vpop.f32.mrf.mxu0
        %v3751 = vadd.f32 %v3678, %v3750
        %v3752 = vpop.f32.mrf.mxu0
        %v3753 = vadd.f32 %v3680, %v3752
        %3754 = vmatmul.bf16.gmra.mxu0 %v2467
        %v3755 = vpop.f32.mrf.mxu0
        %v3756 = vadd.f32 %v3683, %v3755
        %v3757 = vpop.f32.mrf.mxu0
        %v3758 = vadd.f32 %v3685, %v3757
        %3759 = vmatmul.bf16.gmra.mxu0 %v2478
        %v3760 = vpop.f32.mrf.mxu0
        %v3761 = vadd.f32 %v3688, %v3760
        %v3762 = vpop.f32.mrf.mxu0
        %v3763 = vadd.f32 %v3690, %v3762
        %3764 = vmatmul.bf16.gmra.mxu0 %v2489
        %v3765 = vpop.f32.mrf.mxu0
        %v3766 = vadd.f32 %v3693, %v3765
        %v3767 = vpop.f32.mrf.mxu0
        %v3768 = vadd.f32 %v3695, %v3767
        %3769 = vmatmul.bf16.gmra.mxu0 %v2500
        %v3770 = vpop.f32.mrf.mxu0
        %v3771 = vadd.f32 %v3698, %v3770
        %v3772 = vpop.f32.mrf.mxu0
        %v3773 = vadd.f32 %v3700, %v3772
        %3774 = vmatmul.bf16.gmra.mxu0 %v2511
        %v3775 = vpop.f32.mrf.mxu0
        %v3776 = vadd.f32 %v3703, %v3775
        %v3777 = vpop.f32.mrf.mxu0
        %3778 = vdwg.mxu0
        %3779 = vmatpush.bf16.msra.mxu0 %v3234
        %3780 = vmatpush.bf16.msra.mxu0 %v3232
        %3781 = vmatpush.bf16.msra.mxu0 %v3230
        %3782 = vmatpush.bf16.msra.mxu0 %v3228
        %3783 = vmatpush.bf16.msra.mxu0 %v3226
        %3784 = vmatpush.bf16.msra.mxu0 %v3224
        %3785 = vmatpush.bf16.msra.mxu0 %v3222
        %3786 = vmatpush.bf16.msra.mxu0 %v3220
        %3787 = vmatmul.bf16.gmra.mxu0 %v2380
        %v3788 = vpop.f32.mrf.mxu0
        %v3789 = vadd.f32 %v3716, %v3788
        %v3790 = vpop.f32.mrf.mxu0
        %v3791 = vadd.f32 %v3718, %v3790
        %3792 = vmatmul.bf16.gmra.mxu0 %v2391
        %v3793 = vpop.f32.mrf.mxu0
        %v3794 = vadd.f32 %v3721, %v3793
        %v3795 = vpop.f32.mrf.mxu0
        %v3796 = vadd.f32 %v3723, %v3795
        %3797 = vmatmul.bf16.gmra.mxu0 %v2402
        %v3798 = vpop.f32.mrf.mxu0
        %v3799 = vadd.f32 %v3726, %v3798
        %v3800 = vpop.f32.mrf.mxu0
        %v3801 = vadd.f32 %v3728, %v3800
        %3802 = vmatmul.bf16.gmra.mxu0 %v2413
        %v3803 = vpop.f32.mrf.mxu0
        %v3804 = vadd.f32 %v3731, %v3803
        %v3805 = vpop.f32.mrf.mxu0
        %v3806 = vadd.f32 %v3733, %v3805
        %3807 = vmatmul.bf16.gmra.mxu0 %v2424
        %v3808 = vpop.f32.mrf.mxu0
        %v3809 = vadd.f32 %v3736, %v3808
        %v3810 = vpop.f32.mrf.mxu0
        %v3811 = vadd.f32 %v3738, %v3810
        %3812 = vmatmul.bf16.gmra.mxu0 %v2435
        %v3813 = vpop.f32.mrf.mxu0
        %v3814 = vadd.f32 %v3741, %v3813
        %v3815 = vpop.f32.mrf.mxu0
        %v3816 = vadd.f32 %v3743, %v3815
        %3817 = vmatmul.bf16.gmra.mxu0 %v2446
        %v3818 = vpop.f32.mrf.mxu0
        %v3819 = vadd.f32 %v3746, %v3818
        %v3820 = vpop.f32.mrf.mxu0
        %v3821 = vadd.f32 %v3748, %v3820
        %3822 = vmatmul.bf16.gmra.mxu0 %v2457
        %v3823 = vpop.f32.mrf.mxu0
        %v3824 = vadd.f32 %v3751, %v3823
        %v3825 = vpop.f32.mrf.mxu0
        %v3826 = vadd.f32 %v3753, %v3825
        %3827 = vmatmul.bf16.gmra.mxu0 %v2468
        %v3828 = vpop.f32.mrf.mxu0
        %v3829 = vadd.f32 %v3756, %v3828
        %v3830 = vpop.f32.mrf.mxu0
        %v3831 = vadd.f32 %v3758, %v3830
        %3832 = vmatmul.bf16.gmra.mxu0 %v2479
        %v3833 = vpop.f32.mrf.mxu0
        %v3834 = vadd.f32 %v3761, %v3833
        %v3835 = vpop.f32.mrf.mxu0
        %v3836 = vadd.f32 %v3763, %v3835
        %3837 = vmatmul.bf16.gmra.mxu0 %v2490
        %v3838 = vpop.f32.mrf.mxu0
        %v3839 = vadd.f32 %v3766, %v3838
        %v3840 = vpop.f32.mrf.mxu0
        %v3841 = vadd.f32 %v3768, %v3840
        %3842 = vmatmul.bf16.gmra.mxu0 %v2501
        %v3843 = vpop.f32.mrf.mxu0
        %v3844 = vadd.f32 %v3771, %v3843
        %v3845 = vpop.f32.mrf.mxu0
        %v3846 = vadd.f32 %v3773, %v3845
        %3847 = vmatmul.bf16.gmra.mxu0 %v2512
        %v3848 = vpop.f32.mrf.mxu0
        %v3849 = vadd.f32 %v3776, %v3848
        %v3850 = vpop.f32.mrf.mxu0
        %3851 = vdwg.mxu0
        %3852 = vmatpush.bf16.msra.mxu0 %v3250
        %3853 = vmatpush.bf16.msra.mxu0 %v3248
        %3854 = vmatpush.bf16.msra.mxu0 %v3246
        %3855 = vmatpush.bf16.msra.mxu0 %v3244
        %3856 = vmatpush.bf16.msra.mxu0 %v3242
        %3857 = vmatpush.bf16.msra.mxu0 %v3240
        %3858 = vmatpush.bf16.msra.mxu0 %v3238
        %3859 = vmatpush.bf16.msra.mxu0 %v3236
        %3860 = vmatmul.bf16.gmra.mxu0 %v2381
        %v3861 = vpop.f32.mrf.mxu0
        %v3862 = vadd.f32 %v3789, %v3861
        %v3863 = vpop.f32.mrf.mxu0
        %v3864 = vadd.f32 %v3791, %v3863
        %3865 = vmatmul.bf16.gmra.mxu0 %v2392
        %v3866 = vpop.f32.mrf.mxu0
        %v3867 = vadd.f32 %v3794, %v3866
        %v3868 = vpop.f32.mrf.mxu0
        %v3869 = vadd.f32 %v3796, %v3868
        %3870 = vmatmul.bf16.gmra.mxu0 %v2403
        %v3871 = vpop.f32.mrf.mxu0
        %v3872 = vadd.f32 %v3799, %v3871
        %v3873 = vpop.f32.mrf.mxu0
        %v3874 = vadd.f32 %v3801, %v3873
        %3875 = vmatmul.bf16.gmra.mxu0 %v2414
        %v3876 = vpop.f32.mrf.mxu0
        %v3877 = vadd.f32 %v3804, %v3876
        %v3878 = vpop.f32.mrf.mxu0
        %v3879 = vadd.f32 %v3806, %v3878
        %3880 = vmatmul.bf16.gmra.mxu0 %v2425
        %v3881 = vpop.f32.mrf.mxu0
        %v3882 = vadd.f32 %v3809, %v3881
        %v3883 = vpop.f32.mrf.mxu0
        %v3884 = vadd.f32 %v3811, %v3883
        %3885 = vmatmul.bf16.gmra.mxu0 %v2436
        %v3886 = vpop.f32.mrf.mxu0
        %v3887 = vadd.f32 %v3814, %v3886
        %v3888 = vpop.f32.mrf.mxu0
        %v3889 = vadd.f32 %v3816, %v3888
        %3890 = vmatmul.bf16.gmra.mxu0 %v2447
        %v3891 = vpop.f32.mrf.mxu0
        %v3892 = vadd.f32 %v3819, %v3891
        %v3893 = vpop.f32.mrf.mxu0
        %v3894 = vadd.f32 %v3821, %v3893
        %3895 = vmatmul.bf16.gmra.mxu0 %v2458
        %v3896 = vpop.f32.mrf.mxu0
        %v3897 = vadd.f32 %v3824, %v3896
        %v3898 = vpop.f32.mrf.mxu0
        %v3899 = vadd.f32 %v3826, %v3898
        %3900 = vmatmul.bf16.gmra.mxu0 %v2469
        %v3901 = vpop.f32.mrf.mxu0
        %v3902 = vadd.f32 %v3829, %v3901
        %v3903 = vpop.f32.mrf.mxu0
        %v3904 = vadd.f32 %v3831, %v3903
        %3905 = vmatmul.bf16.gmra.mxu0 %v2480
        %v3906 = vpop.f32.mrf.mxu0
        %v3907 = vadd.f32 %v3834, %v3906
        %v3908 = vpop.f32.mrf.mxu0
        %v3909 = vadd.f32 %v3836, %v3908
        %3910 = vmatmul.bf16.gmra.mxu0 %v2491
        %v3911 = vpop.f32.mrf.mxu0
        %v3912 = vadd.f32 %v3839, %v3911
        %v3913 = vpop.f32.mrf.mxu0
        %v3914 = vadd.f32 %v3841, %v3913
        %3915 = vmatmul.bf16.gmra.mxu0 %v2502
        %v3916 = vpop.f32.mrf.mxu0
        %v3917 = vadd.f32 %v3844, %v3916
        %v3918 = vpop.f32.mrf.mxu0
        %v3919 = vadd.f32 %v3846, %v3918
        %3920 = vmatmul.bf16.gmra.mxu0 %v2513
        %v3921 = vpop.f32.mrf.mxu0
        %v3922 = vadd.f32 %v3849, %v3921
        %v3923 = vpop.f32.mrf.mxu0
        %3924 = vdwg.mxu0
        %3925 = vmatpush.bf16.msra.mxu0 %v3266
        %3926 = vmatpush.bf16.msra.mxu0 %v3264
        %3927 = vmatpush.bf16.msra.mxu0 %v3262
        %3928 = vmatpush.bf16.msra.mxu0 %v3260
        %3929 = vmatpush.bf16.msra.mxu0 %v3258
        %3930 = vmatpush.bf16.msra.mxu0 %v3256
        %3931 = vmatpush.bf16.msra.mxu0 %v3254
        %3932 = vmatpush.bf16.msra.mxu0 %v3252
        %3933 = vmatmul.bf16.gmra.mxu0 %v2382
        %v3934 = vpop.f32.mrf.mxu0
        %v3935 = vadd.f32 %v3862, %v3934
        %v3936 = vpop.f32.mrf.mxu0
        %v3937 = vadd.f32 %v3864, %v3936
        %3938 = vmatmul.bf16.gmra.mxu0 %v2393
        %v3939 = vpop.f32.mrf.mxu0
        %v3940 = vadd.f32 %v3867, %v3939
        %v3941 = vpop.f32.mrf.mxu0
        %v3942 = vadd.f32 %v3869, %v3941
        %3943 = vmatmul.bf16.gmra.mxu0 %v2404
        %v3944 = vpop.f32.mrf.mxu0
        %v3945 = vadd.f32 %v3872, %v3944
        %v3946 = vpop.f32.mrf.mxu0
        %v3947 = vadd.f32 %v3874, %v3946
        %3948 = vmatmul.bf16.gmra.mxu0 %v2415
        %v3949 = vpop.f32.mrf.mxu0
        %v3950 = vadd.f32 %v3877, %v3949
        %v3951 = vpop.f32.mrf.mxu0
        %v3952 = vadd.f32 %v3879, %v3951
        %3953 = vmatmul.bf16.gmra.mxu0 %v2426
        %v3954 = vpop.f32.mrf.mxu0
        %v3955 = vadd.f32 %v3882, %v3954
        %v3956 = vpop.f32.mrf.mxu0
        %v3957 = vadd.f32 %v3884, %v3956
        %3958 = vmatmul.bf16.gmra.mxu0 %v2437
        %v3959 = vpop.f32.mrf.mxu0
        %v3960 = vadd.f32 %v3887, %v3959
        %v3961 = vpop.f32.mrf.mxu0
        %v3962 = vadd.f32 %v3889, %v3961
        %3963 = vmatmul.bf16.gmra.mxu0 %v2448
        %v3964 = vpop.f32.mrf.mxu0
        %v3965 = vadd.f32 %v3892, %v3964
        %v3966 = vpop.f32.mrf.mxu0
        %v3967 = vadd.f32 %v3894, %v3966
        %3968 = vmatmul.bf16.gmra.mxu0 %v2459
        %v3969 = vpop.f32.mrf.mxu0
        %v3970 = vadd.f32 %v3897, %v3969
        %v3971 = vpop.f32.mrf.mxu0
        %v3972 = vadd.f32 %v3899, %v3971
        %3973 = vmatmul.bf16.gmra.mxu0 %v2470
        %v3974 = vpop.f32.mrf.mxu0
        %v3975 = vadd.f32 %v3902, %v3974
        %v3976 = vpop.f32.mrf.mxu0
        %v3977 = vadd.f32 %v3904, %v3976
        %3978 = vmatmul.bf16.gmra.mxu0 %v2481
        %v3979 = vpop.f32.mrf.mxu0
        %v3980 = vadd.f32 %v3907, %v3979
        %v3981 = vpop.f32.mrf.mxu0
        %v3982 = vadd.f32 %v3909, %v3981
        %3983 = vmatmul.bf16.gmra.mxu0 %v2492
        %v3984 = vpop.f32.mrf.mxu0
        %v3985 = vadd.f32 %v3912, %v3984
        %v3986 = vpop.f32.mrf.mxu0
        %v3987 = vadd.f32 %v3914, %v3986
        %3988 = vmatmul.bf16.gmra.mxu0 %v2503
        %v3989 = vpop.f32.mrf.mxu0
        %v3990 = vadd.f32 %v3917, %v3989
        %v3991 = vpop.f32.mrf.mxu0
        %v3992 = vadd.f32 %v3919, %v3991
        %3993 = vmatmul.bf16.gmra.mxu0 %v2514
        %v3994 = vpop.f32.mrf.mxu0
        %v3995 = vadd.f32 %v3922, %v3994
        %v3996 = vpop.f32.mrf.mxu0
        %3997 = vdwg.mxu0
        %3998 = vmatpush.bf16.msra.mxu0 %v3282
        %3999 = vmatpush.bf16.msra.mxu0 %v3280
        %4000 = vmatpush.bf16.msra.mxu0 %v3278
        %4001 = vmatpush.bf16.msra.mxu0 %v3276
        %4002 = vmatpush.bf16.msra.mxu0 %v3274
        %4003 = vmatpush.bf16.msra.mxu0 %v3272
        %4004 = vmatpush.bf16.msra.mxu0 %v3270
        %4005 = vmatpush.bf16.msra.mxu0 %v3268
        %4006 = vmatmul.bf16.gmra.mxu0 %v2383
        %v4007 = vpop.f32.mrf.mxu0
        %v4008 = vadd.f32 %v3935, %v4007
        %v4009 = vpop.f32.mrf.mxu0
        %v4010 = vadd.f32 %v3937, %v4009
        %4011 = vmatmul.bf16.gmra.mxu0 %v2394
        %v4012 = vpop.f32.mrf.mxu0
        %v4013 = vadd.f32 %v3940, %v4012
        %v4014 = vpop.f32.mrf.mxu0
        %v4015 = vadd.f32 %v3942, %v4014
        %4016 = vmatmul.bf16.gmra.mxu0 %v2405
        %v4017 = vpop.f32.mrf.mxu0
        %v4018 = vadd.f32 %v3945, %v4017
        %v4019 = vpop.f32.mrf.mxu0
        %v4020 = vadd.f32 %v3947, %v4019
        %4021 = vmatmul.bf16.gmra.mxu0 %v2416
        %v4022 = vpop.f32.mrf.mxu0
        %v4023 = vadd.f32 %v3950, %v4022
        %v4024 = vpop.f32.mrf.mxu0
        %v4025 = vadd.f32 %v3952, %v4024
        %4026 = vmatmul.bf16.gmra.mxu0 %v2427
        %v4027 = vpop.f32.mrf.mxu0
        %v4028 = vadd.f32 %v3955, %v4027
        %v4029 = vpop.f32.mrf.mxu0
        %v4030 = vadd.f32 %v3957, %v4029
        %4031 = vmatmul.bf16.gmra.mxu0 %v2438
        %v4032 = vpop.f32.mrf.mxu0
        %v4033 = vadd.f32 %v3960, %v4032
        %v4034 = vpop.f32.mrf.mxu0
        %v4035 = vadd.f32 %v3962, %v4034
        %4036 = vmatmul.bf16.gmra.mxu0 %v2449
        %v4037 = vpop.f32.mrf.mxu0
        %v4038 = vadd.f32 %v3965, %v4037
        %v4039 = vpop.f32.mrf.mxu0
        %v4040 = vadd.f32 %v3967, %v4039
        %4041 = vmatmul.bf16.gmra.mxu0 %v2460
        %v4042 = vpop.f32.mrf.mxu0
        %v4043 = vadd.f32 %v3970, %v4042
        %v4044 = vpop.f32.mrf.mxu0
        %v4045 = vadd.f32 %v3972, %v4044
        %4046 = vmatmul.bf16.gmra.mxu0 %v2471
        %v4047 = vpop.f32.mrf.mxu0
        %v4048 = vadd.f32 %v3975, %v4047
        %v4049 = vpop.f32.mrf.mxu0
        %v4050 = vadd.f32 %v3977, %v4049
        %4051 = vmatmul.bf16.gmra.mxu0 %v2482
        %v4052 = vpop.f32.mrf.mxu0
        %v4053 = vadd.f32 %v3980, %v4052
        %v4054 = vpop.f32.mrf.mxu0
        %v4055 = vadd.f32 %v3982, %v4054
        %4056 = vmatmul.bf16.gmra.mxu0 %v2493
        %v4057 = vpop.f32.mrf.mxu0
        %v4058 = vadd.f32 %v3985, %v4057
        %v4059 = vpop.f32.mrf.mxu0
        %v4060 = vadd.f32 %v3987, %v4059
        %4061 = vmatmul.bf16.gmra.mxu0 %v2504
        %v4062 = vpop.f32.mrf.mxu0
        %v4063 = vadd.f32 %v3990, %v4062
        %v4064 = vpop.f32.mrf.mxu0
        %v4065 = vadd.f32 %v3992, %v4064
        %4066 = vmatmul.bf16.gmra.mxu0 %v2515
        %v4067 = vpop.f32.mrf.mxu0
        %v4068 = vadd.f32 %v3995, %v4067
        %v4069 = vpop.f32.mrf.mxu0
        %4070 = vdwg.mxu0
        %4071 = vmatpush.bf16.msra.mxu0 %v3298
        %4072 = vmatpush.bf16.msra.mxu0 %v3296
        %4073 = vmatpush.bf16.msra.mxu0 %v3294
        %4074 = vmatpush.bf16.msra.mxu0 %v3292
        %4075 = vmatpush.bf16.msra.mxu0 %v3290
        %4076 = vmatpush.bf16.msra.mxu0 %v3288
        %4077 = vmatpush.bf16.msra.mxu0 %v3286
        %4078 = vmatpush.bf16.msra.mxu0 %v3284
        %4079 = vmatmul.bf16.gmra.mxu0 %v2384
        %v4080 = vpop.f32.mrf.mxu0
        %v4081 = vadd.f32 %v4008, %v4080
        %v4082 = vpop.f32.mrf.mxu0
        %v4083 = vadd.f32 %v4010, %v4082
        %4084 = vmatmul.bf16.gmra.mxu0 %v2395
        %v4085 = vpop.f32.mrf.mxu0
        %v4086 = vadd.f32 %v4013, %v4085
        %v4087 = vpop.f32.mrf.mxu0
        %v4088 = vadd.f32 %v4015, %v4087
        %4089 = vmatmul.bf16.gmra.mxu0 %v2406
        %v4090 = vpop.f32.mrf.mxu0
        %v4091 = vadd.f32 %v4018, %v4090
        %v4092 = vpop.f32.mrf.mxu0
        %v4093 = vadd.f32 %v4020, %v4092
        %4094 = vmatmul.bf16.gmra.mxu0 %v2417
        %v4095 = vpop.f32.mrf.mxu0
        %v4096 = vadd.f32 %v4023, %v4095
        %v4097 = vpop.f32.mrf.mxu0
        %v4098 = vadd.f32 %v4025, %v4097
        %4099 = vmatmul.bf16.gmra.mxu0 %v2428
        %v4100 = vpop.f32.mrf.mxu0
        %v4101 = vadd.f32 %v4028, %v4100
        %v4102 = vpop.f32.mrf.mxu0
        %v4103 = vadd.f32 %v4030, %v4102
        %4104 = vmatmul.bf16.gmra.mxu0 %v2439
        %v4105 = vpop.f32.mrf.mxu0
        %v4106 = vadd.f32 %v4033, %v4105
        %v4107 = vpop.f32.mrf.mxu0
        %v4108 = vadd.f32 %v4035, %v4107
        %4109 = vmatmul.bf16.gmra.mxu0 %v2450
        %v4110 = vpop.f32.mrf.mxu0
        %v4111 = vadd.f32 %v4038, %v4110
        %v4112 = vpop.f32.mrf.mxu0
        %v4113 = vadd.f32 %v4040, %v4112
        %4114 = vmatmul.bf16.gmra.mxu0 %v2461
        %v4115 = vpop.f32.mrf.mxu0
        %v4116 = vadd.f32 %v4043, %v4115
        %v4117 = vpop.f32.mrf.mxu0
        %v4118 = vadd.f32 %v4045, %v4117
        %4119 = vmatmul.bf16.gmra.mxu0 %v2472
        %v4120 = vpop.f32.mrf.mxu0
        %v4121 = vadd.f32 %v4048, %v4120
        %v4122 = vpop.f32.mrf.mxu0
        %v4123 = vadd.f32 %v4050, %v4122
        %4124 = vmatmul.bf16.gmra.mxu0 %v2483
        %v4125 = vpop.f32.mrf.mxu0
        %v4126 = vadd.f32 %v4053, %v4125
        %v4127 = vpop.f32.mrf.mxu0
        %v4128 = vadd.f32 %v4055, %v4127
        %4129 = vmatmul.bf16.gmra.mxu0 %v2494
        %v4130 = vpop.f32.mrf.mxu0
        %v4131 = vadd.f32 %v4058, %v4130
        %v4132 = vpop.f32.mrf.mxu0
        %v4133 = vadd.f32 %v4060, %v4132
        %4134 = vmatmul.bf16.gmra.mxu0 %v2505
        %v4135 = vpop.f32.mrf.mxu0
        %v4136 = vadd.f32 %v4063, %v4135
        %v4137 = vpop.f32.mrf.mxu0
        %v4138 = vadd.f32 %v4065, %v4137
        %4139 = vmatmul.bf16.gmra.mxu0 %v2516
        %v4140 = vpop.f32.mrf.mxu0
        %v4141 = vadd.f32 %v4068, %v4140
        %v4142 = vpop.f32.mrf.mxu0
        %4143 = vdwg.mxu0
        %4144 = vmatpush.bf16.msra.mxu0 %v3314
        %4145 = vmatpush.bf16.msra.mxu0 %v3312
        %4146 = vmatpush.bf16.msra.mxu0 %v3310
        %4147 = vmatpush.bf16.msra.mxu0 %v3308
        %4148 = vmatpush.bf16.msra.mxu0 %v3306
        %4149 = vmatpush.bf16.msra.mxu0 %v3304
        %4150 = vmatpush.bf16.msra.mxu0 %v3302
        %4151 = vmatpush.bf16.msra.mxu0 %v3300
        %4152 = vmatmul.bf16.gmra.mxu0 %v2385
        %v4153 = vpop.f32.mrf.mxu0
        %v4154 = vadd.f32 %v4081, %v4153
        %v4155 = vpop.f32.mrf.mxu0
        %v4156 = vadd.f32 %v4083, %v4155
        %4157 = vmatmul.bf16.gmra.mxu0 %v2396
        %v4158 = vpop.f32.mrf.mxu0
        %v4159 = vadd.f32 %v4086, %v4158
        %v4160 = vpop.f32.mrf.mxu0
        %v4161 = vadd.f32 %v4088, %v4160
        %4162 = vmatmul.bf16.gmra.mxu0 %v2407
        %v4163 = vpop.f32.mrf.mxu0
        %v4164 = vadd.f32 %v4091, %v4163
        %v4165 = vpop.f32.mrf.mxu0
        %v4166 = vadd.f32 %v4093, %v4165
        %4167 = vmatmul.bf16.gmra.mxu0 %v2418
        %v4168 = vpop.f32.mrf.mxu0
        %v4169 = vadd.f32 %v4096, %v4168
        %v4170 = vpop.f32.mrf.mxu0
        %v4171 = vadd.f32 %v4098, %v4170
        %4172 = vmatmul.bf16.gmra.mxu0 %v2429
        %v4173 = vpop.f32.mrf.mxu0
        %v4174 = vadd.f32 %v4101, %v4173
        %v4175 = vpop.f32.mrf.mxu0
        %v4176 = vadd.f32 %v4103, %v4175
        %4177 = vmatmul.bf16.gmra.mxu0 %v2440
        %v4178 = vpop.f32.mrf.mxu0
        %v4179 = vadd.f32 %v4106, %v4178
        %v4180 = vpop.f32.mrf.mxu0
        %v4181 = vadd.f32 %v4108, %v4180
        %4182 = vmatmul.bf16.gmra.mxu0 %v2451
        %v4183 = vpop.f32.mrf.mxu0
        %v4184 = vadd.f32 %v4111, %v4183
        %v4185 = vpop.f32.mrf.mxu0
        %v4186 = vadd.f32 %v4113, %v4185
        %4187 = vmatmul.bf16.gmra.mxu0 %v2462
        %v4188 = vpop.f32.mrf.mxu0
        %v4189 = vadd.f32 %v4116, %v4188
        %v4190 = vpop.f32.mrf.mxu0
        %v4191 = vadd.f32 %v4118, %v4190
        %4192 = vmatmul.bf16.gmra.mxu0 %v2473
        %v4193 = vpop.f32.mrf.mxu0
        %v4194 = vadd.f32 %v4121, %v4193
        %v4195 = vpop.f32.mrf.mxu0
        %v4196 = vadd.f32 %v4123, %v4195
        %4197 = vmatmul.bf16.gmra.mxu0 %v2484
        %v4198 = vpop.f32.mrf.mxu0
        %v4199 = vadd.f32 %v4126, %v4198
        %v4200 = vpop.f32.mrf.mxu0
        %v4201 = vadd.f32 %v4128, %v4200
        %4202 = vmatmul.bf16.gmra.mxu0 %v2495
        %v4203 = vpop.f32.mrf.mxu0
        %v4204 = vadd.f32 %v4131, %v4203
        %v4205 = vpop.f32.mrf.mxu0
        %v4206 = vadd.f32 %v4133, %v4205
        %4207 = vmatmul.bf16.gmra.mxu0 %v2506
        %v4208 = vpop.f32.mrf.mxu0
        %v4209 = vadd.f32 %v4136, %v4208
        %v4210 = vpop.f32.mrf.mxu0
        %v4211 = vadd.f32 %v4138, %v4210
        %4212 = vmatmul.bf16.gmra.mxu0 %v2517
        %v4213 = vpop.f32.mrf.mxu0
        %v4214 = vadd.f32 %v4141, %v4213
        %v4215 = vpop.f32.mrf.mxu0
        %4216 = vdwg.mxu0
        %4217 = vmatpush.bf16.msra.mxu0 %v3330
        %4218 = vmatpush.bf16.msra.mxu0 %v3328
        %4219 = vmatpush.bf16.msra.mxu0 %v3326
        %4220 = vmatpush.bf16.msra.mxu0 %v3324
        %4221 = vmatpush.bf16.msra.mxu0 %v3322
        %4222 = vmatpush.bf16.msra.mxu0 %v3320
        %4223 = vmatpush.bf16.msra.mxu0 %v3318
        %4224 = vmatpush.bf16.msra.mxu0 %v3316
        %4225 = vmatmul.bf16.gmra.mxu0 %v2386
        %v4226 = vpop.f32.mrf.mxu0
        %v4227 = vadd.f32 %v4154, %v4226
        %v4228 = vpop.f32.mrf.mxu0
        %v4229 = vadd.f32 %v4156, %v4228
        %4230 = vmatmul.bf16.gmra.mxu0 %v2397
        %v4231 = vpop.f32.mrf.mxu0
        %v4232 = vadd.f32 %v4159, %v4231
        %v4233 = vpop.f32.mrf.mxu0
        %v4234 = vadd.f32 %v4161, %v4233
        %4235 = vmatmul.bf16.gmra.mxu0 %v2408
        %v4236 = vpop.f32.mrf.mxu0
        %v4237 = vadd.f32 %v4164, %v4236
        %v4238 = vpop.f32.mrf.mxu0
        %v4239 = vadd.f32 %v4166, %v4238
        %4240 = vmatmul.bf16.gmra.mxu0 %v2419
        %v4241 = vpop.f32.mrf.mxu0
        %v4242 = vadd.f32 %v4169, %v4241
        %v4243 = vpop.f32.mrf.mxu0
        %v4244 = vadd.f32 %v4171, %v4243
        %4245 = vmatmul.bf16.gmra.mxu0 %v2430
        %v4246 = vpop.f32.mrf.mxu0
        %v4247 = vadd.f32 %v4174, %v4246
        %v4248 = vpop.f32.mrf.mxu0
        %v4249 = vadd.f32 %v4176, %v4248
        %4250 = vmatmul.bf16.gmra.mxu0 %v2441
        %v4251 = vpop.f32.mrf.mxu0
        %v4252 = vadd.f32 %v4179, %v4251
        %v4253 = vpop.f32.mrf.mxu0
        %v4254 = vadd.f32 %v4181, %v4253
        %4255 = vmatmul.bf16.gmra.mxu0 %v2452
        %v4256 = vpop.f32.mrf.mxu0
        %v4257 = vadd.f32 %v4184, %v4256
        %v4258 = vpop.f32.mrf.mxu0
        %v4259 = vadd.f32 %v4186, %v4258
        %4260 = vmatmul.bf16.gmra.mxu0 %v2463
        %v4261 = vpop.f32.mrf.mxu0
        %v4262 = vadd.f32 %v4189, %v4261
        %v4263 = vpop.f32.mrf.mxu0
        %v4264 = vadd.f32 %v4191, %v4263
        %4265 = vmatmul.bf16.gmra.mxu0 %v2474
        %v4266 = vpop.f32.mrf.mxu0
        %v4267 = vadd.f32 %v4194, %v4266
        %v4268 = vpop.f32.mrf.mxu0
        %v4269 = vadd.f32 %v4196, %v4268
        %4270 = vmatmul.bf16.gmra.mxu0 %v2485
        %v4271 = vpop.f32.mrf.mxu0
        %v4272 = vadd.f32 %v4199, %v4271
        %v4273 = vpop.f32.mrf.mxu0
        %v4274 = vadd.f32 %v4201, %v4273
        %4275 = vmatmul.bf16.gmra.mxu0 %v2496
        %v4276 = vpop.f32.mrf.mxu0
        %v4277 = vadd.f32 %v4204, %v4276
        %v4278 = vpop.f32.mrf.mxu0
        %v4279 = vadd.f32 %v4206, %v4278
        %4280 = vmatmul.bf16.gmra.mxu0 %v2507
        %v4281 = vpop.f32.mrf.mxu0
        %v4282 = vadd.f32 %v4209, %v4281
        %v4283 = vpop.f32.mrf.mxu0
        %v4284 = vadd.f32 %v4211, %v4283
        %4285 = vmatmul.bf16.gmra.mxu0 %v2518
        %v4286 = vpop.f32.mrf.mxu0
        %v4287 = vadd.f32 %v4214, %v4286
        %v4288 = vpop.f32.mrf.mxu0
        %4289 = vdwg.mxu0
        %4290 = vmatpush.bf16.msra.mxu0 0
        %4291 = vmatpush.bf16.msra.mxu0 %v3344
        %4292 = vmatpush.bf16.msra.mxu0 %v3342
        %4293 = vmatpush.bf16.msra.mxu0 %v3340
        %4294 = vmatpush.bf16.msra.mxu0 %v3338
        %4295 = vmatpush.bf16.msra.mxu0 %v3336
        %4296 = vmatpush.bf16.msra.mxu0 %v3334
        %4297 = vmatpush.bf16.msra.mxu0 %v3332
        %4298 = vmatmul.bf16.gmra.mxu0 %v3522
        %v4299 = vpop.f32.mrf.mxu0
        %v4300 = vadd.f32 %v4227, %v4299
        %v4301 = vpop.f32.mrf.mxu0
        %v4302 = vadd.f32 %v4229, %v4301
        %4303 = vmatmul.bf16.gmra.mxu0 %v3525
        %v4304 = vpop.f32.mrf.mxu0
        %v4305 = vadd.f32 %v4232, %v4304
        %v4306 = vpop.f32.mrf.mxu0
        %v4307 = vadd.f32 %v4234, %v4306
        %4308 = vmatmul.bf16.gmra.mxu0 %v3528
        %v4309 = vpop.f32.mrf.mxu0
        %v4310 = vadd.f32 %v4237, %v4309
        %v4311 = vpop.f32.mrf.mxu0
        %v4312 = vadd.f32 %v4239, %v4311
        %4313 = vmatmul.bf16.gmra.mxu0 %v3531
        %v4314 = vpop.f32.mrf.mxu0
        %v4315 = vadd.f32 %v4242, %v4314
        %v4316 = vpop.f32.mrf.mxu0
        %v4317 = vadd.f32 %v4244, %v4316
        %4318 = vmatmul.bf16.gmra.mxu0 %v3534
        %v4319 = vpop.f32.mrf.mxu0
        %v4320 = vadd.f32 %v4247, %v4319
        %v4321 = vpop.f32.mrf.mxu0
        %v4322 = vadd.f32 %v4249, %v4321
        %4323 = vmatmul.bf16.gmra.mxu0 %v3537
        %v4324 = vpop.f32.mrf.mxu0
        %v4325 = vadd.f32 %v4252, %v4324
        %v4326 = vpop.f32.mrf.mxu0
        %v4327 = vadd.f32 %v4254, %v4326
        %4328 = vmatmul.bf16.gmra.mxu0 %v3540
        %v4329 = vpop.f32.mrf.mxu0
        %v4330 = vadd.f32 %v4257, %v4329
        %v4331 = vpop.f32.mrf.mxu0
        %v4332 = vadd.f32 %v4259, %v4331
        %4333 = vmatmul.bf16.gmra.mxu0 %v3543
        %v4334 = vpop.f32.mrf.mxu0
        %v4335 = vadd.f32 %v4262, %v4334
        %v4336 = vpop.f32.mrf.mxu0
        %v4337 = vadd.f32 %v4264, %v4336
        %4338 = vmatmul.bf16.gmra.mxu0 %v3546
        %v4339 = vpop.f32.mrf.mxu0
        %v4340 = vadd.f32 %v4267, %v4339
        %v4341 = vpop.f32.mrf.mxu0
        %v4342 = vadd.f32 %v4269, %v4341
        %4343 = vmatmul.bf16.gmra.mxu0 %v3549
        %v4344 = vpop.f32.mrf.mxu0
        %v4345 = vadd.f32 %v4272, %v4344
        %v4346 = vpop.f32.mrf.mxu0
        %v4347 = vadd.f32 %v4274, %v4346
        %4348 = vmatmul.bf16.gmra.mxu0 %v3552
        %v4349 = vpop.f32.mrf.mxu0
        %v4350 = vadd.f32 %v4277, %v4349
        %v4351 = vpop.f32.mrf.mxu0
        %v4352 = vadd.f32 %v4279, %v4351
        %4353 = vmatmul.bf16.gmra.mxu0 %v3555
        %v4354 = vpop.f32.mrf.mxu0
        %v4355 = vadd.f32 %v4282, %v4354
        %v4356 = vpop.f32.mrf.mxu0
        %v4357 = vadd.f32 %v4284, %v4356
        %4358 = vmatmul.bf16.gmra.mxu0 %v3558
        %v4359 = vpop.f32.mrf.mxu0
        %v4360 = vadd.f32 %v4287, %v4359
        %v4361 = vpop.f32.mrf.mxu0
        %4362 = vdwg.mxu0
        %4363 = vmatpush.bf16.msra.mxu0 %v3187
        %4364 = vmatpush.bf16.msra.mxu0 %v3185
        %4365 = vmatpush.bf16.msra.mxu0 %v3183
        %4366 = vmatpush.bf16.msra.mxu0 %v3181
        %4367 = vmatpush.bf16.msra.mxu0 %v3179
        %4368 = vmatpush.bf16.msra.mxu0 %v3177
        %4369 = vmatpush.bf16.msra.mxu0 %v3175
        %4370 = vmatpush.bf16.msra.mxu0 %v3173
        %4371 = vmatmul.bf16.gmra.mxu0 %v2377
        %v4372 = vpop.f32.mrf.mxu0
        %v4373 = vadd.f32 0.0, %v4372
        %v4374 = vpop.f32.mrf.mxu0
        %v4375 = vadd.f32 0.0, %v4374
        %4376 = vmatmul.bf16.gmra.mxu0 %v2388
        %v4377 = vpop.f32.mrf.mxu0
        %v4378 = vadd.f32 0.0, %v4377
        %v4379 = vpop.f32.mrf.mxu0
        %v4380 = vadd.f32 0.0, %v4379
        %4381 = vmatmul.bf16.gmra.mxu0 %v2399
        %v4382 = vpop.f32.mrf.mxu0
        %v4383 = vadd.f32 0.0, %v4382
        %v4384 = vpop.f32.mrf.mxu0
        %v4385 = vadd.f32 0.0, %v4384
        %4386 = vmatmul.bf16.gmra.mxu0 %v2410
        %v4387 = vpop.f32.mrf.mxu0
        %v4388 = vadd.f32 0.0, %v4387
        %v4389 = vpop.f32.mrf.mxu0
        %v4390 = vadd.f32 0.0, %v4389
        %4391 = vmatmul.bf16.gmra.mxu0 %v2421
        %v4392 = vpop.f32.mrf.mxu0
        %v4393 = vadd.f32 0.0, %v4392
        %v4394 = vpop.f32.mrf.mxu0
        %v4395 = vadd.f32 0.0, %v4394
        %4396 = vmatmul.bf16.gmra.mxu0 %v2432
        %v4397 = vpop.f32.mrf.mxu0
        %v4398 = vadd.f32 0.0, %v4397
        %v4399 = vpop.f32.mrf.mxu0
        %v4400 = vadd.f32 0.0, %v4399
        %4401 = vmatmul.bf16.gmra.mxu0 %v2443
        %v4402 = vpop.f32.mrf.mxu0
        %v4403 = vadd.f32 0.0, %v4402
        %v4404 = vpop.f32.mrf.mxu0
        %v4405 = vadd.f32 0.0, %v4404
        %4406 = vmatmul.bf16.gmra.mxu0 %v2454
        %v4407 = vpop.f32.mrf.mxu0
        %v4408 = vadd.f32 0.0, %v4407
        %v4409 = vpop.f32.mrf.mxu0
        %v4410 = vadd.f32 0.0, %v4409
        %4411 = vmatmul.bf16.gmra.mxu0 %v2465
        %v4412 = vpop.f32.mrf.mxu0
        %v4413 = vadd.f32 0.0, %v4412
        %v4414 = vpop.f32.mrf.mxu0
        %v4415 = vadd.f32 0.0, %v4414
        %4416 = vmatmul.bf16.gmra.mxu0 %v2476
        %v4417 = vpop.f32.mrf.mxu0
        %v4418 = vadd.f32 0.0, %v4417
        %v4419 = vpop.f32.mrf.mxu0
        %v4420 = vadd.f32 0.0, %v4419
        %4421 = vmatmul.bf16.gmra.mxu0 %v2487
        %v4422 = vpop.f32.mrf.mxu0
        %v4423 = vadd.f32 0.0, %v4422
        %v4424 = vpop.f32.mrf.mxu0
        %v4425 = vadd.f32 0.0, %v4424
        %4426 = vmatmul.bf16.gmra.mxu0 %v2498
        %v4427 = vpop.f32.mrf.mxu0
        %v4428 = vadd.f32 0.0, %v4427
        %v4429 = vpop.f32.mrf.mxu0
        %v4430 = vadd.f32 0.0, %v4429
        %4431 = vmatmul.bf16.gmra.mxu0 %v2509
        %v4432 = vpop.f32.mrf.mxu0
        %v4433 = vadd.f32 0.0, %v4432
        %v4434 = vpop.f32.mrf.mxu0
        %4435 = vdwg.mxu0
        %4436 = vmatpush.bf16.msra.mxu0 %v3203
        %4437 = vmatpush.bf16.msra.mxu0 %v3201
        %4438 = vmatpush.bf16.msra.mxu0 %v3199
        %4439 = vmatpush.bf16.msra.mxu0 %v3197
        %4440 = vmatpush.bf16.msra.mxu0 %v3195
        %4441 = vmatpush.bf16.msra.mxu0 %v3193
        %4442 = vmatpush.bf16.msra.mxu0 %v3191
        %4443 = vmatpush.bf16.msra.mxu0 %v3189
        %4444 = vmatmul.bf16.gmra.mxu0 %v2378
        %v4445 = vpop.f32.mrf.mxu0
        %v4446 = vadd.f32 %v4373, %v4445
        %v4447 = vpop.f32.mrf.mxu0
        %v4448 = vadd.f32 %v4375, %v4447
        %4449 = vmatmul.bf16.gmra.mxu0 %v2389
        %v4450 = vpop.f32.mrf.mxu0
        %v4451 = vadd.f32 %v4378, %v4450
        %v4452 = vpop.f32.mrf.mxu0
        %v4453 = vadd.f32 %v4380, %v4452
        %4454 = vmatmul.bf16.gmra.mxu0 %v2400
        %v4455 = vpop.f32.mrf.mxu0
        %v4456 = vadd.f32 %v4383, %v4455
        %v4457 = vpop.f32.mrf.mxu0
        %v4458 = vadd.f32 %v4385, %v4457
        %4459 = vmatmul.bf16.gmra.mxu0 %v2411
        %v4460 = vpop.f32.mrf.mxu0
        %v4461 = vadd.f32 %v4388, %v4460
        %v4462 = vpop.f32.mrf.mxu0
        %v4463 = vadd.f32 %v4390, %v4462
        %4464 = vmatmul.bf16.gmra.mxu0 %v2422
        %v4465 = vpop.f32.mrf.mxu0
        %v4466 = vadd.f32 %v4393, %v4465
        %v4467 = vpop.f32.mrf.mxu0
        %v4468 = vadd.f32 %v4395, %v4467
        %4469 = vmatmul.bf16.gmra.mxu0 %v2433
        %v4470 = vpop.f32.mrf.mxu0
        %v4471 = vadd.f32 %v4398, %v4470
        %v4472 = vpop.f32.mrf.mxu0
        %v4473 = vadd.f32 %v4400, %v4472
        %4474 = vmatmul.bf16.gmra.mxu0 %v2444
        %v4475 = vpop.f32.mrf.mxu0
        %v4476 = vadd.f32 %v4403, %v4475
        %v4477 = vpop.f32.mrf.mxu0
        %v4478 = vadd.f32 %v4405, %v4477
        %4479 = vmatmul.bf16.gmra.mxu0 %v2455
        %v4480 = vpop.f32.mrf.mxu0
        %v4481 = vadd.f32 %v4408, %v4480
        %v4482 = vpop.f32.mrf.mxu0
        %v4483 = vadd.f32 %v4410, %v4482
        %4484 = vmatmul.bf16.gmra.mxu0 %v2466
        %v4485 = vpop.f32.mrf.mxu0
        %v4486 = vadd.f32 %v4413, %v4485
        %v4487 = vpop.f32.mrf.mxu0
        %v4488 = vadd.f32 %v4415, %v4487
        %4489 = vmatmul.bf16.gmra.mxu0 %v2477
        %v4490 = vpop.f32.mrf.mxu0
        %v4491 = vadd.f32 %v4418, %v4490
        %v4492 = vpop.f32.mrf.mxu0
        %v4493 = vadd.f32 %v4420, %v4492
        %4494 = vmatmul.bf16.gmra.mxu0 %v2488
        %v4495 = vpop.f32.mrf.mxu0
        %v4496 = vadd.f32 %v4423, %v4495
        %v4497 = vpop.f32.mrf.mxu0
        %v4498 = vadd.f32 %v4425, %v4497
        %4499 = vmatmul.bf16.gmra.mxu0 %v2499
        %v4500 = vpop.f32.mrf.mxu0
        %v4501 = vadd.f32 %v4428, %v4500
        %v4502 = vpop.f32.mrf.mxu0
        %v4503 = vadd.f32 %v4430, %v4502
        %4504 = vmatmul.bf16.gmra.mxu0 %v2510
        %v4505 = vpop.f32.mrf.mxu0
        %v4506 = vadd.f32 %v4433, %v4505
        %v4507 = vpop.f32.mrf.mxu0
        %4508 = vdwg.mxu0
        %4509 = vmatpush.bf16.msra.mxu0 %v3219
        %4510 = vmatpush.bf16.msra.mxu0 %v3217
        %4511 = vmatpush.bf16.msra.mxu0 %v3215
        %4512 = vmatpush.bf16.msra.mxu0 %v3213
        %4513 = vmatpush.bf16.msra.mxu0 %v3211
        %4514 = vmatpush.bf16.msra.mxu0 %v3209
        %4515 = vmatpush.bf16.msra.mxu0 %v3207
        %4516 = vmatpush.bf16.msra.mxu0 %v3205
        %4517 = vmatmul.bf16.gmra.mxu0 %v2379
        %v4518 = vpop.f32.mrf.mxu0
        %v4519 = vadd.f32 %v4446, %v4518
        %v4520 = vpop.f32.mrf.mxu0
        %v4521 = vadd.f32 %v4448, %v4520
        %4522 = vmatmul.bf16.gmra.mxu0 %v2390
        %v4523 = vpop.f32.mrf.mxu0
        %v4524 = vadd.f32 %v4451, %v4523
        %v4525 = vpop.f32.mrf.mxu0
        %v4526 = vadd.f32 %v4453, %v4525
        %4527 = vmatmul.bf16.gmra.mxu0 %v2401
        %v4528 = vpop.f32.mrf.mxu0
        %v4529 = vadd.f32 %v4456, %v4528
        %v4530 = vpop.f32.mrf.mxu0
        %v4531 = vadd.f32 %v4458, %v4530
        %4532 = vmatmul.bf16.gmra.mxu0 %v2412
        %v4533 = vpop.f32.mrf.mxu0
        %v4534 = vadd.f32 %v4461, %v4533
        %v4535 = vpop.f32.mrf.mxu0
        %v4536 = vadd.f32 %v4463, %v4535
        %4537 = vmatmul.bf16.gmra.mxu0 %v2423
        %v4538 = vpop.f32.mrf.mxu0
        %v4539 = vadd.f32 %v4466, %v4538
        %v4540 = vpop.f32.mrf.mxu0
        %v4541 = vadd.f32 %v4468, %v4540
        %4542 = vmatmul.bf16.gmra.mxu0 %v2434
        %v4543 = vpop.f32.mrf.mxu0
        %v4544 = vadd.f32 %v4471, %v4543
        %v4545 = vpop.f32.mrf.mxu0
        %v4546 = vadd.f32 %v4473, %v4545
        %4547 = vmatmul.bf16.gmra.mxu0 %v2445
        %v4548 = vpop.f32.mrf.mxu0
        %v4549 = vadd.f32 %v4476, %v4548
        %v4550 = vpop.f32.mrf.mxu0
        %v4551 = vadd.f32 %v4478, %v4550
        %4552 = vmatmul.bf16.gmra.mxu0 %v2456
        %v4553 = vpop.f32.mrf.mxu0
        %v4554 = vadd.f32 %v4481, %v4553
        %v4555 = vpop.f32.mrf.mxu0
        %v4556 = vadd.f32 %v4483, %v4555
        %4557 = vmatmul.bf16.gmra.mxu0 %v2467
        %v4558 = vpop.f32.mrf.mxu0
        %v4559 = vadd.f32 %v4486, %v4558
        %v4560 = vpop.f32.mrf.mxu0
        %v4561 = vadd.f32 %v4488, %v4560
        %4562 = vmatmul.bf16.gmra.mxu0 %v2478
        %v4563 = vpop.f32.mrf.mxu0
        %v4564 = vadd.f32 %v4491, %v4563
        %v4565 = vpop.f32.mrf.mxu0
        %v4566 = vadd.f32 %v4493, %v4565
        %4567 = vmatmul.bf16.gmra.mxu0 %v2489
        %v4568 = vpop.f32.mrf.mxu0
        %v4569 = vadd.f32 %v4496, %v4568
        %v4570 = vpop.f32.mrf.mxu0
        %v4571 = vadd.f32 %v4498, %v4570
        %4572 = vmatmul.bf16.gmra.mxu0 %v2500
        %v4573 = vpop.f32.mrf.mxu0
        %v4574 = vadd.f32 %v4501, %v4573
        %v4575 = vpop.f32.mrf.mxu0
        %v4576 = vadd.f32 %v4503, %v4575
        %4577 = vmatmul.bf16.gmra.mxu0 %v2511
        %v4578 = vpop.f32.mrf.mxu0
        %v4579 = vadd.f32 %v4506, %v4578
        %v4580 = vpop.f32.mrf.mxu0
        %4581 = vdwg.mxu0
        %4582 = vmatpush.bf16.msra.mxu0 %v3235
        %4583 = vmatpush.bf16.msra.mxu0 %v3233
        %4584 = vmatpush.bf16.msra.mxu0 %v3231
        %4585 = vmatpush.bf16.msra.mxu0 %v3229
        %4586 = vmatpush.bf16.msra.mxu0 %v3227
        %4587 = vmatpush.bf16.msra.mxu0 %v3225
        %4588 = vmatpush.bf16.msra.mxu0 %v3223
        %4589 = vmatpush.bf16.msra.mxu0 %v3221
        %4590 = vmatmul.bf16.gmra.mxu0 %v2380
        %v4591 = vpop.f32.mrf.mxu0
        %v4592 = vadd.f32 %v4519, %v4591
        %v4593 = vpop.f32.mrf.mxu0
        %v4594 = vadd.f32 %v4521, %v4593
        %4595 = vmatmul.bf16.gmra.mxu0 %v2391
        %v4596 = vpop.f32.mrf.mxu0
        %v4597 = vadd.f32 %v4524, %v4596
        %v4598 = vpop.f32.mrf.mxu0
        %v4599 = vadd.f32 %v4526, %v4598
        %4600 = vmatmul.bf16.gmra.mxu0 %v2402
        %v4601 = vpop.f32.mrf.mxu0
        %v4602 = vadd.f32 %v4529, %v4601
        %v4603 = vpop.f32.mrf.mxu0
        %v4604 = vadd.f32 %v4531, %v4603
        %4605 = vmatmul.bf16.gmra.mxu0 %v2413
        %v4606 = vpop.f32.mrf.mxu0
        %v4607 = vadd.f32 %v4534, %v4606
        %v4608 = vpop.f32.mrf.mxu0
        %v4609 = vadd.f32 %v4536, %v4608
        %4610 = vmatmul.bf16.gmra.mxu0 %v2424
        %v4611 = vpop.f32.mrf.mxu0
        %v4612 = vadd.f32 %v4539, %v4611
        %v4613 = vpop.f32.mrf.mxu0
        %v4614 = vadd.f32 %v4541, %v4613
        %4615 = vmatmul.bf16.gmra.mxu0 %v2435
        %v4616 = vpop.f32.mrf.mxu0
        %v4617 = vadd.f32 %v4544, %v4616
        %v4618 = vpop.f32.mrf.mxu0
        %v4619 = vadd.f32 %v4546, %v4618
        %4620 = vmatmul.bf16.gmra.mxu0 %v2446
        %v4621 = vpop.f32.mrf.mxu0
        %v4622 = vadd.f32 %v4549, %v4621
        %v4623 = vpop.f32.mrf.mxu0
        %v4624 = vadd.f32 %v4551, %v4623
        %4625 = vmatmul.bf16.gmra.mxu0 %v2457
        %v4626 = vpop.f32.mrf.mxu0
        %v4627 = vadd.f32 %v4554, %v4626
        %v4628 = vpop.f32.mrf.mxu0
        %v4629 = vadd.f32 %v4556, %v4628
        %4630 = vmatmul.bf16.gmra.mxu0 %v2468
        %v4631 = vpop.f32.mrf.mxu0
        %v4632 = vadd.f32 %v4559, %v4631
        %v4633 = vpop.f32.mrf.mxu0
        %v4634 = vadd.f32 %v4561, %v4633
        %4635 = vmatmul.bf16.gmra.mxu0 %v2479
        %v4636 = vpop.f32.mrf.mxu0
        %v4637 = vadd.f32 %v4564, %v4636
        %v4638 = vpop.f32.mrf.mxu0
        %v4639 = vadd.f32 %v4566, %v4638
        %4640 = vmatmul.bf16.gmra.mxu0 %v2490
        %v4641 = vpop.f32.mrf.mxu0
        %v4642 = vadd.f32 %v4569, %v4641
        %v4643 = vpop.f32.mrf.mxu0
        %v4644 = vadd.f32 %v4571, %v4643
        %4645 = vmatmul.bf16.gmra.mxu0 %v2501
        %v4646 = vpop.f32.mrf.mxu0
        %v4647 = vadd.f32 %v4574, %v4646
        %v4648 = vpop.f32.mrf.mxu0
        %v4649 = vadd.f32 %v4576, %v4648
        %4650 = vmatmul.bf16.gmra.mxu0 %v2512
        %v4651 = vpop.f32.mrf.mxu0
        %v4652 = vadd.f32 %v4579, %v4651
        %v4653 = vpop.f32.mrf.mxu0
        %4654 = vdwg.mxu0
        %4655 = vmatpush.bf16.msra.mxu0 %v3251
        %4656 = vmatpush.bf16.msra.mxu0 %v3249
        %4657 = vmatpush.bf16.msra.mxu0 %v3247
        %4658 = vmatpush.bf16.msra.mxu0 %v3245
        %4659 = vmatpush.bf16.msra.mxu0 %v3243
        %4660 = vmatpush.bf16.msra.mxu0 %v3241
        %4661 = vmatpush.bf16.msra.mxu0 %v3239
        %4662 = vmatpush.bf16.msra.mxu0 %v3237
        %4663 = vmatmul.bf16.gmra.mxu0 %v2381
        %v4664 = vpop.f32.mrf.mxu0
        %v4665 = vadd.f32 %v4592, %v4664
        %v4666 = vpop.f32.mrf.mxu0
        %v4667 = vadd.f32 %v4594, %v4666
        %4668 = vmatmul.bf16.gmra.mxu0 %v2392
        %v4669 = vpop.f32.mrf.mxu0
        %v4670 = vadd.f32 %v4597, %v4669
        %v4671 = vpop.f32.mrf.mxu0
        %v4672 = vadd.f32 %v4599, %v4671
        %4673 = vmatmul.bf16.gmra.mxu0 %v2403
        %v4674 = vpop.f32.mrf.mxu0
        %v4675 = vadd.f32 %v4602, %v4674
        %v4676 = vpop.f32.mrf.mxu0
        %v4677 = vadd.f32 %v4604, %v4676
        %4678 = vmatmul.bf16.gmra.mxu0 %v2414
        %v4679 = vpop.f32.mrf.mxu0
        %v4680 = vadd.f32 %v4607, %v4679
        %v4681 = vpop.f32.mrf.mxu0
        %v4682 = vadd.f32 %v4609, %v4681
        %4683 = vmatmul.bf16.gmra.mxu0 %v2425
        %v4684 = vpop.f32.mrf.mxu0
        %v4685 = vadd.f32 %v4612, %v4684
        %v4686 = vpop.f32.mrf.mxu0
        %v4687 = vadd.f32 %v4614, %v4686
        %4688 = vmatmul.bf16.gmra.mxu0 %v2436
        %v4689 = vpop.f32.mrf.mxu0
        %v4690 = vadd.f32 %v4617, %v4689
        %v4691 = vpop.f32.mrf.mxu0
        %v4692 = vadd.f32 %v4619, %v4691
        %4693 = vmatmul.bf16.gmra.mxu0 %v2447
        %v4694 = vpop.f32.mrf.mxu0
        %v4695 = vadd.f32 %v4622, %v4694
        %v4696 = vpop.f32.mrf.mxu0
        %v4697 = vadd.f32 %v4624, %v4696
        %4698 = vmatmul.bf16.gmra.mxu0 %v2458
        %v4699 = vpop.f32.mrf.mxu0
        %v4700 = vadd.f32 %v4627, %v4699
        %v4701 = vpop.f32.mrf.mxu0
        %v4702 = vadd.f32 %v4629, %v4701
        %4703 = vmatmul.bf16.gmra.mxu0 %v2469
        %v4704 = vpop.f32.mrf.mxu0
        %v4705 = vadd.f32 %v4632, %v4704
        %v4706 = vpop.f32.mrf.mxu0
        %v4707 = vadd.f32 %v4634, %v4706
        %4708 = vmatmul.bf16.gmra.mxu0 %v2480
        %v4709 = vpop.f32.mrf.mxu0
        %v4710 = vadd.f32 %v4637, %v4709
        %v4711 = vpop.f32.mrf.mxu0
        %v4712 = vadd.f32 %v4639, %v4711
        %4713 = vmatmul.bf16.gmra.mxu0 %v2491
        %v4714 = vpop.f32.mrf.mxu0
        %v4715 = vadd.f32 %v4642, %v4714
        %v4716 = vpop.f32.mrf.mxu0
        %v4717 = vadd.f32 %v4644, %v4716
        %4718 = vmatmul.bf16.gmra.mxu0 %v2502
        %v4719 = vpop.f32.mrf.mxu0
        %v4720 = vadd.f32 %v4647, %v4719
        %v4721 = vpop.f32.mrf.mxu0
        %v4722 = vadd.f32 %v4649, %v4721
        %4723 = vmatmul.bf16.gmra.mxu0 %v2513
        %v4724 = vpop.f32.mrf.mxu0
        %v4725 = vadd.f32 %v4652, %v4724
        %v4726 = vpop.f32.mrf.mxu0
        %4727 = vdwg.mxu0
        %4728 = vmatpush.bf16.msra.mxu0 %v3267
        %4729 = vmatpush.bf16.msra.mxu0 %v3265
        %4730 = vmatpush.bf16.msra.mxu0 %v3263
        %4731 = vmatpush.bf16.msra.mxu0 %v3261
        %4732 = vmatpush.bf16.msra.mxu0 %v3259
        %4733 = vmatpush.bf16.msra.mxu0 %v3257
        %4734 = vmatpush.bf16.msra.mxu0 %v3255
        %4735 = vmatpush.bf16.msra.mxu0 %v3253
        %4736 = vmatmul.bf16.gmra.mxu0 %v2382
        %v4737 = vpop.f32.mrf.mxu0
        %v4738 = vadd.f32 %v4665, %v4737
        %v4739 = vpop.f32.mrf.mxu0
        %v4740 = vadd.f32 %v4667, %v4739
        %4741 = vmatmul.bf16.gmra.mxu0 %v2393
        %v4742 = vpop.f32.mrf.mxu0
        %v4743 = vadd.f32 %v4670, %v4742
        %v4744 = vpop.f32.mrf.mxu0
        %v4745 = vadd.f32 %v4672, %v4744
        %4746 = vmatmul.bf16.gmra.mxu0 %v2404
        %v4747 = vpop.f32.mrf.mxu0
        %v4748 = vadd.f32 %v4675, %v4747
        %v4749 = vpop.f32.mrf.mxu0
        %v4750 = vadd.f32 %v4677, %v4749
        %4751 = vmatmul.bf16.gmra.mxu0 %v2415
        %v4752 = vpop.f32.mrf.mxu0
        %v4753 = vadd.f32 %v4680, %v4752
        %v4754 = vpop.f32.mrf.mxu0
        %v4755 = vadd.f32 %v4682, %v4754
        %4756 = vmatmul.bf16.gmra.mxu0 %v2426
        %v4757 = vpop.f32.mrf.mxu0
        %v4758 = vadd.f32 %v4685, %v4757
        %v4759 = vpop.f32.mrf.mxu0
        %v4760 = vadd.f32 %v4687, %v4759
        %4761 = vmatmul.bf16.gmra.mxu0 %v2437
        %v4762 = vpop.f32.mrf.mxu0
        %v4763 = vadd.f32 %v4690, %v4762
        %v4764 = vpop.f32.mrf.mxu0
        %v4765 = vadd.f32 %v4692, %v4764
        %4766 = vmatmul.bf16.gmra.mxu0 %v2448
        %v4767 = vpop.f32.mrf.mxu0
        %v4768 = vadd.f32 %v4695, %v4767
        %v4769 = vpop.f32.mrf.mxu0
        %v4770 = vadd.f32 %v4697, %v4769
        %4771 = vmatmul.bf16.gmra.mxu0 %v2459
        %v4772 = vpop.f32.mrf.mxu0
        %v4773 = vadd.f32 %v4700, %v4772
        %v4774 = vpop.f32.mrf.mxu0
        %v4775 = vadd.f32 %v4702, %v4774
        %4776 = vmatmul.bf16.gmra.mxu0 %v2470
        %v4777 = vpop.f32.mrf.mxu0
        %v4778 = vadd.f32 %v4705, %v4777
        %v4779 = vpop.f32.mrf.mxu0
        %v4780 = vadd.f32 %v4707, %v4779
        %4781 = vmatmul.bf16.gmra.mxu0 %v2481
        %v4782 = vpop.f32.mrf.mxu0
        %v4783 = vadd.f32 %v4710, %v4782
        %v4784 = vpop.f32.mrf.mxu0
        %v4785 = vadd.f32 %v4712, %v4784
        %4786 = vmatmul.bf16.gmra.mxu0 %v2492
        %v4787 = vpop.f32.mrf.mxu0
        %v4788 = vadd.f32 %v4715, %v4787
        %v4789 = vpop.f32.mrf.mxu0
        %v4790 = vadd.f32 %v4717, %v4789
        %4791 = vmatmul.bf16.gmra.mxu0 %v2503
        %v4792 = vpop.f32.mrf.mxu0
        %v4793 = vadd.f32 %v4720, %v4792
        %v4794 = vpop.f32.mrf.mxu0
        %v4795 = vadd.f32 %v4722, %v4794
        %4796 = vmatmul.bf16.gmra.mxu0 %v2514
        %v4797 = vpop.f32.mrf.mxu0
        %v4798 = vadd.f32 %v4725, %v4797
        %v4799 = vpop.f32.mrf.mxu0
        %4800 = vdwg.mxu0
        %4801 = vmatpush.bf16.msra.mxu0 %v3283
        %4802 = vmatpush.bf16.msra.mxu0 %v3281
        %4803 = vmatpush.bf16.msra.mxu0 %v3279
        %4804 = vmatpush.bf16.msra.mxu0 %v3277
        %4805 = vmatpush.bf16.msra.mxu0 %v3275
        %4806 = vmatpush.bf16.msra.mxu0 %v3273
        %4807 = vmatpush.bf16.msra.mxu0 %v3271
        %4808 = vmatpush.bf16.msra.mxu0 %v3269
        %4809 = vmatmul.bf16.gmra.mxu0 %v2383
        %v4810 = vpop.f32.mrf.mxu0
        %v4811 = vadd.f32 %v4738, %v4810
        %v4812 = vpop.f32.mrf.mxu0
        %v4813 = vadd.f32 %v4740, %v4812
        %4814 = vmatmul.bf16.gmra.mxu0 %v2394
        %v4815 = vpop.f32.mrf.mxu0
        %v4816 = vadd.f32 %v4743, %v4815
        %v4817 = vpop.f32.mrf.mxu0
        %v4818 = vadd.f32 %v4745, %v4817
        %4819 = vmatmul.bf16.gmra.mxu0 %v2405
        %v4820 = vpop.f32.mrf.mxu0
        %v4821 = vadd.f32 %v4748, %v4820
        %v4822 = vpop.f32.mrf.mxu0
        %v4823 = vadd.f32 %v4750, %v4822
        %4824 = vmatmul.bf16.gmra.mxu0 %v2416
        %v4825 = vpop.f32.mrf.mxu0
        %v4826 = vadd.f32 %v4753, %v4825
        %v4827 = vpop.f32.mrf.mxu0
        %v4828 = vadd.f32 %v4755, %v4827
        %4829 = vmatmul.bf16.gmra.mxu0 %v2427
        %v4830 = vpop.f32.mrf.mxu0
        %v4831 = vadd.f32 %v4758, %v4830
        %v4832 = vpop.f32.mrf.mxu0
        %v4833 = vadd.f32 %v4760, %v4832
        %4834 = vmatmul.bf16.gmra.mxu0 %v2438
        %v4835 = vpop.f32.mrf.mxu0
        %v4836 = vadd.f32 %v4763, %v4835
        %v4837 = vpop.f32.mrf.mxu0
        %v4838 = vadd.f32 %v4765, %v4837
        %4839 = vmatmul.bf16.gmra.mxu0 %v2449
        %v4840 = vpop.f32.mrf.mxu0
        %v4841 = vadd.f32 %v4768, %v4840
        %v4842 = vpop.f32.mrf.mxu0
        %v4843 = vadd.f32 %v4770, %v4842
        %4844 = vmatmul.bf16.gmra.mxu0 %v2460
        %v4845 = vpop.f32.mrf.mxu0
        %v4846 = vadd.f32 %v4773, %v4845
        %v4847 = vpop.f32.mrf.mxu0
        %v4848 = vadd.f32 %v4775, %v4847
        %4849 = vmatmul.bf16.gmra.mxu0 %v2471
        %v4850 = vpop.f32.mrf.mxu0
        %v4851 = vadd.f32 %v4778, %v4850
        %v4852 = vpop.f32.mrf.mxu0
        %v4853 = vadd.f32 %v4780, %v4852
        %4854 = vmatmul.bf16.gmra.mxu0 %v2482
        %v4855 = vpop.f32.mrf.mxu0
        %v4856 = vadd.f32 %v4783, %v4855
        %v4857 = vpop.f32.mrf.mxu0
        %v4858 = vadd.f32 %v4785, %v4857
        %4859 = vmatmul.bf16.gmra.mxu0 %v2493
        %v4860 = vpop.f32.mrf.mxu0
        %v4861 = vadd.f32 %v4788, %v4860
        %v4862 = vpop.f32.mrf.mxu0
        %v4863 = vadd.f32 %v4790, %v4862
        %4864 = vmatmul.bf16.gmra.mxu0 %v2504
        %v4865 = vpop.f32.mrf.mxu0
        %v4866 = vadd.f32 %v4793, %v4865
        %v4867 = vpop.f32.mrf.mxu0
        %v4868 = vadd.f32 %v4795, %v4867
        %4869 = vmatmul.bf16.gmra.mxu0 %v2515
        %v4870 = vpop.f32.mrf.mxu0
        %v4871 = vadd.f32 %v4798, %v4870
        %v4872 = vpop.f32.mrf.mxu0
        %4873 = vdwg.mxu0
        %4874 = vmatpush.bf16.msra.mxu0 %v3299
        %4875 = vmatpush.bf16.msra.mxu0 %v3297
        %4876 = vmatpush.bf16.msra.mxu0 %v3295
        %4877 = vmatpush.bf16.msra.mxu0 %v3293
        %4878 = vmatpush.bf16.msra.mxu0 %v3291
        %4879 = vmatpush.bf16.msra.mxu0 %v3289
        %4880 = vmatpush.bf16.msra.mxu0 %v3287
        %4881 = vmatpush.bf16.msra.mxu0 %v3285
        %4882 = vmatmul.bf16.gmra.mxu0 %v2384
        %v4883 = vpop.f32.mrf.mxu0
        %v4884 = vadd.f32 %v4811, %v4883
        %v4885 = vpop.f32.mrf.mxu0
        %v4886 = vadd.f32 %v4813, %v4885
        %4887 = vmatmul.bf16.gmra.mxu0 %v2395
        %v4888 = vpop.f32.mrf.mxu0
        %v4889 = vadd.f32 %v4816, %v4888
        %v4890 = vpop.f32.mrf.mxu0
        %v4891 = vadd.f32 %v4818, %v4890
        %4892 = vmatmul.bf16.gmra.mxu0 %v2406
        %v4893 = vpop.f32.mrf.mxu0
        %v4894 = vadd.f32 %v4821, %v4893
        %v4895 = vpop.f32.mrf.mxu0
        %v4896 = vadd.f32 %v4823, %v4895
        %4897 = vmatmul.bf16.gmra.mxu0 %v2417
        %v4898 = vpop.f32.mrf.mxu0
        %v4899 = vadd.f32 %v4826, %v4898
        %v4900 = vpop.f32.mrf.mxu0
        %v4901 = vadd.f32 %v4828, %v4900
        %4902 = vmatmul.bf16.gmra.mxu0 %v2428
        %v4903 = vpop.f32.mrf.mxu0
        %v4904 = vadd.f32 %v4831, %v4903
        %v4905 = vpop.f32.mrf.mxu0
        %v4906 = vadd.f32 %v4833, %v4905
        %4907 = vmatmul.bf16.gmra.mxu0 %v2439
        %v4908 = vpop.f32.mrf.mxu0
        %v4909 = vadd.f32 %v4836, %v4908
        %v4910 = vpop.f32.mrf.mxu0
        %v4911 = vadd.f32 %v4838, %v4910
        %4912 = vmatmul.bf16.gmra.mxu0 %v2450
        %v4913 = vpop.f32.mrf.mxu0
        %v4914 = vadd.f32 %v4841, %v4913
        %v4915 = vpop.f32.mrf.mxu0
        %v4916 = vadd.f32 %v4843, %v4915
        %4917 = vmatmul.bf16.gmra.mxu0 %v2461
        %v4918 = vpop.f32.mrf.mxu0
        %v4919 = vadd.f32 %v4846, %v4918
        %v4920 = vpop.f32.mrf.mxu0
        %v4921 = vadd.f32 %v4848, %v4920
        %4922 = vmatmul.bf16.gmra.mxu0 %v2472
        %v4923 = vpop.f32.mrf.mxu0
        %v4924 = vadd.f32 %v4851, %v4923
        %v4925 = vpop.f32.mrf.mxu0
        %v4926 = vadd.f32 %v4853, %v4925
        %4927 = vmatmul.bf16.gmra.mxu0 %v2483
        %v4928 = vpop.f32.mrf.mxu0
        %v4929 = vadd.f32 %v4856, %v4928
        %v4930 = vpop.f32.mrf.mxu0
        %v4931 = vadd.f32 %v4858, %v4930
        %4932 = vmatmul.bf16.gmra.mxu0 %v2494
        %v4933 = vpop.f32.mrf.mxu0
        %v4934 = vadd.f32 %v4861, %v4933
        %v4935 = vpop.f32.mrf.mxu0
        %v4936 = vadd.f32 %v4863, %v4935
        %4937 = vmatmul.bf16.gmra.mxu0 %v2505
        %v4938 = vpop.f32.mrf.mxu0
        %v4939 = vadd.f32 %v4866, %v4938
        %v4940 = vpop.f32.mrf.mxu0
        %v4941 = vadd.f32 %v4868, %v4940
        %4942 = vmatmul.bf16.gmra.mxu0 %v2516
        %v4943 = vpop.f32.mrf.mxu0
        %v4944 = vadd.f32 %v4871, %v4943
        %v4945 = vpop.f32.mrf.mxu0
        %4946 = vdwg.mxu0
        %4947 = vmatpush.bf16.msra.mxu0 %v3315
        %4948 = vmatpush.bf16.msra.mxu0 %v3313
        %4949 = vmatpush.bf16.msra.mxu0 %v3311
        %4950 = vmatpush.bf16.msra.mxu0 %v3309
        %4951 = vmatpush.bf16.msra.mxu0 %v3307
        %4952 = vmatpush.bf16.msra.mxu0 %v3305
        %4953 = vmatpush.bf16.msra.mxu0 %v3303
        %4954 = vmatpush.bf16.msra.mxu0 %v3301
        %4955 = vmatmul.bf16.gmra.mxu0 %v2385
        %v4956 = vpop.f32.mrf.mxu0
        %v4957 = vadd.f32 %v4884, %v4956
        %v4958 = vpop.f32.mrf.mxu0
        %v4959 = vadd.f32 %v4886, %v4958
        %4960 = vmatmul.bf16.gmra.mxu0 %v2396
        %v4961 = vpop.f32.mrf.mxu0
        %v4962 = vadd.f32 %v4889, %v4961
        %v4963 = vpop.f32.mrf.mxu0
        %v4964 = vadd.f32 %v4891, %v4963
        %4965 = vmatmul.bf16.gmra.mxu0 %v2407
        %v4966 = vpop.f32.mrf.mxu0
        %v4967 = vadd.f32 %v4894, %v4966
        %v4968 = vpop.f32.mrf.mxu0
        %v4969 = vadd.f32 %v4896, %v4968
        %4970 = vmatmul.bf16.gmra.mxu0 %v2418
        %v4971 = vpop.f32.mrf.mxu0
        %v4972 = vadd.f32 %v4899, %v4971
        %v4973 = vpop.f32.mrf.mxu0
        %v4974 = vadd.f32 %v4901, %v4973
        %4975 = vmatmul.bf16.gmra.mxu0 %v2429
        %v4976 = vpop.f32.mrf.mxu0
        %v4977 = vadd.f32 %v4904, %v4976
        %v4978 = vpop.f32.mrf.mxu0
        %v4979 = vadd.f32 %v4906, %v4978
        %4980 = vmatmul.bf16.gmra.mxu0 %v2440
        %v4981 = vpop.f32.mrf.mxu0
        %v4982 = vadd.f32 %v4909, %v4981
        %v4983 = vpop.f32.mrf.mxu0
        %v4984 = vadd.f32 %v4911, %v4983
        %4985 = vmatmul.bf16.gmra.mxu0 %v2451
        %v4986 = vpop.f32.mrf.mxu0
        %v4987 = vadd.f32 %v4914, %v4986
        %v4988 = vpop.f32.mrf.mxu0
        %v4989 = vadd.f32 %v4916, %v4988
        %4990 = vmatmul.bf16.gmra.mxu0 %v2462
        %v4991 = vpop.f32.mrf.mxu0
        %v4992 = vadd.f32 %v4919, %v4991
        %v4993 = vpop.f32.mrf.mxu0
        %v4994 = vadd.f32 %v4921, %v4993
        %4995 = vmatmul.bf16.gmra.mxu0 %v2473
        %v4996 = vpop.f32.mrf.mxu0
        %v4997 = vadd.f32 %v4924, %v4996
        %v4998 = vpop.f32.mrf.mxu0
        %v4999 = vadd.f32 %v4926, %v4998
        %5000 = vmatmul.bf16.gmra.mxu0 %v2484
        %v5001 = vpop.f32.mrf.mxu0
        %v5002 = vadd.f32 %v4929, %v5001
        %v5003 = vpop.f32.mrf.mxu0
        %v5004 = vadd.f32 %v4931, %v5003
        %5005 = vmatmul.bf16.gmra.mxu0 %v2495
        %v5006 = vpop.f32.mrf.mxu0
        %v5007 = vadd.f32 %v4934, %v5006
        %v5008 = vpop.f32.mrf.mxu0
        %v5009 = vadd.f32 %v4936, %v5008
        %5010 = vmatmul.bf16.gmra.mxu0 %v2506
        %v5011 = vpop.f32.mrf.mxu0
        %v5012 = vadd.f32 %v4939, %v5011
        %v5013 = vpop.f32.mrf.mxu0
        %v5014 = vadd.f32 %v4941, %v5013
        %5015 = vmatmul.bf16.gmra.mxu0 %v2517
        %v5016 = vpop.f32.mrf.mxu0
        %v5017 = vadd.f32 %v4944, %v5016
        %v5018 = vpop.f32.mrf.mxu0
        %5019 = vdwg.mxu0
        %5020 = vmatpush.bf16.msra.mxu0 %v3331
        %5021 = vmatpush.bf16.msra.mxu0 %v3329
        %5022 = vmatpush.bf16.msra.mxu0 %v3327
        %5023 = vmatpush.bf16.msra.mxu0 %v3325
        %5024 = vmatpush.bf16.msra.mxu0 %v3323
        %5025 = vmatpush.bf16.msra.mxu0 %v3321
        %5026 = vmatpush.bf16.msra.mxu0 %v3319
        %5027 = vmatpush.bf16.msra.mxu0 %v3317
        %5028 = vmatmul.bf16.gmra.mxu0 %v2386
        %v5029 = vpop.f32.mrf.mxu0
        %v5030 = vadd.f32 %v4957, %v5029
        %v5031 = vpop.f32.mrf.mxu0
        %v5032 = vadd.f32 %v4959, %v5031
        %5033 = vmatmul.bf16.gmra.mxu0 %v2397
        %v5034 = vpop.f32.mrf.mxu0
        %v5035 = vadd.f32 %v4962, %v5034
        %v5036 = vpop.f32.mrf.mxu0
        %v5037 = vadd.f32 %v4964, %v5036
        %5038 = vmatmul.bf16.gmra.mxu0 %v2408
        %v5039 = vpop.f32.mrf.mxu0
        %v5040 = vadd.f32 %v4967, %v5039
        %v5041 = vpop.f32.mrf.mxu0
        %v5042 = vadd.f32 %v4969, %v5041
        %5043 = vmatmul.bf16.gmra.mxu0 %v2419
        %v5044 = vpop.f32.mrf.mxu0
        %v5045 = vadd.f32 %v4972, %v5044
        %v5046 = vpop.f32.mrf.mxu0
        %v5047 = vadd.f32 %v4974, %v5046
        %5048 = vmatmul.bf16.gmra.mxu0 %v2430
        %v5049 = vpop.f32.mrf.mxu0
        %v5050 = vadd.f32 %v4977, %v5049
        %v5051 = vpop.f32.mrf.mxu0
        %v5052 = vadd.f32 %v4979, %v5051
        %5053 = vmatmul.bf16.gmra.mxu0 %v2441
        %v5054 = vpop.f32.mrf.mxu0
        %v5055 = vadd.f32 %v4982, %v5054
        %v5056 = vpop.f32.mrf.mxu0
        %v5057 = vadd.f32 %v4984, %v5056
        %5058 = vmatmul.bf16.gmra.mxu0 %v2452
        %v5059 = vpop.f32.mrf.mxu0
        %v5060 = vadd.f32 %v4987, %v5059
        %v5061 = vpop.f32.mrf.mxu0
        %v5062 = vadd.f32 %v4989, %v5061
        %5063 = vmatmul.bf16.gmra.mxu0 %v2463
        %v5064 = vpop.f32.mrf.mxu0
        %v5065 = vadd.f32 %v4992, %v5064
        %v5066 = vpop.f32.mrf.mxu0
        %v5067 = vadd.f32 %v4994, %v5066
        %5068 = vmatmul.bf16.gmra.mxu0 %v2474
        %v5069 = vpop.f32.mrf.mxu0
        %v5070 = vadd.f32 %v4997, %v5069
        %v5071 = vpop.f32.mrf.mxu0
        %v5072 = vadd.f32 %v4999, %v5071
        %5073 = vmatmul.bf16.gmra.mxu0 %v2485
        %v5074 = vpop.f32.mrf.mxu0
        %v5075 = vadd.f32 %v5002, %v5074
        %v5076 = vpop.f32.mrf.mxu0
        %v5077 = vadd.f32 %v5004, %v5076
        %5078 = vmatmul.bf16.gmra.mxu0 %v2496
        %v5079 = vpop.f32.mrf.mxu0
        %v5080 = vadd.f32 %v5007, %v5079
        %v5081 = vpop.f32.mrf.mxu0
        %v5082 = vadd.f32 %v5009, %v5081
        %5083 = vmatmul.bf16.gmra.mxu0 %v2507
        %v5084 = vpop.f32.mrf.mxu0
        %v5085 = vadd.f32 %v5012, %v5084
        %v5086 = vpop.f32.mrf.mxu0
        %v5087 = vadd.f32 %v5014, %v5086
        %5088 = vmatmul.bf16.gmra.mxu0 %v2518
        %v5089 = vpop.f32.mrf.mxu0
        %v5090 = vadd.f32 %v5017, %v5089
        %v5091 = vpop.f32.mrf.mxu0
        %5092 = vdwg.mxu0
        %5093 = vmatpush.bf16.msra.mxu0 0
        %5094 = vmatpush.bf16.msra.mxu0 %v3345
        %5095 = vmatpush.bf16.msra.mxu0 %v3343
        %5096 = vmatpush.bf16.msra.mxu0 %v3341
        %5097 = vmatpush.bf16.msra.mxu0 %v3339
        %5098 = vmatpush.bf16.msra.mxu0 %v3337
        %5099 = vmatpush.bf16.msra.mxu0 %v3335
        %5100 = vmatpush.bf16.msra.mxu0 %v3333
        %5101 = vmatmul.bf16.gmra.mxu0 %v3522
        %v5102 = vpop.f32.mrf.mxu0
        %v5103 = vadd.f32 %v5030, %v5102
        %v5104 = vpop.f32.mrf.mxu0
        %v5105 = vadd.f32 %v5032, %v5104
        %5106 = vmatmul.bf16.gmra.mxu0 %v3525
        %v5107 = vpop.f32.mrf.mxu0
        %v5108 = vadd.f32 %v5035, %v5107
        %v5109 = vpop.f32.mrf.mxu0
        %v5110 = vadd.f32 %v5037, %v5109
        %5111 = vmatmul.bf16.gmra.mxu0 %v3528
        %v5112 = vpop.f32.mrf.mxu0
        %v5113 = vadd.f32 %v5040, %v5112
        %v5114 = vpop.f32.mrf.mxu0
        %v5115 = vadd.f32 %v5042, %v5114
        %5116 = vmatmul.bf16.gmra.mxu0 %v3531
        %v5117 = vpop.f32.mrf.mxu0
        %v5118 = vadd.f32 %v5045, %v5117
        %v5119 = vpop.f32.mrf.mxu0
        %v5120 = vadd.f32 %v5047, %v5119
        %5121 = vmatmul.bf16.gmra.mxu0 %v3534
        %v5122 = vpop.f32.mrf.mxu0
        %v5123 = vadd.f32 %v5050, %v5122
        %v5124 = vpop.f32.mrf.mxu0
        %v5125 = vadd.f32 %v5052, %v5124
        %5126 = vmatmul.bf16.gmra.mxu0 %v3537
        %v5127 = vpop.f32.mrf.mxu0
        %v5128 = vadd.f32 %v5055, %v5127
        %v5129 = vpop.f32.mrf.mxu0
        %v5130 = vadd.f32 %v5057, %v5129
        %5131 = vmatmul.bf16.gmra.mxu0 %v3540
        %v5132 = vpop.f32.mrf.mxu0
        %v5133 = vadd.f32 %v5060, %v5132
        %v5134 = vpop.f32.mrf.mxu0
        %v5135 = vadd.f32 %v5062, %v5134
        %5136 = vmatmul.bf16.gmra.mxu0 %v3543
        %v5137 = vpop.f32.mrf.mxu0
        %v5138 = vadd.f32 %v5065, %v5137
        %v5139 = vpop.f32.mrf.mxu0
        %v5140 = vadd.f32 %v5067, %v5139
        %5141 = vmatmul.bf16.gmra.mxu0 %v3546
        %v5142 = vpop.f32.mrf.mxu0
        %v5143 = vadd.f32 %v5070, %v5142
        %v5144 = vpop.f32.mrf.mxu0
        %v5145 = vadd.f32 %v5072, %v5144
        %5146 = vmatmul.bf16.gmra.mxu0 %v3549
        %v5147 = vpop.f32.mrf.mxu0
        %v5148 = vadd.f32 %v5075, %v5147
        %v5149 = vpop.f32.mrf.mxu0
        %v5150 = vadd.f32 %v5077, %v5149
        %5151 = vmatmul.bf16.gmra.mxu0 %v3552
        %v5152 = vpop.f32.mrf.mxu0
        %v5153 = vadd.f32 %v5080, %v5152
        %v5154 = vpop.f32.mrf.mxu0
        %v5155 = vadd.f32 %v5082, %v5154
        %5156 = vmatmul.bf16.gmra.mxu0 %v3555
        %v5157 = vpop.f32.mrf.mxu0
        %v5158 = vadd.f32 %v5085, %v5157
        %v5159 = vpop.f32.mrf.mxu0
        %v5160 = vadd.f32 %v5087, %v5159
        %5161 = vmatmul.bf16.gmra.mxu0 %v3558
        %v5162 = vpop.f32.mrf.mxu0
        %v5163 = vadd.f32 %v5090, %v5162
        %v5164 = vpop.f32.mrf.mxu0
        %5165 = vdwg.mxu0
        %5166 = vst [vmem:[%s1616] sm:$0xff] %v4300
        %5167 = vst [vmem:[%s1616 + $0x8] sm:$0xff] %v5103
        %5168 = vst [vmem:[%s1616 + $0x10] sm:$0xff] %v4302
        %5169 = vst [vmem:[%s1616 + $0x18] sm:$0xff] %v5105
        %5170 = vst [vmem:[%s1616 + $0x20] sm:$0xff] %v4305
        %5171 = vst [vmem:[%s1616 + $0x28] sm:$0xff] %v5108
        %5172 = vst [vmem:[%s1616 + $0x30] sm:$0xff] %v4307
        %5173 = vst [vmem:[%s1616 + $0x38] sm:$0xff] %v5110
        %5174 = vst [vmem:[%s1616 + $0x40] sm:$0xff] %v4310
        %5175 = vst [vmem:[%s1616 + $0x48] sm:$0xff] %v5113
        %5176 = vst [vmem:[%s1616 + $0x50] sm:$0xff] %v4312
        %5177 = vst [vmem:[%s1616 + $0x58] sm:$0xff] %v5115
        %5178 = vst [vmem:[%s1616 + $0x60] sm:$0xff] %v4315
        %5179 = vst [vmem:[%s1616 + $0x68] sm:$0xff] %v5118
        %5180 = vst [vmem:[%s1616 + $0x70] sm:$0xff] %v4317
        %5181 = vst [vmem:[%s1616 + $0x78] sm:$0xff] %v5120
        %5182 = vst [vmem:[%s1616 + $0x80] sm:$0xff] %v4320
        %5183 = vst [vmem:[%s1616 + $0x88] sm:$0xff] %v5123
        %5184 = vst [vmem:[%s1616 + $0x90] sm:$0xff] %v4322
        %5185 = vst [vmem:[%s1616 + $0x98] sm:$0xff] %v5125
        %5186 = vst [vmem:[%s1616 + $0xa0] sm:$0xff] %v4325
        %5187 = vst [vmem:[%s1616 + $0xa8] sm:$0xff] %v5128
        %5188 = vst [vmem:[%s1616 + $0xb0] sm:$0xff] %v4327
        %5189 = vst [vmem:[%s1616 + $0xb8] sm:$0xff] %v5130
        %5190 = vst [vmem:[%s1616 + $0xc0] sm:$0xff] %v4330
        %5191 = vst [vmem:[%s1616 + $0xc8] sm:$0xff] %v5133
        %5192 = vst [vmem:[%s1616 + $0xd0] sm:$0xff] %v4332
        %5193 = vst [vmem:[%s1616 + $0xd8] sm:$0xff] %v5135
        %5194 = vst [vmem:[%s1616 + $0xe0] sm:$0xff] %v4335
        %5195 = vst [vmem:[%s1616 + $0xe8] sm:$0xff] %v5138
        %5196 = vst [vmem:[%s1616 + $0xf0] sm:$0xff] %v4337
        %5197 = vst [vmem:[%s1616 + $0xf8] sm:$0xff] %v5140
        %5198 = vst [vmem:[%s1616 + $0x100] sm:$0xff] %v4340
        %5199 = vst [vmem:[%s1616 + $0x108] sm:$0xff] %v5143
        %5200 = vst [vmem:[%s1616 + $0x110] sm:$0xff] %v4342
        %5201 = vst [vmem:[%s1616 + $0x118] sm:$0xff] %v5145
        %5202 = vst [vmem:[%s1616 + $0x120] sm:$0xff] %v4345
        %5203 = vst [vmem:[%s1616 + $0x128] sm:$0xff] %v5148
        %5204 = vst [vmem:[%s1616 + $0x130] sm:$0xff] %v4347
        %5205 = vst [vmem:[%s1616 + $0x138] sm:$0xff] %v5150
        %5206 = vst [vmem:[%s1616 + $0x140] sm:$0xff] %v4350
        %5207 = vst [vmem:[%s1616 + $0x148] sm:$0xff] %v5153
        %5208 = vst [vmem:[%s1616 + $0x150] sm:$0xff] %v4352
        %5209 = vst [vmem:[%s1616 + $0x158] sm:$0xff] %v5155
        %5210 = vst [vmem:[%s1616 + $0x160] sm:$0xff] %v4355
        %5211 = vst [vmem:[%s1616 + $0x168] sm:$0xff] %v5158
        %5212 = vst [vmem:[%s1616 + $0x170] sm:$0xff] %v4357
        %5213 = vst [vmem:[%s1616 + $0x178] sm:$0xff] %v5160
        %5214 = vst [vmem:[%s1616 + $0x180] sm:$0xf] %v4360
        %5215 = vst [vmem:[%s1616 + $0x188] sm:$0xf] %v5163
        %s5216 = sand.u32 %s68, 1
        %s5217 = sand.u32 %s68, 1
        %s5218 = smul.addr %s5217, 400
        %s5219 = scalar_lea.vmem [#allocation3], %s5218
        // Predicated region
        $region81: #{conv2d_1x1.1} parent=75 // pred_check
          %p5220 = pneg %p78
        $region82: #{conv2d_1x1.1} parent=75 // pred_check_branch
          %5222 = sbr.rel (%p5220) target = $region84
        $region83: #{conv2d_1x1.1} parent=75 // pred_region
          %s5223 = smul.u32 2, %s13
          %s5224 = ssub.s32 11, %s5223
          %p5225 = scmp.lt.s32.totalorder %s5224, 2
          %s5226 = scalar_select %p5225, %s5224, 2
          %s5227 = smul.u32 200, %s5226
          %p5228 = scmp.ne.s32.totalorder 0, %s5227
          %s5229 = smul.addr %s5223, 8
          %s5230 = scalar_lea.vmem %s2, %s5229
          %s5231 = smul.u32 %s5226, 8
          // Predicated region
          $region85: #{conv2d_1x1.1} parent=83 // pred_check
            %p5232 = pneg %p5228
          $region86: #{conv2d_1x1.1} parent=83 // pred_check_branch
            %5234 = sbr.rel (%p5232) target = $region88
          $region87: #{conv2d_1x1.1} parent=83 // pred_region
            %p5235 = scmp.lt.u32.totalorder %s5231, 8
            %p5236 = pneg %p5235
            // Predicated region
            $region89: #{conv2d_1x1.1} parent=87 // pred_check
              _
            $region90: #{conv2d_1x1.1} parent=87 // pred_check_branch
              %5238 = sbr.rel (%p5235) target = $region92
            $region91: #{conv2d_1x1.1} parent=87 // pred_region
              %s5302 = sand.u32 %s5231, 7
              %p5303 = scmp.eq.s32.totalorder %s5302, 0
              // Predicated region
              $region104: #{conv2d_1x1.1} parent=91 // pred_check
                %p5304 = pneg %p5303
              $region105: #{conv2d_1x1.1} parent=91 // pred_check_branch
                %5306 = sbr.rel (%p5304) target = $region107
              $region106: #{conv2d_1x1.1} parent=91 // pred_region
                %s5307 = sshrl.u32 %s5231, 3
                %s5308 = sshrl.u32 %s5307, 1
                // While loop
                $region108: #{conv2d_1x1.1} parent=106 // loop_pre_header
                  _
                $region109: #{conv2d_1x1.1} parent=106 // loop_header
                  %s5310 = sphi 0, %s5312
                  %p5311 = scmp.ge.s32.totalorder %s5310, %s5308
                  %s5315 = sphi 0, %s5420
                  %s5316 = sphi %s5219, %s5423
                  %s5317 = sphi %s5230, %s5424
                $region110: #{conv2d_1x1.1} parent=106 // loop_header_branch
                  %5314 = sbr.rel (%p5311) target = $region114
                $region111: #{conv2d_1x1.1} parent=106 // loop_body
                  %v5318 = vld [vmem:[%s5316] sm:$0xff]
                  %5319 = vst [vmem:[%s5317] sm:$0xff] %v5318
                  %v5320 = vld [vmem:[%s5316 + $0x8] sm:$0xff]
                  %5321 = vst [vmem:[%s5317 + $0x8] sm:$0xff] %v5320
                  %v5322 = vld [vmem:[%s5316 + $0x10] sm:$0xff]
                  %5323 = vst [vmem:[%s5317 + $0x58] sm:$0xff] %v5322
                  %v5324 = vld [vmem:[%s5316 + $0x18] sm:$0xff]
                  %5325 = vst [vmem:[%s5317 + $0x60] sm:$0xff] %v5324
                  %v5326 = vld [vmem:[%s5316 + $0x20] sm:$0xff]
                  %5327 = vst [vmem:[%s5317 + $0xb0] sm:$0xff] %v5326
                  %v5328 = vld [vmem:[%s5316 + $0x28] sm:$0xff]
                  %5329 = vst [vmem:[%s5317 + $0xb8] sm:$0xff] %v5328
                  %v5330 = vld [vmem:[%s5316 + $0x30] sm:$0xff]
                  %5331 = vst [vmem:[%s5317 + $0x108] sm:$0xff] %v5330
                  %v5332 = vld [vmem:[%s5316 + $0x38] sm:$0xff]
                  %5333 = vst [vmem:[%s5317 + $0x110] sm:$0xff] %v5332
                  %v5334 = vld [vmem:[%s5316 + $0x40] sm:$0xff]
                  %5335 = vst [vmem:[%s5317 + $0x160] sm:$0xff] %v5334
                  %v5336 = vld [vmem:[%s5316 + $0x48] sm:$0xff]
                  %5337 = vst [vmem:[%s5317 + $0x168] sm:$0xff] %v5336
                  %v5338 = vld [vmem:[%s5316 + $0x50] sm:$0xff]
                  %5339 = vst [vmem:[%s5317 + $0x1b8] sm:$0xff] %v5338
                  %v5340 = vld [vmem:[%s5316 + $0x58] sm:$0xff]
                  %5341 = vst [vmem:[%s5317 + $0x1c0] sm:$0xff] %v5340
                  %v5342 = vld [vmem:[%s5316 + $0x60] sm:$0xff]
                  %5343 = vst [vmem:[%s5317 + $0x210] sm:$0xff] %v5342
                  %v5344 = vld [vmem:[%s5316 + $0x68] sm:$0xff]
                  %5345 = vst [vmem:[%s5317 + $0x218] sm:$0xff] %v5344
                  %v5346 = vld [vmem:[%s5316 + $0x70] sm:$0xff]
                  %5347 = vst [vmem:[%s5317 + $0x268] sm:$0xff] %v5346
                  %v5348 = vld [vmem:[%s5316 + $0x78] sm:$0xff]
                  %5349 = vst [vmem:[%s5317 + $0x270] sm:$0xff] %v5348
                  %v5350 = vld [vmem:[%s5316 + $0x80] sm:$0xff]
                  %5351 = vst [vmem:[%s5317 + $0x2c0] sm:$0xff] %v5350
                  %v5352 = vld [vmem:[%s5316 + $0x88] sm:$0xff]
                  %5353 = vst [vmem:[%s5317 + $0x2c8] sm:$0xff] %v5352
                  %v5354 = vld [vmem:[%s5316 + $0x90] sm:$0xff]
                  %5355 = vst [vmem:[%s5317 + $0x318] sm:$0xff] %v5354
                  %v5356 = vld [vmem:[%s5316 + $0x98] sm:$0xff]
                  %5357 = vst [vmem:[%s5317 + $0x320] sm:$0xff] %v5356
                  %v5358 = vld [vmem:[%s5316 + $0xa0] sm:$0xff]
                  %5359 = vst [vmem:[%s5317 + $0x370] sm:$0xff] %v5358
                  %v5360 = vld [vmem:[%s5316 + $0xa8] sm:$0xff]
                  %5361 = vst [vmem:[%s5317 + $0x378] sm:$0xff] %v5360
                  %v5362 = vld [vmem:[%s5316 + $0xb0] sm:$0xff]
                  %5363 = vst [vmem:[%s5317 + $0x3c8] sm:$0xff] %v5362
                  %v5364 = vld [vmem:[%s5316 + $0xb8] sm:$0xff]
                  %5365 = vst [vmem:[%s5317 + $0x3d0] sm:$0xff] %v5364
                  %v5366 = vld [vmem:[%s5316 + $0xc0] sm:$0xff]
                  %5367 = vst [vmem:[%s5317 + $0x420] sm:$0xff] %v5366
                  %v5368 = vld [vmem:[%s5316 + $0xc8] sm:$0xff]
                  %5369 = vst [vmem:[%s5317 + $0x428] sm:$0xff] %v5368
                  %v5370 = vld [vmem:[%s5316 + $0xd0] sm:$0xff]
                  %5371 = vst [vmem:[%s5317 + $0x478] sm:$0xff] %v5370
                  %v5372 = vld [vmem:[%s5316 + $0xd8] sm:$0xff]
                  %5373 = vst [vmem:[%s5317 + $0x480] sm:$0xff] %v5372
                  %v5374 = vld [vmem:[%s5316 + $0xe0] sm:$0xff]
                  %5375 = vst [vmem:[%s5317 + $0x4d0] sm:$0xff] %v5374
                  %v5376 = vld [vmem:[%s5316 + $0xe8] sm:$0xff]
                  %5377 = vst [vmem:[%s5317 + $0x4d8] sm:$0xff] %v5376
                  %v5378 = vld [vmem:[%s5316 + $0xf0] sm:$0xff]
                  %5379 = vst [vmem:[%s5317 + $0x528] sm:$0xff] %v5378
                  %v5380 = vld [vmem:[%s5316 + $0xf8] sm:$0xff]
                  %5381 = vst [vmem:[%s5317 + $0x530] sm:$0xff] %v5380
                  %v5382 = vld [vmem:[%s5316 + $0x100] sm:$0xff]
                  %5383 = vst [vmem:[%s5317 + $0x580] sm:$0xff] %v5382
                  %v5384 = vld [vmem:[%s5316 + $0x108] sm:$0xff]
                  %5385 = vst [vmem:[%s5317 + $0x588] sm:$0xff] %v5384
                  %v5386 = vld [vmem:[%s5316 + $0x110] sm:$0xff]
                  %5387 = vst [vmem:[%s5317 + $0x5d8] sm:$0xff] %v5386
                  %v5388 = vld [vmem:[%s5316 + $0x118] sm:$0xff]
                  %5389 = vst [vmem:[%s5317 + $0x5e0] sm:$0xff] %v5388
                  %v5390 = vld [vmem:[%s5316 + $0x120] sm:$0xff]
                  %5391 = vst [vmem:[%s5317 + $0x630] sm:$0xff] %v5390
                  %v5392 = vld [vmem:[%s5316 + $0x128] sm:$0xff]
                  %5393 = vst [vmem:[%s5317 + $0x638] sm:$0xff] %v5392
                  %v5394 = vld [vmem:[%s5316 + $0x130] sm:$0xff]
                  %5395 = vst [vmem:[%s5317 + $0x688] sm:$0xff] %v5394
                  %v5396 = vld [vmem:[%s5316 + $0x138] sm:$0xff]
                  %5397 = vst [vmem:[%s5317 + $0x690] sm:$0xff] %v5396
                  %v5398 = vld [vmem:[%s5316 + $0x140] sm:$0xff]
                  %5399 = vst [vmem:[%s5317 + $0x6e0] sm:$0xff] %v5398
                  %v5400 = vld [vmem:[%s5316 + $0x148] sm:$0xff]
                  %5401 = vst [vmem:[%s5317 + $0x6e8] sm:$0xff] %v5400
                  %v5402 = vld [vmem:[%s5316 + $0x150] sm:$0xff]
                  %5403 = vst [vmem:[%s5317 + $0x738] sm:$0xff] %v5402
                  %v5404 = vld [vmem:[%s5316 + $0x158] sm:$0xff]
                  %5405 = vst [vmem:[%s5317 + $0x740] sm:$0xff] %v5404
                  %v5406 = vld [vmem:[%s5316 + $0x160] sm:$0xff]
                  %5407 = vst [vmem:[%s5317 + $0x790] sm:$0xff] %v5406
                  %v5408 = vld [vmem:[%s5316 + $0x168] sm:$0xff]
                  %5409 = vst [vmem:[%s5317 + $0x798] sm:$0xff] %v5408
                  %v5410 = vld [vmem:[%s5316 + $0x170] sm:$0xff]
                  %5411 = vst [vmem:[%s5317 + $0x7e8] sm:$0xff] %v5410
                  %v5412 = vld [vmem:[%s5316 + $0x178] sm:$0xff]
                  %5413 = vst [vmem:[%s5317 + $0x7f0] sm:$0xff] %v5412
                  %v5414 = vld [vmem:[%s5316 + $0x180] sm:$0xff]
                  %5415 = vst [vmem:[%s5317 + $0x840] sm:$0xff] %v5414
                  %v5416 = vld [vmem:[%s5316 + $0x188] sm:$0xff]
                  %5417 = vst [vmem:[%s5317 + $0x848] sm:$0xff] %v5416
                  %s5418 = sadd.s32 1, %s5315
                  %p5419 = scmp.ge.s32.totalorder %s5418, %s5308
                  %s5420 = scalar_select %p5419, 0, %s5418
                  %s5421 = smul.u32 %s5420, 16
                  %s5422 = smul.u32 %s5420, 16
                  %s5423 = scalar_lea.vmem %s5219, %s5421 [#allocation3]
                  %s5424 = scalar_lea.vmem %s5230, %s5422
                $region112: #{conv2d_1x1.1} parent=106 // loop_footer
                  %s5312 = sadd.s32 %s5310, 1
                $region113: #{conv2d_1x1.1} parent=106 // loop_footer_branch
                  %5309 = sbr.rel target = $region109
                $region114: #{conv2d_1x1.1} parent=106 // loop_exit
                  _
                %s5425 = sshrl.u32 %s5307, 1
                %s5426 = sand.u32 %s5307, 1
                %s5427 = smul.u32 %s5425, 2
                %s5428 = smul.u32 8, %s5427
                %s5429 = scalar_lea.vmem %s5219, %s5428 [#allocation3]
                %s5430 = smul.u32 8, %s5427
                %s5431 = scalar_lea.vmem %s5230, %s5430
                // While loop
                $region115: #{conv2d_1x1.1} parent=106 // loop_pre_header
                  _
                $region116: #{conv2d_1x1.1} parent=106 // loop_header
                  %s5433 = sphi 0, %s5435
                  %p5434 = scmp.ge.s32.totalorder %s5433, %s5426
                  %s5438 = sphi 0, %s5493
                  %s5439 = sphi %s5429, %s5496
                  %s5440 = sphi %s5431, %s5497
                $region117: #{conv2d_1x1.1} parent=106 // loop_header_branch
                  %5437 = sbr.rel (%p5434) target = $region121
                $region118: #{conv2d_1x1.1} parent=106 // loop_body
                  %v5441 = vld [vmem:[%s5439] sm:$0xff]
                  %5442 = vst [vmem:[%s5440] sm:$0xff] %v5441
                  %v5443 = vld [vmem:[%s5439 + $0x10] sm:$0xff]
                  %5444 = vst [vmem:[%s5440 + $0x58] sm:$0xff] %v5443
                  %v5445 = vld [vmem:[%s5439 + $0x20] sm:$0xff]
                  %5446 = vst [vmem:[%s5440 + $0xb0] sm:$0xff] %v5445
                  %v5447 = vld [vmem:[%s5439 + $0x30] sm:$0xff]
                  %5448 = vst [vmem:[%s5440 + $0x108] sm:$0xff] %v5447
                  %v5449 = vld [vmem:[%s5439 + $0x40] sm:$0xff]
                  %5450 = vst [vmem:[%s5440 + $0x160] sm:$0xff] %v5449
                  %v5451 = vld [vmem:[%s5439 + $0x50] sm:$0xff]
                  %5452 = vst [vmem:[%s5440 + $0x1b8] sm:$0xff] %v5451
                  %v5453 = vld [vmem:[%s5439 + $0x60] sm:$0xff]
                  %5454 = vst [vmem:[%s5440 + $0x210] sm:$0xff] %v5453
                  %v5455 = vld [vmem:[%s5439 + $0x70] sm:$0xff]
                  %5456 = vst [vmem:[%s5440 + $0x268] sm:$0xff] %v5455
                  %v5457 = vld [vmem:[%s5439 + $0x80] sm:$0xff]
                  %5458 = vst [vmem:[%s5440 + $0x2c0] sm:$0xff] %v5457
                  %v5459 = vld [vmem:[%s5439 + $0x90] sm:$0xff]
                  %5460 = vst [vmem:[%s5440 + $0x318] sm:$0xff] %v5459
                  %v5461 = vld [vmem:[%s5439 + $0xa0] sm:$0xff]
                  %5462 = vst [vmem:[%s5440 + $0x370] sm:$0xff] %v5461
                  %v5463 = vld [vmem:[%s5439 + $0xb0] sm:$0xff]
                  %5464 = vst [vmem:[%s5440 + $0x3c8] sm:$0xff] %v5463
                  %v5465 = vld [vmem:[%s5439 + $0xc0] sm:$0xff]
                  %5466 = vst [vmem:[%s5440 + $0x420] sm:$0xff] %v5465
                  %v5467 = vld [vmem:[%s5439 + $0xd0] sm:$0xff]
                  %5468 = vst [vmem:[%s5440 + $0x478] sm:$0xff] %v5467
                  %v5469 = vld [vmem:[%s5439 + $0xe0] sm:$0xff]
                  %5470 = vst [vmem:[%s5440 + $0x4d0] sm:$0xff] %v5469
                  %v5471 = vld [vmem:[%s5439 + $0xf0] sm:$0xff]
                  %5472 = vst [vmem:[%s5440 + $0x528] sm:$0xff] %v5471
                  %v5473 = vld [vmem:[%s5439 + $0x100] sm:$0xff]
                  %5474 = vst [vmem:[%s5440 + $0x580] sm:$0xff] %v5473
                  %v5475 = vld [vmem:[%s5439 + $0x110] sm:$0xff]
                  %5476 = vst [vmem:[%s5440 + $0x5d8] sm:$0xff] %v5475
                  %v5477 = vld [vmem:[%s5439 + $0x120] sm:$0xff]
                  %5478 = vst [vmem:[%s5440 + $0x630] sm:$0xff] %v5477
                  %v5479 = vld [vmem:[%s5439 + $0x130] sm:$0xff]
                  %5480 = vst [vmem:[%s5440 + $0x688] sm:$0xff] %v5479
                  %v5481 = vld [vmem:[%s5439 + $0x140] sm:$0xff]
                  %5482 = vst [vmem:[%s5440 + $0x6e0] sm:$0xff] %v5481
                  %v5483 = vld [vmem:[%s5439 + $0x150] sm:$0xff]
                  %5484 = vst [vmem:[%s5440 + $0x738] sm:$0xff] %v5483
                  %v5485 = vld [vmem:[%s5439 + $0x160] sm:$0xff]
                  %5486 = vst [vmem:[%s5440 + $0x790] sm:$0xff] %v5485
                  %v5487 = vld [vmem:[%s5439 + $0x170] sm:$0xff]
                  %5488 = vst [vmem:[%s5440 + $0x7e8] sm:$0xff] %v5487
                  %v5489 = vld [vmem:[%s5439 + $0x180] sm:$0xff]
                  %5490 = vst [vmem:[%s5440 + $0x840] sm:$0xff] %v5489
                  %s5491 = sadd.s32 1, %s5438
                  %p5492 = scmp.ge.s32.totalorder %s5491, %s5426
                  %s5493 = scalar_select %p5492, 0, %s5491
                  %s5494 = smul.u32 %s5493, 8
                  %s5495 = smul.u32 %s5493, 8
                  %s5496 = scalar_lea.vmem %s5429, %s5494 [#allocation3]
                  %s5497 = scalar_lea.vmem %s5431, %s5495
                $region119: #{conv2d_1x1.1} parent=106 // loop_footer
                  %s5435 = sadd.s32 %s5433, 1
                $region120: #{conv2d_1x1.1} parent=106 // loop_footer_branch
                  %5432 = sbr.rel target = $region116
                $region121: #{conv2d_1x1.1} parent=106 // loop_exit
                  _
              $region107: #{conv2d_1x1.1} parent=91 // pred_fallthru
                _
              %p5498 = pneg %p5303
              // Predicated region
              $region122: #{conv2d_1x1.1} parent=91 // pred_check
                _
              $region123: #{conv2d_1x1.1} parent=91 // pred_check_branch
                %5500 = sbr.rel (%p5303) target = $region125
              $region124: #{conv2d_1x1.1} parent=91 // pred_region
                %s5501 = sand.u32 %s5231, 7
                %s5502 = ssub.s32 %s5231, %s5501
                %s5503 = scalar_lea.vmem %s5219, %s5502 [#allocation3]
                %s5504 = ssub.s32 %s5231, %s5501
                %s5505 = scalar_lea.vmem %s5230, %s5504
                %s5506 = sshrl.u32 %s5231, 3
                %s5507 = sshrl.u32 %s5506, 1
                // While loop
                $region126: #{conv2d_1x1.1} parent=124 // loop_pre_header
                  _
                $region127: #{conv2d_1x1.1} parent=124 // loop_header
                  %s5509 = sphi 0, %s5511
                  %p5510 = scmp.ge.s32.totalorder %s5509, %s5507
                  %s5514 = sphi 0, %s5619
                  %s5515 = sphi %s5219, %s5622
                  %s5516 = sphi %s5230, %s5623
                $region128: #{conv2d_1x1.1} parent=124 // loop_header_branch
                  %5513 = sbr.rel (%p5510) target = $region132
                $region129: #{conv2d_1x1.1} parent=124 // loop_body
                  %v5517 = vld [vmem:[%s5515] sm:$0xff]
                  %5518 = vst [vmem:[%s5516] sm:$0xff] %v5517
                  %v5519 = vld [vmem:[%s5515 + $0x8] sm:$0xff]
                  %5520 = vst [vmem:[%s5516 + $0x8] sm:$0xff] %v5519
                  %v5521 = vld [vmem:[%s5515 + $0x10] sm:$0xff]
                  %5522 = vst [vmem:[%s5516 + $0x58] sm:$0xff] %v5521
                  %v5523 = vld [vmem:[%s5515 + $0x18] sm:$0xff]
                  %5524 = vst [vmem:[%s5516 + $0x60] sm:$0xff] %v5523
                  %v5525 = vld [vmem:[%s5515 + $0x20] sm:$0xff]
                  %5526 = vst [vmem:[%s5516 + $0xb0] sm:$0xff] %v5525
                  %v5527 = vld [vmem:[%s5515 + $0x28] sm:$0xff]
                  %5528 = vst [vmem:[%s5516 + $0xb8] sm:$0xff] %v5527
                  %v5529 = vld [vmem:[%s5515 + $0x30] sm:$0xff]
                  %5530 = vst [vmem:[%s5516 + $0x108] sm:$0xff] %v5529
                  %v5531 = vld [vmem:[%s5515 + $0x38] sm:$0xff]
                  %5532 = vst [vmem:[%s5516 + $0x110] sm:$0xff] %v5531
                  %v5533 = vld [vmem:[%s5515 + $0x40] sm:$0xff]
                  %5534 = vst [vmem:[%s5516 + $0x160] sm:$0xff] %v5533
                  %v5535 = vld [vmem:[%s5515 + $0x48] sm:$0xff]
                  %5536 = vst [vmem:[%s5516 + $0x168] sm:$0xff] %v5535
                  %v5537 = vld [vmem:[%s5515 + $0x50] sm:$0xff]
                  %5538 = vst [vmem:[%s5516 + $0x1b8] sm:$0xff] %v5537
                  %v5539 = vld [vmem:[%s5515 + $0x58] sm:$0xff]
                  %5540 = vst [vmem:[%s5516 + $0x1c0] sm:$0xff] %v5539
                  %v5541 = vld [vmem:[%s5515 + $0x60] sm:$0xff]
                  %5542 = vst [vmem:[%s5516 + $0x210] sm:$0xff] %v5541
                  %v5543 = vld [vmem:[%s5515 + $0x68] sm:$0xff]
                  %5544 = vst [vmem:[%s5516 + $0x218] sm:$0xff] %v5543
                  %v5545 = vld [vmem:[%s5515 + $0x70] sm:$0xff]
                  %5546 = vst [vmem:[%s5516 + $0x268] sm:$0xff] %v5545
                  %v5547 = vld [vmem:[%s5515 + $0x78] sm:$0xff]
                  %5548 = vst [vmem:[%s5516 + $0x270] sm:$0xff] %v5547
                  %v5549 = vld [vmem:[%s5515 + $0x80] sm:$0xff]
                  %5550 = vst [vmem:[%s5516 + $0x2c0] sm:$0xff] %v5549
                  %v5551 = vld [vmem:[%s5515 + $0x88] sm:$0xff]
                  %5552 = vst [vmem:[%s5516 + $0x2c8] sm:$0xff] %v5551
                  %v5553 = vld [vmem:[%s5515 + $0x90] sm:$0xff]
                  %5554 = vst [vmem:[%s5516 + $0x318] sm:$0xff] %v5553
                  %v5555 = vld [vmem:[%s5515 + $0x98] sm:$0xff]
                  %5556 = vst [vmem:[%s5516 + $0x320] sm:$0xff] %v5555
                  %v5557 = vld [vmem:[%s5515 + $0xa0] sm:$0xff]
                  %5558 = vst [vmem:[%s5516 + $0x370] sm:$0xff] %v5557
                  %v5559 = vld [vmem:[%s5515 + $0xa8] sm:$0xff]
                  %5560 = vst [vmem:[%s5516 + $0x378] sm:$0xff] %v5559
                  %v5561 = vld [vmem:[%s5515 + $0xb0] sm:$0xff]
                  %5562 = vst [vmem:[%s5516 + $0x3c8] sm:$0xff] %v5561
                  %v5563 = vld [vmem:[%s5515 + $0xb8] sm:$0xff]
                  %5564 = vst [vmem:[%s5516 + $0x3d0] sm:$0xff] %v5563
                  %v5565 = vld [vmem:[%s5515 + $0xc0] sm:$0xff]
                  %5566 = vst [vmem:[%s5516 + $0x420] sm:$0xff] %v5565
                  %v5567 = vld [vmem:[%s5515 + $0xc8] sm:$0xff]
                  %5568 = vst [vmem:[%s5516 + $0x428] sm:$0xff] %v5567
                  %v5569 = vld [vmem:[%s5515 + $0xd0] sm:$0xff]
                  %5570 = vst [vmem:[%s5516 + $0x478] sm:$0xff] %v5569
                  %v5571 = vld [vmem:[%s5515 + $0xd8] sm:$0xff]
                  %5572 = vst [vmem:[%s5516 + $0x480] sm:$0xff] %v5571
                  %v5573 = vld [vmem:[%s5515 + $0xe0] sm:$0xff]
                  %5574 = vst [vmem:[%s5516 + $0x4d0] sm:$0xff] %v5573
                  %v5575 = vld [vmem:[%s5515 + $0xe8] sm:$0xff]
                  %5576 = vst [vmem:[%s5516 + $0x4d8] sm:$0xff] %v5575
                  %v5577 = vld [vmem:[%s5515 + $0xf0] sm:$0xff]
                  %5578 = vst [vmem:[%s5516 + $0x528] sm:$0xff] %v5577
                  %v5579 = vld [vmem:[%s5515 + $0xf8] sm:$0xff]
                  %5580 = vst [vmem:[%s5516 + $0x530] sm:$0xff] %v5579
                  %v5581 = vld [vmem:[%s5515 + $0x100] sm:$0xff]
                  %5582 = vst [vmem:[%s5516 + $0x580] sm:$0xff] %v5581
                  %v5583 = vld [vmem:[%s5515 + $0x108] sm:$0xff]
                  %5584 = vst [vmem:[%s5516 + $0x588] sm:$0xff] %v5583
                  %v5585 = vld [vmem:[%s5515 + $0x110] sm:$0xff]
                  %5586 = vst [vmem:[%s5516 + $0x5d8] sm:$0xff] %v5585
                  %v5587 = vld [vmem:[%s5515 + $0x118] sm:$0xff]
                  %5588 = vst [vmem:[%s5516 + $0x5e0] sm:$0xff] %v5587
                  %v5589 = vld [vmem:[%s5515 + $0x120] sm:$0xff]
                  %5590 = vst [vmem:[%s5516 + $0x630] sm:$0xff] %v5589
                  %v5591 = vld [vmem:[%s5515 + $0x128] sm:$0xff]
                  %5592 = vst [vmem:[%s5516 + $0x638] sm:$0xff] %v5591
                  %v5593 = vld [vmem:[%s5515 + $0x130] sm:$0xff]
                  %5594 = vst [vmem:[%s5516 + $0x688] sm:$0xff] %v5593
                  %v5595 = vld [vmem:[%s5515 + $0x138] sm:$0xff]
                  %5596 = vst [vmem:[%s5516 + $0x690] sm:$0xff] %v5595
                  %v5597 = vld [vmem:[%s5515 + $0x140] sm:$0xff]
                  %5598 = vst [vmem:[%s5516 + $0x6e0] sm:$0xff] %v5597
                  %v5599 = vld [vmem:[%s5515 + $0x148] sm:$0xff]
                  %5600 = vst [vmem:[%s5516 + $0x6e8] sm:$0xff] %v5599
                  %v5601 = vld [vmem:[%s5515 + $0x150] sm:$0xff]
                  %5602 = vst [vmem:[%s5516 + $0x738] sm:$0xff] %v5601
                  %v5603 = vld [vmem:[%s5515 + $0x158] sm:$0xff]
                  %5604 = vst [vmem:[%s5516 + $0x740] sm:$0xff] %v5603
                  %v5605 = vld [vmem:[%s5515 + $0x160] sm:$0xff]
                  %5606 = vst [vmem:[%s5516 + $0x790] sm:$0xff] %v5605
                  %v5607 = vld [vmem:[%s5515 + $0x168] sm:$0xff]
                  %5608 = vst [vmem:[%s5516 + $0x798] sm:$0xff] %v5607
                  %v5609 = vld [vmem:[%s5515 + $0x170] sm:$0xff]
                  %5610 = vst [vmem:[%s5516 + $0x7e8] sm:$0xff] %v5609
                  %v5611 = vld [vmem:[%s5515 + $0x178] sm:$0xff]
                  %5612 = vst [vmem:[%s5516 + $0x7f0] sm:$0xff] %v5611
                  %v5613 = vld [vmem:[%s5515 + $0x180] sm:$0xff]
                  %5614 = vst [vmem:[%s5516 + $0x840] sm:$0xff] %v5613
                  %v5615 = vld [vmem:[%s5515 + $0x188] sm:$0xff]
                  %5616 = vst [vmem:[%s5516 + $0x848] sm:$0xff] %v5615
                  %s5617 = sadd.s32 1, %s5514
                  %p5618 = scmp.ge.s32.totalorder %s5617, %s5507
                  %s5619 = scalar_select %p5618, 0, %s5617
                  %s5620 = smul.u32 %s5619, 16
                  %s5621 = smul.u32 %s5619, 16
                  %s5622 = scalar_lea.vmem %s5219, %s5620 [#allocation3]
                  %s5623 = scalar_lea.vmem %s5230, %s5621
                $region130: #{conv2d_1x1.1} parent=124 // loop_footer
                  %s5511 = sadd.s32 %s5509, 1
                $region131: #{conv2d_1x1.1} parent=124 // loop_footer_branch
                  %5508 = sbr.rel target = $region127
                $region132: #{conv2d_1x1.1} parent=124 // loop_exit
                  _
                %s5624 = sshrl.u32 %s5506, 1
                %s5625 = sand.u32 %s5506, 1
                %s5626 = smul.u32 %s5624, 2
                %s5627 = smul.u32 8, %s5626
                %s5628 = scalar_lea.vmem %s5219, %s5627 [#allocation3]
                %s5629 = smul.u32 8, %s5626
                %s5630 = scalar_lea.vmem %s5230, %s5629
                // While loop
                $region133: #{conv2d_1x1.1} parent=124 // loop_pre_header
                  _
                $region134: #{conv2d_1x1.1} parent=124 // loop_header
                  %s5632 = sphi 0, %s5634
                  %p5633 = scmp.ge.s32.totalorder %s5632, %s5625
                  %s5637 = sphi 0, %s5692
                  %s5638 = sphi %s5628, %s5695
                  %s5639 = sphi %s5630, %s5696
                $region135: #{conv2d_1x1.1} parent=124 // loop_header_branch
                  %5636 = sbr.rel (%p5633) target = $region139
                $region136: #{conv2d_1x1.1} parent=124 // loop_body
                  %v5640 = vld [vmem:[%s5638] sm:$0xff]
                  %5641 = vst [vmem:[%s5639] sm:$0xff] %v5640
                  %v5642 = vld [vmem:[%s5638 + $0x10] sm:$0xff]
                  %5643 = vst [vmem:[%s5639 + $0x58] sm:$0xff] %v5642
                  %v5644 = vld [vmem:[%s5638 + $0x20] sm:$0xff]
                  %5645 = vst [vmem:[%s5639 + $0xb0] sm:$0xff] %v5644
                  %v5646 = vld [vmem:[%s5638 + $0x30] sm:$0xff]
                  %5647 = vst [vmem:[%s5639 + $0x108] sm:$0xff] %v5646
                  %v5648 = vld [vmem:[%s5638 + $0x40] sm:$0xff]
                  %5649 = vst [vmem:[%s5639 + $0x160] sm:$0xff] %v5648
                  %v5650 = vld [vmem:[%s5638 + $0x50] sm:$0xff]
                  %5651 = vst [vmem:[%s5639 + $0x1b8] sm:$0xff] %v5650
                  %v5652 = vld [vmem:[%s5638 + $0x60] sm:$0xff]
                  %5653 = vst [vmem:[%s5639 + $0x210] sm:$0xff] %v5652
                  %v5654 = vld [vmem:[%s5638 + $0x70] sm:$0xff]
                  %5655 = vst [vmem:[%s5639 + $0x268] sm:$0xff] %v5654
                  %v5656 = vld [vmem:[%s5638 + $0x80] sm:$0xff]
                  %5657 = vst [vmem:[%s5639 + $0x2c0] sm:$0xff] %v5656
                  %v5658 = vld [vmem:[%s5638 + $0x90] sm:$0xff]
                  %5659 = vst [vmem:[%s5639 + $0x318] sm:$0xff] %v5658
                  %v5660 = vld [vmem:[%s5638 + $0xa0] sm:$0xff]
                  %5661 = vst [vmem:[%s5639 + $0x370] sm:$0xff] %v5660
                  %v5662 = vld [vmem:[%s5638 + $0xb0] sm:$0xff]
                  %5663 = vst [vmem:[%s5639 + $0x3c8] sm:$0xff] %v5662
                  %v5664 = vld [vmem:[%s5638 + $0xc0] sm:$0xff]
                  %5665 = vst [vmem:[%s5639 + $0x420] sm:$0xff] %v5664
                  %v5666 = vld [vmem:[%s5638 + $0xd0] sm:$0xff]
                  %5667 = vst [vmem:[%s5639 + $0x478] sm:$0xff] %v5666
                  %v5668 = vld [vmem:[%s5638 + $0xe0] sm:$0xff]
                  %5669 = vst [vmem:[%s5639 + $0x4d0] sm:$0xff] %v5668
                  %v5670 = vld [vmem:[%s5638 + $0xf0] sm:$0xff]
                  %5671 = vst [vmem:[%s5639 + $0x528] sm:$0xff] %v5670
                  %v5672 = vld [vmem:[%s5638 + $0x100] sm:$0xff]
                  %5673 = vst [vmem:[%s5639 + $0x580] sm:$0xff] %v5672
                  %v5674 = vld [vmem:[%s5638 + $0x110] sm:$0xff]
                  %5675 = vst [vmem:[%s5639 + $0x5d8] sm:$0xff] %v5674
                  %v5676 = vld [vmem:[%s5638 + $0x120] sm:$0xff]
                  %5677 = vst [vmem:[%s5639 + $0x630] sm:$0xff] %v5676
                  %v5678 = vld [vmem:[%s5638 + $0x130] sm:$0xff]
                  %5679 = vst [vmem:[%s5639 + $0x688] sm:$0xff] %v5678
                  %v5680 = vld [vmem:[%s5638 + $0x140] sm:$0xff]
                  %5681 = vst [vmem:[%s5639 + $0x6e0] sm:$0xff] %v5680
                  %v5682 = vld [vmem:[%s5638 + $0x150] sm:$0xff]
                  %5683 = vst [vmem:[%s5639 + $0x738] sm:$0xff] %v5682
                  %v5684 = vld [vmem:[%s5638 + $0x160] sm:$0xff]
                  %5685 = vst [vmem:[%s5639 + $0x790] sm:$0xff] %v5684
                  %v5686 = vld [vmem:[%s5638 + $0x170] sm:$0xff]
                  %5687 = vst [vmem:[%s5639 + $0x7e8] sm:$0xff] %v5686
                  %v5688 = vld [vmem:[%s5638 + $0x180] sm:$0xff]
                  %5689 = vst [vmem:[%s5639 + $0x840] sm:$0xff] %v5688
                  %s5690 = sadd.s32 1, %s5637
                  %p5691 = scmp.ge.s32.totalorder %s5690, %s5625
                  %s5692 = scalar_select %p5691, 0, %s5690
                  %s5693 = smul.u32 %s5692, 8
                  %s5694 = smul.u32 %s5692, 8
                  %s5695 = scalar_lea.vmem %s5628, %s5693 [#allocation3]
                  %s5696 = scalar_lea.vmem %s5630, %s5694
                $region137: #{conv2d_1x1.1} parent=124 // loop_footer
                  %s5634 = sadd.s32 %s5632, 1
                $region138: #{conv2d_1x1.1} parent=124 // loop_footer_branch
                  %5631 = sbr.rel target = $region134
                $region139: #{conv2d_1x1.1} parent=124 // loop_exit
                  _
                %s5697 = sshll.u32 1, %s5501
                %s5698 = ssub.s32 %s5697, 1
                loop: start=0, step=1, limit=1
                $region140: #{conv2d_1x1.1} parent=124 // loop_pre_header
                  _
                $region141: #{conv2d_1x1.1} parent=124 // loop_header
                  %s5700 = sphi 0, %s5704
                  %p5701 = scmp.ge.s32.totalorder %s5700, 1
                  %s5705 = sphi %s5503, %s5503
                  %s5706 = sphi %s5505, %s5505
                $region142: #{conv2d_1x1.1} parent=124 // loop_header_branch
                  %5703 = sbr.rel (%p5701) target = $region146
                $region143: #{conv2d_1x1.1} parent=124 // loop_body
                  %v5707 = vld [vmem:[%s5705] sm:%s5698]
                  %5708 = vst [vmem:[%s5706] sm:%s5698] %v5707
                  %v5709 = vld [vmem:[%s5705 + $0x10] sm:%s5698]
                  %5710 = vst [vmem:[%s5706 + $0x58] sm:%s5698] %v5709
                  %v5711 = vld [vmem:[%s5705 + $0x20] sm:%s5698]
                  %5712 = vst [vmem:[%s5706 + $0xb0] sm:%s5698] %v5711
                  %v5713 = vld [vmem:[%s5705 + $0x30] sm:%s5698]
                  %5714 = vst [vmem:[%s5706 + $0x108] sm:%s5698] %v5713
                  %v5715 = vld [vmem:[%s5705 + $0x40] sm:%s5698]
                  %5716 = vst [vmem:[%s5706 + $0x160] sm:%s5698] %v5715
                  %v5717 = vld [vmem:[%s5705 + $0x50] sm:%s5698]
                  %5718 = vst [vmem:[%s5706 + $0x1b8] sm:%s5698] %v5717
                  %v5719 = vld [vmem:[%s5705 + $0x60] sm:%s5698]
                  %5720 = vst [vmem:[%s5706 + $0x210] sm:%s5698] %v5719
                  %v5721 = vld [vmem:[%s5705 + $0x70] sm:%s5698]
                  %5722 = vst [vmem:[%s5706 + $0x268] sm:%s5698] %v5721
                  %v5723 = vld [vmem:[%s5705 + $0x80] sm:%s5698]
                  %5724 = vst [vmem:[%s5706 + $0x2c0] sm:%s5698] %v5723
                  %v5725 = vld [vmem:[%s5705 + $0x90] sm:%s5698]
                  %5726 = vst [vmem:[%s5706 + $0x318] sm:%s5698] %v5725
                  %v5727 = vld [vmem:[%s5705 + $0xa0] sm:%s5698]
                  %5728 = vst [vmem:[%s5706 + $0x370] sm:%s5698] %v5727
                  %v5729 = vld [vmem:[%s5705 + $0xb0] sm:%s5698]
                  %5730 = vst [vmem:[%s5706 + $0x3c8] sm:%s5698] %v5729
                  %v5731 = vld [vmem:[%s5705 + $0xc0] sm:%s5698]
                  %5732 = vst [vmem:[%s5706 + $0x420] sm:%s5698] %v5731
                  %v5733 = vld [vmem:[%s5705 + $0xd0] sm:%s5698]
                  %5734 = vst [vmem:[%s5706 + $0x478] sm:%s5698] %v5733
                  %v5735 = vld [vmem:[%s5705 + $0xe0] sm:%s5698]
                  %5736 = vst [vmem:[%s5706 + $0x4d0] sm:%s5698] %v5735
                  %v5737 = vld [vmem:[%s5705 + $0xf0] sm:%s5698]
                  %5738 = vst [vmem:[%s5706 + $0x528] sm:%s5698] %v5737
                  %v5739 = vld [vmem:[%s5705 + $0x100] sm:%s5698]
                  %5740 = vst [vmem:[%s5706 + $0x580] sm:%s5698] %v5739
                  %v5741 = vld [vmem:[%s5705 + $0x110] sm:%s5698]
                  %5742 = vst [vmem:[%s5706 + $0x5d8] sm:%s5698] %v5741
                  %v5743 = vld [vmem:[%s5705 + $0x120] sm:%s5698]
                  %5744 = vst [vmem:[%s5706 + $0x630] sm:%s5698] %v5743
                  %v5745 = vld [vmem:[%s5705 + $0x130] sm:%s5698]
                  %5746 = vst [vmem:[%s5706 + $0x688] sm:%s5698] %v5745
                  %v5747 = vld [vmem:[%s5705 + $0x140] sm:%s5698]
                  %5748 = vst [vmem:[%s5706 + $0x6e0] sm:%s5698] %v5747
                  %v5749 = vld [vmem:[%s5705 + $0x150] sm:%s5698]
                  %5750 = vst [vmem:[%s5706 + $0x738] sm:%s5698] %v5749
                  %v5751 = vld [vmem:[%s5705 + $0x160] sm:%s5698]
                  %5752 = vst [vmem:[%s5706 + $0x790] sm:%s5698] %v5751
                  %v5753 = vld [vmem:[%s5705 + $0x170] sm:%s5698]
                  %5754 = vst [vmem:[%s5706 + $0x7e8] sm:%s5698] %v5753
                  %v5755 = vld [vmem:[%s5705 + $0x180] sm:%s5698]
                  %5756 = vst [vmem:[%s5706 + $0x840] sm:%s5698] %v5755
                $region144: #{conv2d_1x1.1} parent=124 // loop_footer
                  %s5704 = sadd.s32 1, %s5700
                $region145: #{conv2d_1x1.1} parent=124 // loop_footer_branch
                  %5699 = sbr.rel target = $region141
                $region146: #{conv2d_1x1.1} parent=124 // loop_exit
                  _
              $region125: #{conv2d_1x1.1} parent=91 // pred_fallthru
                _
            $region92: #{conv2d_1x1.1} parent=87 // pred_fallthru
              _
            // Predicated region
            $region93: #{conv2d_1x1.1} parent=87 // pred_check
              %p5239 = pneg %p5235
            $region94: #{conv2d_1x1.1} parent=87 // pred_check_branch
              %5241 = sbr.rel (%p5239) target = $region96
            $region95: #{conv2d_1x1.1} parent=87 // pred_region
              %s5242 = sshll.u32 1, %s5231
              %s5243 = ssub.s32 %s5242, 1
              loop: start=0, step=1, limit=1
              $region97: #{conv2d_1x1.1} parent=95 // loop_pre_header
                _
              $region98: #{conv2d_1x1.1} parent=95 // loop_header
                %s5245 = sphi 0, %s5249
                %p5246 = scmp.ge.s32.totalorder %s5245, 1
                %s5250 = sphi %s5219, %s5219
                %s5251 = sphi %s5230, %s5230
              $region99: #{conv2d_1x1.1} parent=95 // loop_header_branch
                %5248 = sbr.rel (%p5246) target = $region103
              $region100: #{conv2d_1x1.1} parent=95 // loop_body
                %v5252 = vld [vmem:[%s5250] sm:%s5243]
                %5253 = vst [vmem:[%s5251] sm:%s5243] %v5252
                %v5254 = vld [vmem:[%s5250 + $0x10] sm:%s5243]
                %5255 = vst [vmem:[%s5251 + $0x58] sm:%s5243] %v5254
                %v5256 = vld [vmem:[%s5250 + $0x20] sm:%s5243]
                %5257 = vst [vmem:[%s5251 + $0xb0] sm:%s5243] %v5256
                %v5258 = vld [vmem:[%s5250 + $0x30] sm:%s5243]
                %5259 = vst [vmem:[%s5251 + $0x108] sm:%s5243] %v5258
                %v5260 = vld [vmem:[%s5250 + $0x40] sm:%s5243]
                %5261 = vst [vmem:[%s5251 + $0x160] sm:%s5243] %v5260
                %v5262 = vld [vmem:[%s5250 + $0x50] sm:%s5243]
                %5263 = vst [vmem:[%s5251 + $0x1b8] sm:%s5243] %v5262
                %v5264 = vld [vmem:[%s5250 + $0x60] sm:%s5243]
                %5265 = vst [vmem:[%s5251 + $0x210] sm:%s5243] %v5264
                %v5266 = vld [vmem:[%s5250 + $0x70] sm:%s5243]
                %5267 = vst [vmem:[%s5251 + $0x268] sm:%s5243] %v5266
                %v5268 = vld [vmem:[%s5250 + $0x80] sm:%s5243]
                %5269 = vst [vmem:[%s5251 + $0x2c0] sm:%s5243] %v5268
                %v5270 = vld [vmem:[%s5250 + $0x90] sm:%s5243]
                %5271 = vst [vmem:[%s5251 + $0x318] sm:%s5243] %v5270
                %v5272 = vld [vmem:[%s5250 + $0xa0] sm:%s5243]
                %5273 = vst [vmem:[%s5251 + $0x370] sm:%s5243] %v5272
                %v5274 = vld [vmem:[%s5250 + $0xb0] sm:%s5243]
                %5275 = vst [vmem:[%s5251 + $0x3c8] sm:%s5243] %v5274
                %v5276 = vld [vmem:[%s5250 + $0xc0] sm:%s5243]
                %5277 = vst [vmem:[%s5251 + $0x420] sm:%s5243] %v5276
                %v5278 = vld [vmem:[%s5250 + $0xd0] sm:%s5243]
                %5279 = vst [vmem:[%s5251 + $0x478] sm:%s5243] %v5278
                %v5280 = vld [vmem:[%s5250 + $0xe0] sm:%s5243]
                %5281 = vst [vmem:[%s5251 + $0x4d0] sm:%s5243] %v5280
                %v5282 = vld [vmem:[%s5250 + $0xf0] sm:%s5243]
                %5283 = vst [vmem:[%s5251 + $0x528] sm:%s5243] %v5282
                %v5284 = vld [vmem:[%s5250 + $0x100] sm:%s5243]
                %5285 = vst [vmem:[%s5251 + $0x580] sm:%s5243] %v5284
                %v5286 = vld [vmem:[%s5250 + $0x110] sm:%s5243]
                %5287 = vst [vmem:[%s5251 + $0x5d8] sm:%s5243] %v5286
                %v5288 = vld [vmem:[%s5250 + $0x120] sm:%s5243]
                %5289 = vst [vmem:[%s5251 + $0x630] sm:%s5243] %v5288
                %v5290 = vld [vmem:[%s5250 + $0x130] sm:%s5243]
                %5291 = vst [vmem:[%s5251 + $0x688] sm:%s5243] %v5290
                %v5292 = vld [vmem:[%s5250 + $0x140] sm:%s5243]
                %5293 = vst [vmem:[%s5251 + $0x6e0] sm:%s5243] %v5292
                %v5294 = vld [vmem:[%s5250 + $0x150] sm:%s5243]
                %5295 = vst [vmem:[%s5251 + $0x738] sm:%s5243] %v5294
                %v5296 = vld [vmem:[%s5250 + $0x160] sm:%s5243]
                %5297 = vst [vmem:[%s5251 + $0x790] sm:%s5243] %v5296
                %v5298 = vld [vmem:[%s5250 + $0x170] sm:%s5243]
                %5299 = vst [vmem:[%s5251 + $0x7e8] sm:%s5243] %v5298
                %v5300 = vld [vmem:[%s5250 + $0x180] sm:%s5243]
                %5301 = vst [vmem:[%s5251 + $0x840] sm:%s5243] %v5300
              $region101: #{conv2d_1x1.1} parent=95 // loop_footer
                %s5249 = sadd.s32 1, %s5245
              $region102: #{conv2d_1x1.1} parent=95 // loop_footer_branch
                %5244 = sbr.rel target = $region98
              $region103: #{conv2d_1x1.1} parent=95 // loop_exit
                _
            $region96: #{conv2d_1x1.1} parent=87 // pred_fallthru
              _
          $region88: #{conv2d_1x1.1} parent=83 // pred_fallthru
            _
          %5757 = vnop
        $region84: #{conv2d_1x1.1} parent=75 // pred_fallthru
          _
      $region76: #{conv2d_1x1.1} parent=5 // pred_fallthru
        _
      %p5758 = scmp.le.s32.totalorder 2, %s8
      // Predicated region
      $region147: #{conv2d_1x1.1} parent=5 // pred_check
        %p5759 = pneg %p5758
      $region148: #{conv2d_1x1.1} parent=5 // pred_check_branch
        %5761 = sbr.rel (%p5759) target = $region150
      $region149: #{conv2d_1x1.1} parent=5 // pred_region
        %s5762 = ssub.s32 %s8, 2
        // Predicated region
        $region151: #{conv2d_1x1.1} parent=149 // pred_check
          %p5763 = pneg %p84
        $region152: #{conv2d_1x1.1} parent=149 // pred_check_branch
          %5765 = sbr.rel (%p5763) target = $region154
        $region153: #{conv2d_1x1.1} parent=149 // pred_region
          %s5766 = sand.u32 %s69, 1
          %s5767 = sand.u32 %s69, 1
          %s5768 = smul.addr %s5767, 400
          %s5769 = scalar_lea.vmem [#allocation3], %s5768
        $region154: #{conv2d_1x1.1} parent=149 // pred_fallthru
          _
      $region150: #{conv2d_1x1.1} parent=5 // pred_fallthru
        _
    $region6: #{conv2d_1x1.1} parent=1 // loop_footer
      %s12 = sadd.s32 1, %s8
    $region7: #{conv2d_1x1.1} parent=1 // loop_footer_branch
      %7 = sbr.rel target = $region3
    $region8: #{conv2d_1x1.1} parent=1 // loop_exit
      _

</llo_original>
